<compile_context>
chip_gen: v6e
topology: v6e:2x2x1
jax: 0.10.0
libtpu: 0.0.40
codegen_flags: <defaults>
</compile_context>

<pallas_src>
import functools
import math

import jax
import jax.numpy as jnp
import numpy as np
from jax.experimental import pallas as pl
from jax.experimental.pallas import tpu as pltpu

LANE = 128


def _ceil_to(x, m):
    return ((x + m - 1) // m) * m


def _vmem_capacity_bytes():
    try:
        return int(pltpu.get_tpu_info().vmem_capacity_bytes)
    except Exception:
        return 64 * 1024 * 1024          # conservative default (v7x per-TC)


def _choose_kc(l_hmp, hmp, max_kc):
    """Chunk width along the stacked L*Hmp compressor-hidden axis."""
    if l_hmp <= max_kc:
        return l_hmp                      # single chunk (small H)
    if hmp <= max_kc:
        return hmp                        # one pyramid level per chunk
    pieces = -(-hmp // max_kc)
    while hmp % pieces != 0 or (hmp // pieces) % LANE != 0:
        pieces += 1                       # terminates: pieces == hmp // LANE works
    return hmp // pieces


def _vmem_estimate(hp, l, hqp, kc, in_itemsize):
    """Rough VMEM bytes as (fixed, per-token-row) for the chosen chunking."""
    fixed = hp * l * hqp * 2              # pw1c (bf16, single-buffered)
    fixed += l * hqp * l * 2              # pw2bd (bf16)
    fixed += l * hqp * 4 + l * 4          # pb1c, pb2 (f32)
    fixed += l * hp * 4                   # cb2 (f32)
    fixed += 2 * (hp * kc * 2 + kc * hp * 2 + kc * 4)   # streamed cw1/cw2/cb1 chunks
    per_row = 2 * hp * in_itemsize        # x tile, double-buffered
    per_row += 2 * hp * 2                 # bf16 output tile, double-buffered
    per_row += hp * 4 + 4                 # f32 accumulator + level scratch
    per_row += max(l * hqp, kc) * 6       # transient h1 / h2 intermediates (rough)
    return fixed, per_row


def _choose_tm(n, hp, l, hqp, kc, in_itemsize, vmem_cap):
    fixed, per_row = _vmem_estimate(hp, l, hqp, kc, in_itemsize)
    budget = int(0.75 * vmem_cap)
    tm = 16
    for cand in (512, 256, 128, 64, 32, 16):
        if fixed + cand * per_row <= budget:
            tm = cand
            break
    tm = min(tm, _ceil_to(n, 16))         # never bigger than the token count
    if n >= 32:                           # >=2 token tiles so both v7x TCs get work
        tm = min(tm, _ceil_to((n + 1) // 2, 16))
    return max(16, tm)


# ----------------------------- Pallas kernel ------------------------------- #

def _pyramid_kernel(x_ref, pw1_ref, pb1_ref, pw2_ref, pb2_ref,
                    cw1_ref, cb1_ref, cw2_ref, cb2_ref, out_ref,
                    lvl_sc, acc_sc, *, num_levels, hmp, kc, add_out_bias):
    k = pl.program_id(1)
    x = x_ref[...].astype(jnp.bfloat16)                            # [TM, Hp]

    @pl.when(k == 0)
    def _():
        # Level predictor: one wide stacked matmul + block-diagonal reduce.
        h1 = jnp.dot(x, pw1_ref[...], preferred_element_type=jnp.float32)
        h1 = jnp.maximum(h1 + pb1_ref[...], 0.0)                   # [TM, L*Hqp]
        logits = jnp.dot(h1.astype(jnp.bfloat16), pw2_ref[...],
                         preferred_element_type=jnp.float32) + pb2_ref[...]
        # first-max-wins argmax (matches torch.argmax)
        lvl_iota = jax.lax.broadcasted_iota(jnp.int32, logits.shape, 1)
        row_max = jnp.max(logits, axis=-1, keepdims=True)
        lvl_sc[...] = jnp.min(jnp.where(logits >= row_max, lvl_iota, num_levels),
                              axis=-1, keepdims=True)              # [TM, 1] i32
        acc_sc[...] = jnp.zeros_like(acc_sc)

    lvl = lvl_sc[...]                                              # [TM, 1] i32

    # Compressor first layer for this chunk of the stacked L*Hmp hidden axis.
    h2 = jnp.dot(x, cw1_ref[...], preferred_element_type=jnp.float32)
    h2 = jnp.maximum(h2 + cb1_ref[...], 0.0).astype(jnp.bfloat16)  # [TM, kc]
    # Level mask: row iota broadcast in the compare, select applied on bf16.
    col = jax.lax.broadcasted_iota(jnp.int32, (1, kc), 1) + k * kc
    rel = col - lvl * hmp                                          # [TM, kc]
    h2 = jnp.where((rel >= 0) & (rel < hmp), h2, jnp.zeros_like(h2))
    acc_sc[...] += jnp.dot(h2, cw2_ref[...], preferred_element_type=jnp.float32)

    @pl.when(k == pl.num_programs(1) - 1)
    def _():
        out = acc_sc[...]
        if add_out_bias:
            # assigned level's output bias: unrolled VPU select-accumulate
            # instead of a K=4 f32 matmul (skipped when biases are zero).
            for lev in range(num_levels):
                out = out + jnp.where(lvl == lev, cb2_ref[pl.ds(lev, 1), :], 0.0)
        out_ref[...] = out.astype(out_ref.dtype)


def pyramid_compress_tokens(x, params, *, tm=None, max_kc=2048):
    """x: [N, H] -> compressed [N, H] (bfloat16)."""
    d = params["dims"]
    H, Hp, L, Hqp, Hmp = d["H"], d["Hp"], d["L"], d["Hqp"], d["Hmp"]
    N = x.shape[0]
    assert x.shape[1] == H

    l_hmp = L * Hmp
    kc = _choose_kc(l_hmp, Hmp, max_kc)
    vmem_cap = _vmem_capacity_bytes()
    if tm is None:
        tm = _choose_tm(N, Hp, L, Hqp, kc, x.dtype.itemsize, vmem_cap)
    tm = max(16, _ceil_to(tm, 16))
    Np = _ceil_to(N, tm)

    # Pad only when shapes are unaligned (avoids an extra HBM round trip over
    # the whole token stream at realistic sizes); bf16 cast happens in-kernel.
    padded = (Np != N) or (Hp != H)
    xin = jnp.pad(x, ((0, Np - N), (0, Hp - H))) if padded else x

    fixed, per_row = _vmem_estimate(Hp, L, Hqp, kc, x.dtype.itemsize)
    est = fixed + tm * per_row
    vmem_limit = int(min(0.9 * vmem_cap, max(48 * 1024 * 1024, 2 * est)))

    kernel = functools.partial(_pyramid_kernel, num_levels=L, hmp=Hmp, kc=kc,
                               add_out_bias=params["has_out_bias"])
    weight_keys = ("pw1c", "pb1c", "pw2bd", "pb2", "cw1c", "cb1c", "cw2c", "cb2")

    def _build_and_run(single_buffer_weights):
        def const2d(arr):
            if single_buffer_weights:       # resident weights: no double buffer
                return pl.BlockSpec(arr.shape, lambda i, k: (0, 0),
                                    pipeline_mode=pl.Buffered(1))
            return pl.BlockSpec(arr.shape, lambda i, k: (0, 0))

        in_specs = [
            pl.BlockSpec((tm, Hp), lambda i, k: (i, 0)),      # x (resident over k)
            const2d(params["pw1c"]),
            const2d(params["pb1c"]),
            const2d(params["pw2bd"]),
            const2d(params["pb2"]),
            pl.BlockSpec((Hp, kc), lambda i, k: (0, k)),      # cw1c column chunk
            pl.BlockSpec((1, kc), lambda i, k: (0, k)),       # cb1c chunk
            pl.BlockSpec((kc, Hp), lambda i, k: (k, 0)),      # cw2c row chunk
            const2d(params["cb2"]),
        ]
        return pl.pallas_call(
            kernel,
            out_shape=jax.ShapeDtypeStruct((Np, Hp), jnp.bfloat16),
            grid_spec=pltpu.PrefetchScalarGridSpec(
                num_scalar_prefetch=0,
                grid=(Np // tm, l_hmp // kc),
                in_specs=in_specs,
                out_specs=pl.BlockSpec((tm, Hp), lambda i, k: (i, 0)),
                scratch_shapes=[pltpu.VMEM((tm, 1), jnp.int32),
                                pltpu.VMEM((tm, Hp), jnp.float32)]),
            compiler_params=pltpu.CompilerParams(
                dimension_semantics=("parallel", "arbitrary"),
                vmem_limit_bytes=vmem_limit),
        )(xin, *[params[kk] for kk in weight_keys])

    try:
        out = _build_and_run(True)
    except Exception:
        # pl.Buffered(1) unsupported on this jax version -> default buffering.
        out = _build_and_run(False)

    if padded:
        out = out[:N, :H]
    return out


def pyramid_kv_compress(keys, values, params, *, tm=None, out_dtype=None):
    """keys/values: [B, S, H] -> (compressed_keys, compressed_values).

    Outputs stay bfloat16 (halved HBM writeback; KV-cache friendly) unless
    out_dtype is given.  No host-side concatenate: two pallas_calls on views.
    """
    B, S, H = keys.shape
    ck = pyramid_compress_tokens(keys.reshape(B * S, H), params, tm=tm)
    cv = pyramid_compress_tokens(values.reshape(B * S, H), params, tm=tm)
    ck, cv = ck.reshape(B, S, H), cv.reshape(B, S, H)
    if out_dtype is not None:
        ck, cv = ck.astype(out_dtype), cv.astype(out_dtype)
    return ck, cv


# ----------------------- deterministic parameter init ---------------------- #

def _xavier(key, fan_in, fan_out):
    std = math.sqrt(2.0 / (fan_in + fan_out))
    return std * jax.random.normal(key, (fan_in, fan_out), jnp.float32)


def init_params(key, hidden_size, num_levels=4, level_ratios=None):
    """Builds fused / padded / bf16 operands for the kernel."""
    if level_ratios is None:
        level_ratios = [0.5 ** i for i in range(num_levels)]
    H, L = hidden_size, num_levels
    Hp = _ceil_to(H, LANE)                      # lane-dense input/output hidden
    Hq = H // 4
    Hqp = _ceil_to(Hq, LANE)                    # padded predictor hidden / level
    dims = [int(H * r) for r in level_ratios]
    Hmp = _ceil_to(max(dims), LANE)             # padded compressor hidden / level

    ks = jax.random.split(key, 4 * L)
    pw1_blocks, pw2_cols, cw1_blocks, cw2_blocks = [], [], [], []
    for l in range(L):
        w = _xavier(ks[4 * l + 0], H, Hq)                       # predictor layer 1
        pw1_blocks.append(jnp.pad(w, ((0, Hp - H), (0, Hqp - Hq))))
        v = _xavier(ks[4 * l + 1], Hq, 1)                       # predictor layer 2
        pw2_cols.append(jnp.pad(v, ((0, Hqp - Hq), (0, 0))))
        d = dims[l]
        w1 = _xavier(ks[4 * l + 2], H, d)                       # compressor layer 1
        cw1_blocks.append(jnp.pad(w1, ((0, Hp - H), (0, Hmp - d))))
        w2 = _xavier(ks[4 * l + 3], d, H)                       # compressor layer 2
        cw2_blocks.append(jnp.pad(w2, ((0, Hmp - d), (0, Hp - H))))

    pw1c = jnp.concatenate(pw1_blocks, axis=1)                  # [Hp, L*Hqp]
    pw2bd = jnp.zeros((L * Hqp, L), jnp.float32)                # block-diagonal
    for l in range(L):
        pw2bd = pw2bd.at[l * Hqp:(l + 1) * Hqp, l].set(pw2_cols[l][:, 0])
    cw1c = jnp.concatenate(cw1_blocks, axis=1)                  # [Hp, L*Hmp]
    cw2c = jnp.concatenate(cw2_blocks, axis=0)                  # [L*Hmp, Hp]

    return {
        "pw1c": pw1c.astype(jnp.bfloat16),
        "pb1c": jnp.zeros((1, L * Hqp), jnp.float32),           # torch: zero biases
        "pw2bd": pw2bd.astype(jnp.bfloat16),
        "pb2": jnp.zeros((1, L), jnp.float32),
        "cw1c": cw1c.astype(jnp.bfloat16),
        "cb1c": jnp.zeros((1, L * Hmp), jnp.float32),
        "cw2c": cw2c.astype(jnp.bfloat16),
        "cb2": jnp.zeros((L, Hp), jnp.float32),
        "has_out_bias": False,                                  # zero-init biases
        "dims": {"H": H, "Hp": Hp, "L": L, "Hqp": Hqp, "Hmp": Hmp},
    }


# ------------------------------ plain-JAX reference ------------------------ #

def reference_tokens(x, params):
    """Mirrors the kernel math (bf16 matmuls, f32 accumulation)."""
    d = params["dims"]
    H, Hp, L, Hmp = d["H"], d["Hp"], d["L"], d["Hmp"]
    xb = jnp.pad(x, ((0, 0), (0, Hp - H))).astype(jnp.bfloat16)

    h1 = jnp.maximum(jnp.dot(xb, params["pw1c"],
                             preferred_element_type=jnp.float32)
                     + params["pb1c"], 0.0)
    logits = jnp.dot(h1.astype(jnp.bfloat16), params["pw2bd"],
                     preferred_element_type=jnp.float32) + params["pb2"]
    lvl = jnp.argmax(logits, axis=-1)                           # first max wins

    h2 = jnp.maximum(jnp.dot(xb, params["cw1c"],
                             preferred_element_type=jnp.float32)
                     + params["cb1c"], 0.0).astype(jnp.bfloat16)
    col = jnp.arange(h2.shape[1])[None, :]
    lo = (lvl * Hmp)[:, None]
    h2 = jnp.where((col >= lo) & (col < lo + Hmp), h2, jnp.zeros_like(h2))
    out = jnp.dot(h2, params["cw2c"], preferred_element_type=jnp.float32)
    out = out + params["cb2"][lvl]
    return out[:, :H]


# ---------------------------------- main ----------------------------------- #

if __name__ == "__main__":
    B, S, H = 2, 8, 32
    NUM_LEVELS = 4

    root = jax.random.PRNGKey(0)
    k_params, k_keys, k_vals, k_extra = jax.random.split(root, 4)

    params = init_params(k_params, H, NUM_LEVELS)
    keys = jax.random.normal(k_keys, (B, S, H), jnp.float32)
    values = jax.random.normal(k_vals, (B, S, H), jnp.float32)

    ck, cv = pyramid_kv_compress(keys, values, params)
    ck = jax.block_until_ready(ck)
    cv = jax.block_until_ready(cv)

    ref_ck = reference_tokens(keys.reshape(B * S, H), params).reshape(B, S, H)
    ref_cv = reference_tokens(values.reshape(B * S, H), params).reshape(B, S, H)
    assert ck.shape == (B, S, H) and cv.shape == (B, S, H)
    assert np.allclose(np.asarray(ck, np.float32), np.asarray(ref_ck),
                       atol=2e-2, rtol=2e-2)
    assert np.allclose(np.asarray(cv, np.float32), np.asarray(ref_cv),
                       atol=2e-2, rtol=2e-2)

    # Second config: exercises the chunked (multi-k-step) accumulator path,
    # token padding, and >=2 token tiles on the parallel axis.
    x2 = jax.random.normal(k_extra, (80, H), jnp.float32)
    y2 = jax.block_until_ready(pyramid_compress_tokens(x2, params, max_kc=128))
    ref2 = reference_tokens(x2, params)
    assert y2.shape == (80, H)
    assert np.allclose(np.asarray(y2, np.float32), np.asarray(ref2),
                       atol=2e-2, rtol=2e-2)

    print("KERNEL_OK")
</pallas_src>

<mosaic_0001>
module attributes {stable_mosaic.version = 11 : i64} {
  func.func @_pyramid_kernel(%arg0: i32, %arg1: i32, %arg2: memref<16x128xf32, #tpu.memory_space<vmem>>, %arg3: memref<128x512xbf16, #tpu.memory_space<vmem>>, %arg4: memref<1x512xf32, #tpu.memory_space<vmem>>, %arg5: memref<512x4xbf16, #tpu.memory_space<vmem>>, %arg6: memref<1x4xf32, #tpu.memory_space<vmem>>, %arg7: memref<128x512xbf16, #tpu.memory_space<vmem>>, %arg8: memref<1x512xf32, #tpu.memory_space<vmem>>, %arg9: memref<512x128xbf16, #tpu.memory_space<vmem>>, %arg10: memref<4x128xf32, #tpu.memory_space<vmem>>, %arg11: memref<16x128xbf16, #tpu.memory_space<vmem>>, %arg12: memref<16x1xi32, #tpu.memory_space<vmem>>, %arg13: memref<16x128xf32, #tpu.memory_space<vmem>>) attributes {dimension_semantics = [#tpu.dimension_semantics<parallel>, #tpu.dimension_semantics<arbitrary>], iteration_bounds = array<i64: 1, 1>, scalar_prefetch = 0 : i64, scratch_operands = 2 : i64, tpu.core_type = #tpu.core_type<tc>, window_params = [{transform_indices = @transform_0, window_bounds = array<i64: 16, 128>}, {pipeline_mode = #tpu.pipeline_mode<synchronous>, transform_indices = @transform_1, window_bounds = array<i64: 128, 512>}, {pipeline_mode = #tpu.pipeline_mode<synchronous>, transform_indices = @transform_2, window_bounds = array<i64: 1, 512>}, {pipeline_mode = #tpu.pipeline_mode<synchronous>, transform_indices = @transform_3, window_bounds = array<i64: 512, 4>}, {pipeline_mode = #tpu.pipeline_mode<synchronous>, transform_indices = @transform_4, window_bounds = array<i64: 1, 4>}, {transform_indices = @transform_5, window_bounds = array<i64: 128, 512>}, {transform_indices = @transform_6, window_bounds = array<i64: 1, 512>}, {transform_indices = @transform_7, window_bounds = array<i64: 512, 128>}, {pipeline_mode = #tpu.pipeline_mode<synchronous>, transform_indices = @transform_8, window_bounds = array<i64: 4, 128>}, {transform_indices = @transform_9, window_bounds = array<i64: 16, 128>}]} {
    %c0 = arith.constant 0 : index
    %c0_0 = arith.constant 0 : index
    %0 = vector.load %arg2[%c0, %c0_0] : memref<16x128xf32, #tpu.memory_space<vmem>>, vector<16x128xf32>
    %1 = arith.truncf %0 : vector<16x128xf32> to vector<16x128xbf16>
    %c0_i32 = arith.constant 0 : i32
    %2 = arith.cmpi eq, %arg1, %c0_i32 : i32
    %3 = arith.extui %2 : i1 to i32
    %c0_i32_1 = arith.constant 0 : i32
    %4 = arith.cmpi ne, %3, %c0_i32_1 : i32
    scf.if %4 {
      %c0_21 = arith.constant 0 : index
      %c0_22 = arith.constant 0 : index
      %38 = vector.load %arg3[%c0_21, %c0_22] : memref<128x512xbf16, #tpu.memory_space<vmem>>, vector<128x512xbf16>
      %cst_23 = arith.constant dense<0.000000e+00> : vector<16x512xf32>
      %39 = tpu.matmul %1, %38, %cst_23 {dimension_numbers = #tpu.dot_dimension_numbers<[1], [0], [0], [1], [0, 0, 1, 1], [], []>} : vector<16x128xbf16>, vector<128x512xbf16>, vector<16x512xf32> -> vector<16x512xf32>
      %c0_24 = arith.constant 0 : index
      %c0_25 = arith.constant 0 : index
      %40 = vector.load %arg4[%c0_24, %c0_25] : memref<1x512xf32, #tpu.memory_space<vmem>>, vector<1x512xf32>
      %41 = vector.broadcast %40 : vector<1x512xf32> to vector<16x512xf32>
      %42 = arith.addf %39, %41 : vector<16x512xf32>
      %cst_26 = arith.constant 0.000000e+00 : f32
      %43 = vector.broadcast %cst_26 : f32 to vector<16x512xf32>
      %44 = arith.maximumf %42, %43 : vector<16x512xf32>
      %45 = arith.truncf %44 : vector<16x512xf32> to vector<16x512xbf16>
      %c0_27 = arith.constant 0 : index
      %c0_28 = arith.constant 0 : index
      %46 = vector.load %arg5[%c0_27, %c0_28] : memref<512x4xbf16, #tpu.memory_space<vmem>>, vector<512x4xbf16>
      %cst_29 = arith.constant dense<0.000000e+00> : vector<16x4xf32>
      %47 = tpu.matmul %45, %46, %cst_29 {dimension_numbers = #tpu.dot_dimension_numbers<[1], [0], [0], [1], [0, 0, 1, 1], [], []>} : vector<16x512xbf16>, vector<512x4xbf16>, vector<16x4xf32> -> vector<16x4xf32>
      %c0_30 = arith.constant 0 : index
      %c0_31 = arith.constant 0 : index
      %48 = vector.load %arg6[%c0_30, %c0_31] : memref<1x4xf32, #tpu.memory_space<vmem>>, vector<1x4xf32>
      %49 = vector.broadcast %48 : vector<1x4xf32> to vector<16x4xf32>
      %50 = arith.addf %47, %49 : vector<16x4xf32>
      %51 = tpu.iota {dimensions = array<i32: 1>} : vector<16x4xi32>
      %cst_32 = arith.constant dense<0xFF800000> : vector<16xf32>
      %52 = vector.multi_reduction <maximumf>, %50, %cst_32 [1] : vector<16x4xf32> to vector<16xf32>
      %53 = vector.shape_cast %52 : vector<16xf32> to vector<16x1xf32>
      %54 = vector.broadcast %53 : vector<16x1xf32> to vector<16x4xf32>
      %55 = arith.cmpf oge, %50, %54 : vector<16x4xf32>
      %c4_i32 = arith.constant 4 : i32
      %56 = vector.broadcast %c4_i32 : i32 to vector<16x4xi32>
      %57 = arith.select %55, %51, %56 : vector<16x4xi1>, vector<16x4xi32>
      %cst_33 = arith.constant dense<2147483647> : vector<16xi32>
      %58 = vector.multi_reduction <minsi>, %57, %cst_33 [1] : vector<16x4xi32> to vector<16xi32>
      %59 = vector.shape_cast %58 : vector<16xi32> to vector<16x1xi32>
      %c0_34 = arith.constant 0 : index
      %c0_35 = arith.constant 0 : index
      %60 = vector.load %arg12[%c0_34, %c0_35] : memref<16x1xi32, #tpu.memory_space<vmem>>, vector<16x1xi32>
      tpu.vector_store %arg12[%c0_34, %c0_35], %59 {strides = array<i32>} : memref<16x1xi32, #tpu.memory_space<vmem>>, vector<16x1xi32>,
      %cst_36 = arith.constant 0.000000e+00 : f32
      %61 = vector.broadcast %cst_36 : f32 to vector<16x128xf32>
      %c0_37 = arith.constant 0 : index
      %c0_38 = arith.constant 0 : index
      %62 = vector.load %arg13[%c0_37, %c0_38] : memref<16x128xf32, #tpu.memory_space<vmem>>, vector<16x128xf32>
      tpu.vector_store %arg13[%c0_37, %c0_38], %61 {strides = array<i32>} : memref<16x128xf32, #tpu.memory_space<vmem>>, vector<16x128xf32>,
    } else {
    }
    %c0_2 = arith.constant 0 : index
    %c0_3 = arith.constant 0 : index
    %5 = vector.load %arg12[%c0_2, %c0_3] : memref<16x1xi32, #tpu.memory_space<vmem>>, vector<16x1xi32>
    %c0_4 = arith.constant 0 : index
    %c0_5 = arith.constant 0 : index
    %6 = vector.load %arg7[%c0_4, %c0_5] : memref<128x512xbf16, #tpu.memory_space<vmem>>, vector<128x512xbf16>
    %cst = arith.constant dense<0.000000e+00> : vector<16x512xf32>
    %7 = tpu.matmul %1, %6, %cst {dimension_numbers = #tpu.dot_dimension_numbers<[1], [0], [0], [1], [0, 0, 1, 1], [], []>} : vector<16x128xbf16>, vector<128x512xbf16>, vector<16x512xf32> -> vector<16x512xf32>
    %c0_6 = arith.constant 0 : index
    %c0_7 = arith.constant 0 : index
    %8 = vector.load %arg8[%c0_6, %c0_7] : memref<1x512xf32, #tpu.memory_space<vmem>>, vector<1x512xf32>
    %9 = vector.broadcast %8 : vector<1x512xf32> to vector<16x512xf32>
    %10 = arith.addf %7, %9 : vector<16x512xf32>
    %cst_8 = arith.constant 0.000000e+00 : f32
    %11 = vector.broadcast %cst_8 : f32 to vector<16x512xf32>
    %12 = arith.maximumf %10, %11 : vector<16x512xf32>
    %13 = arith.truncf %12 : vector<16x512xf32> to vector<16x512xbf16>
    %14 = tpu.iota {dimensions = array<i32: 1>} : vector<1x512xi32>
    %c512_i32 = arith.constant 512 : i32
    %15 = arith.muli %arg1, %c512_i32 : i32
    %16 = vector.broadcast %15 : i32 to vector<1x512xi32>
    %17 = arith.addi %14, %16 : vector<1x512xi32>
    %c128_i32 = arith.constant 128 : i32
    %18 = vector.broadcast %c128_i32 : i32 to vector<16x1xi32>
    %19 = arith.muli %5, %18 : vector<16x1xi32>
    %20 = vector.broadcast %17 : vector<1x512xi32> to vector<16x512xi32>
    %21 = vector.broadcast %19 : vector<16x1xi32> to vector<16x512xi32>
    %22 = arith.subi %20, %21 : vector<16x512xi32>
    %c0_i32_9 = arith.constant 0 : i32
    %23 = vector.broadcast %c0_i32_9 : i32 to vector<16x512xi32>
    %24 = arith.cmpi sge, %22, %23 : vector<16x512xi32>
    %c128_i32_10 = arith.constant 128 : i32
    %25 = vector.broadcast %c128_i32_10 : i32 to vector<16x512xi32>
    %26 = arith.cmpi slt, %22, %25 : vector<16x512xi32>
    %27 = arith.andi %24, %26 : vector<16x512xi1>
    %cst_11 = arith.constant 0.000000e+00 : bf16
    %28 = vector.broadcast %cst_11 : bf16 to vector<16x512xbf16>
    %29 = arith.select %27, %13, %28 : vector<16x512xi1>, vector<16x512xbf16>
    %c0_12 = arith.constant 0 : index
    %c0_13 = arith.constant 0 : index
    %30 = vector.load %arg13[%c0_12, %c0_13] : memref<16x128xf32, #tpu.memory_space<vmem>>, vector<16x128xf32>
    %c0_14 = arith.constant 0 : index
    %c0_15 = arith.constant 0 : index
    %31 = vector.load %arg9[%c0_14, %c0_15] : memref<512x128xbf16, #tpu.memory_space<vmem>>, vector<512x128xbf16>
    %cst_16 = arith.constant dense<0.000000e+00> : vector<16x128xf32>
    %32 = tpu.matmul %29, %31, %cst_16 {dimension_numbers = #tpu.dot_dimension_numbers<[1], [0], [0], [1], [0, 0, 1, 1], [], []>} : vector<16x512xbf16>, vector<512x128xbf16>, vector<16x128xf32> -> vector<16x128xf32>
    %33 = arith.addf %30, %32 : vector<16x128xf32>
    %c0_17 = arith.constant 0 : index
    %c0_18 = arith.constant 0 : index
    %34 = vector.load %arg13[%c0_17, %c0_18] : memref<16x128xf32, #tpu.memory_space<vmem>>, vector<16x128xf32>
    tpu.vector_store %arg13[%c0_17, %c0_18], %33 {strides = array<i32>} : memref<16x128xf32, #tpu.memory_space<vmem>>, vector<16x128xf32>,
    %c0_i32_19 = arith.constant 0 : i32
    %35 = arith.cmpi eq, %arg1, %c0_i32_19 : i32
    %36 = arith.extui %35 : i1 to i32
    %c0_i32_20 = arith.constant 0 : i32
    %37 = arith.cmpi ne, %36, %c0_i32_20 : i32
    scf.if %37 {
      %c0_21 = arith.constant 0 : index
      %c0_22 = arith.constant 0 : index
      %38 = vector.load %arg13[%c0_21, %c0_22] : memref<16x128xf32, #tpu.memory_space<vmem>>, vector<16x128xf32>
      %39 = arith.truncf %38 : vector<16x128xf32> to vector<16x128xbf16>
      %c0_23 = arith.constant 0 : index
      %c0_24 = arith.constant 0 : index
      %40 = vector.load %arg11[%c0_23, %c0_24] : memref<16x128xbf16, #tpu.memory_space<vmem>>, vector<16x128xbf16>
      tpu.vector_store %arg11[%c0_23, %c0_24], %39 {strides = array<i32>} : memref<16x128xbf16, #tpu.memory_space<vmem>>, vector<16x128xbf16>,
    } else {
    }
    return
  }
  func.func @transform_0(%arg0: i32, %arg1: i32) -> (i32, i32) {
    %c0_i32 = arith.constant 0 : i32
    %c0_i32_0 = arith.constant 0 : i32
    return %arg0, %c0_i32 : i32, i32
  }
  func.func @transform_1(%arg0: i32, %arg1: i32) -> (i32, i32) {
    %c0_i32 = arith.constant 0 : i32
    %c0_i32_0 = arith.constant 0 : i32
    %c0_i32_1 = arith.constant 0 : i32
    return %c0_i32, %c0_i32_0 : i32, i32
  }
  func.func @transform_2(%arg0: i32, %arg1: i32) -> (i32, i32) {
    %c0_i32 = arith.constant 0 : i32
    %c0_i32_0 = arith.constant 0 : i32
    %c0_i32_1 = arith.constant 0 : i32
    return %c0_i32, %c0_i32_0 : i32, i32
  }
  func.func @transform_3(%arg0: i32, %arg1: i32) -> (i32, i32) {
    %c0_i32 = arith.constant 0 : i32
    %c0_i32_0 = arith.constant 0 : i32
    %c0_i32_1 = arith.constant 0 : i32
    return %c0_i32, %c0_i32_0 : i32, i32
  }
  func.func @transform_4(%arg0: i32, %arg1: i32) -> (i32, i32) {
    %c0_i32 = arith.constant 0 : i32
    %c0_i32_0 = arith.constant 0 : i32
    %c0_i32_1 = arith.constant 0 : i32
    return %c0_i32, %c0_i32_0 : i32, i32
  }
  func.func @transform_5(%arg0: i32, %arg1: i32) -> (i32, i32) {
    %c0_i32 = arith.constant 0 : i32
    %c0_i32_0 = arith.constant 0 : i32
    return %c0_i32, %arg1 : i32, i32
  }
  func.func @transform_6(%arg0: i32, %arg1: i32) -> (i32, i32) {
    %c0_i32 = arith.constant 0 : i32
    %c0_i32_0 = arith.constant 0 : i32
    return %c0_i32, %arg1 : i32, i32
  }
  func.func @transform_7(%arg0: i32, %arg1: i32) -> (i32, i32) {
    %c0_i32 = arith.constant 0 : i32
    %c0_i32_0 = arith.constant 0 : i32
    return %arg1, %c0_i32 : i32, i32
  }
  func.func @transform_8(%arg0: i32, %arg1: i32) -> (i32, i32) {
    %c0_i32 = arith.constant 0 : i32
    %c0_i32_0 = arith.constant 0 : i32
    %c0_i32_1 = arith.constant 0 : i32
    return %c0_i32, %c0_i32_0 : i32, i32
  }
  func.func @transform_9(%arg0: i32, %arg1: i32) -> (i32, i32) {
    %c0_i32 = arith.constant 0 : i32
    %c0_i32_0 = arith.constant 0 : i32
    return %arg0, %c0_i32 : i32, i32
  }
}

module attributes {stable_mosaic.version = 11 : i64} {
  func.func @_pyramid_kernel(%arg0: i32, %arg1: i32, %arg2: memref<16x128xf32, #tpu.memory_space<vmem>>, %arg3: memref<128x512xbf16, #tpu.memory_space<vmem>>, %arg4: memref<1x512xf32, #tpu.memory_space<vmem>>, %arg5: memref<512x4xbf16, #tpu.memory_space<vmem>>, %arg6: memref<1x4xf32, #tpu.memory_space<vmem>>, %arg7: memref<128x512xbf16, #tpu.memory_space<vmem>>, %arg8: memref<1x512xf32, #tpu.memory_space<vmem>>, %arg9: memref<512x128xbf16, #tpu.memory_space<vmem>>, %arg10: memref<4x128xf32, #tpu.memory_space<vmem>>, %arg11: memref<16x128xbf16, #tpu.memory_space<vmem>>, %arg12: memref<16x1xi32, #tpu.memory_space<vmem>>, %arg13: memref<16x128xf32, #tpu.memory_space<vmem>>) attributes {dimension_semantics = [#tpu.dimension_semantics<parallel>, #tpu.dimension_semantics<arbitrary>], iteration_bounds = array<i64: 1, 1>, scalar_prefetch = 0 : i64, scratch_operands = 2 : i64, tpu.core_type = #tpu.core_type<tc>, window_params = [{transform_indices = @transform_0, window_bounds = array<i64: 16, 128>}, {pipeline_mode = #tpu.pipeline_mode<synchronous>, transform_indices = @transform_1, window_bounds = array<i64: 128, 512>}, {pipeline_mode = #tpu.pipeline_mode<synchronous>, transform_indices = @transform_2, window_bounds = array<i64: 1, 512>}, {pipeline_mode = #tpu.pipeline_mode<synchronous>, transform_indices = @transform_3, window_bounds = array<i64: 512, 4>}, {pipeline_mode = #tpu.pipeline_mode<synchronous>, transform_indices = @transform_4, window_bounds = array<i64: 1, 4>}, {transform_indices = @transform_5, window_bounds = array<i64: 128, 512>}, {transform_indices = @transform_6, window_bounds = array<i64: 1, 512>}, {transform_indices = @transform_7, window_bounds = array<i64: 512, 128>}, {pipeline_mode = #tpu.pipeline_mode<synchronous>, transform_indices = @transform_8, window_bounds = array<i64: 4, 128>}, {transform_indices = @transform_9, window_bounds = array<i64: 16, 128>}]} {
    %c0 = arith.constant 0 : index
    %c0_0 = arith.constant 0 : index
    %0 = vector.load %arg2[%c0, %c0_0] : memref<16x128xf32, #tpu.memory_space<vmem>>, vector<16x128xf32>
    %1 = arith.truncf %0 : vector<16x128xf32> to vector<16x128xbf16>
    %c0_i32 = arith.constant 0 : i32
    %2 = arith.cmpi eq, %arg1, %c0_i32 : i32
    %3 = arith.extui %2 : i1 to i32
    %c0_i32_1 = arith.constant 0 : i32
    %4 = arith.cmpi ne, %3, %c0_i32_1 : i32
    scf.if %4 {
      %c0_21 = arith.constant 0 : index
      %c0_22 = arith.constant 0 : index
      %38 = vector.load %arg3[%c0_21, %c0_22] : memref<128x512xbf16, #tpu.memory_space<vmem>>, vector<128x512xbf16>
      %cst_23 = arith.constant dense<0.000000e+00> : vector<16x512xf32>
      %39 = tpu.matmul %1, %38, %cst_23 {dimension_numbers = #tpu.dot_dimension_numbers<[1], [0], [0], [1], [0, 0, 1, 1], [], []>} : vector<16x128xbf16>, vector<128x512xbf16>, vector<16x512xf32> -> vector<16x512xf32>
      %c0_24 = arith.constant 0 : index
      %c0_25 = arith.constant 0 : index
      %40 = vector.load %arg4[%c0_24, %c0_25] : memref<1x512xf32, #tpu.memory_space<vmem>>, vector<1x512xf32>
      %41 = vector.broadcast %40 : vector<1x512xf32> to vector<16x512xf32>
      %42 = arith.addf %39, %41 : vector<16x512xf32>
      %cst_26 = arith.constant 0.000000e+00 : f32
      %43 = vector.broadcast %cst_26 : f32 to vector<16x512xf32>
      %44 = arith.maximumf %42, %43 : vector<16x512xf32>
      %45 = arith.truncf %44 : vector<16x512xf32> to vector<16x512xbf16>
      %c0_27 = arith.constant 0 : index
      %c0_28 = arith.constant 0 : index
      %46 = vector.load %arg5[%c0_27, %c0_28] : memref<512x4xbf16, #tpu.memory_space<vmem>>, vector<512x4xbf16>
      %cst_29 = arith.constant dense<0.000000e+00> : vector<16x4xf32>
      %47 = tpu.matmul %45, %46, %cst_29 {dimension_numbers = #tpu.dot_dimension_numbers<[1], [0], [0], [1], [0, 0, 1, 1], [], []>} : vector<16x512xbf16>, vector<512x4xbf16>, vector<16x4xf32> -> vector<16x4xf32>
      %c0_30 = arith.constant 0 : index
      %c0_31 = arith.constant 0 : index
      %48 = vector.load %arg6[%c0_30, %c0_31] : memref<1x4xf32, #tpu.memory_space<vmem>>, vector<1x4xf32>
      %49 = vector.broadcast %48 : vector<1x4xf32> to vector<16x4xf32>
      %50 = arith.addf %47, %49 : vector<16x4xf32>
      %51 = tpu.iota {dimensions = array<i32: 1>} : vector<16x4xi32>
      %cst_32 = arith.constant dense<0xFF800000> : vector<16xf32>
      %52 = vector.multi_reduction <maximumf>, %50, %cst_32 [1] : vector<16x4xf32> to vector<16xf32>
      %53 = vector.shape_cast %52 : vector<16xf32> to vector<16x1xf32>
      %54 = vector.broadcast %53 : vector<16x1xf32> to vector<16x4xf32>
      %55 = arith.cmpf oge, %50, %54 : vector<16x4xf32>
      %c4_i32 = arith.constant 4 : i32
      %56 = vector.broadcast %c4_i32 : i32 to vector<16x4xi32>
      %57 = arith.select %55, %51, %56 : vector<16x4xi1>, vector<16x4xi32>
      %cst_33 = arith.constant dense<2147483647> : vector<16xi32>
      %58 = vector.multi_reduction <minsi>, %57, %cst_33 [1] : vector<16x4xi32> to vector<16xi32>
      %59 = vector.shape_cast %58 : vector<16xi32> to vector<16x1xi32>
      %c0_34 = arith.constant 0 : index
      %c0_35 = arith.constant 0 : index
      %60 = vector.load %arg12[%c0_34, %c0_35] : memref<16x1xi32, #tpu.memory_space<vmem>>, vector<16x1xi32>
      tpu.vector_store %arg12[%c0_34, %c0_35], %59 {strides = array<i32>} : memref<16x1xi32, #tpu.memory_space<vmem>>, vector<16x1xi32>,
      %cst_36 = arith.constant 0.000000e+00 : f32
      %61 = vector.broadcast %cst_36 : f32 to vector<16x128xf32>
      %c0_37 = arith.constant 0 : index
      %c0_38 = arith.constant 0 : index
      %62 = vector.load %arg13[%c0_37, %c0_38] : memref<16x128xf32, #tpu.memory_space<vmem>>, vector<16x128xf32>
      tpu.vector_store %arg13[%c0_37, %c0_38], %61 {strides = array<i32>} : memref<16x128xf32, #tpu.memory_space<vmem>>, vector<16x128xf32>,
    } else {
    }
    %c0_2 = arith.constant 0 : index
    %c0_3 = arith.constant 0 : index
    %5 = vector.load %arg12[%c0_2, %c0_3] : memref<16x1xi32, #tpu.memory_space<vmem>>, vector<16x1xi32>
    %c0_4 = arith.constant 0 : index
    %c0_5 = arith.constant 0 : index
    %6 = vector.load %arg7[%c0_4, %c0_5] : memref<128x512xbf16, #tpu.memory_space<vmem>>, vector<128x512xbf16>
    %cst = arith.constant dense<0.000000e+00> : vector<16x512xf32>
    %7 = tpu.matmul %1, %6, %cst {dimension_numbers = #tpu.dot_dimension_numbers<[1], [0], [0], [1], [0, 0, 1, 1], [], []>} : vector<16x128xbf16>, vector<128x512xbf16>, vector<16x512xf32> -> vector<16x512xf32>
    %c0_6 = arith.constant 0 : index
    %c0_7 = arith.constant 0 : index
    %8 = vector.load %arg8[%c0_6, %c0_7] : memref<1x512xf32, #tpu.memory_space<vmem>>, vector<1x512xf32>
    %9 = vector.broadcast %8 : vector<1x512xf32> to vector<16x512xf32>
    %10 = arith.addf %7, %9 : vector<16x512xf32>
    %cst_8 = arith.constant 0.000000e+00 : f32
    %11 = vector.broadcast %cst_8 : f32 to vector<16x512xf32>
    %12 = arith.maximumf %10, %11 : vector<16x512xf32>
    %13 = arith.truncf %12 : vector<16x512xf32> to vector<16x512xbf16>
    %14 = tpu.iota {dimensions = array<i32: 1>} : vector<1x512xi32>
    %c512_i32 = arith.constant 512 : i32
    %15 = arith.muli %arg1, %c512_i32 : i32
    %16 = vector.broadcast %15 : i32 to vector<1x512xi32>
    %17 = arith.addi %14, %16 : vector<1x512xi32>
    %c128_i32 = arith.constant 128 : i32
    %18 = vector.broadcast %c128_i32 : i32 to vector<16x1xi32>
    %19 = arith.muli %5, %18 : vector<16x1xi32>
    %20 = vector.broadcast %17 : vector<1x512xi32> to vector<16x512xi32>
    %21 = vector.broadcast %19 : vector<16x1xi32> to vector<16x512xi32>
    %22 = arith.subi %20, %21 : vector<16x512xi32>
    %c0_i32_9 = arith.constant 0 : i32
    %23 = vector.broadcast %c0_i32_9 : i32 to vector<16x512xi32>
    %24 = arith.cmpi sge, %22, %23 : vector<16x512xi32>
    %c128_i32_10 = arith.constant 128 : i32
    %25 = vector.broadcast %c128_i32_10 : i32 to vector<16x512xi32>
    %26 = arith.cmpi slt, %22, %25 : vector<16x512xi32>
    %27 = arith.andi %24, %26 : vector<16x512xi1>
    %cst_11 = arith.constant 0.000000e+00 : bf16
    %28 = vector.broadcast %cst_11 : bf16 to vector<16x512xbf16>
    %29 = arith.select %27, %13, %28 : vector<16x512xi1>, vector<16x512xbf16>
    %c0_12 = arith.constant 0 : index
    %c0_13 = arith.constant 0 : index
    %30 = vector.load %arg13[%c0_12, %c0_13] : memref<16x128xf32, #tpu.memory_space<vmem>>, vector<16x128xf32>
    %c0_14 = arith.constant 0 : index
    %c0_15 = arith.constant 0 : index
    %31 = vector.load %arg9[%c0_14, %c0_15] : memref<512x128xbf16, #tpu.memory_space<vmem>>, vector<512x128xbf16>
    %cst_16 = arith.constant dense<0.000000e+00> : vector<16x128xf32>
    %32 = tpu.matmul %29, %31, %cst_16 {dimension_numbers = #tpu.dot_dimension_numbers<[1], [0], [0], [1], [0, 0, 1, 1], [], []>} : vector<16x512xbf16>, vector<512x128xbf16>, vector<16x128xf32> -> vector<16x128xf32>
    %33 = arith.addf %30, %32 : vector<16x128xf32>
    %c0_17 = arith.constant 0 : index
    %c0_18 = arith.constant 0 : index
    %34 = vector.load %arg13[%c0_17, %c0_18] : memref<16x128xf32, #tpu.memory_space<vmem>>, vector<16x128xf32>
    tpu.vector_store %arg13[%c0_17, %c0_18], %33 {strides = array<i32>} : memref<16x128xf32, #tpu.memory_space<vmem>>, vector<16x128xf32>,
    %c0_i32_19 = arith.constant 0 : i32
    %35 = arith.cmpi eq, %arg1, %c0_i32_19 : i32
    %36 = arith.extui %35 : i1 to i32
    %c0_i32_20 = arith.constant 0 : i32
    %37 = arith.cmpi ne, %36, %c0_i32_20 : i32
    scf.if %37 {
      %c0_21 = arith.constant 0 : index
      %c0_22 = arith.constant 0 : index
      %38 = vector.load %arg13[%c0_21, %c0_22] : memref<16x128xf32, #tpu.memory_space<vmem>>, vector<16x128xf32>
      %39 = arith.truncf %38 : vector<16x128xf32> to vector<16x128xbf16>
      %c0_23 = arith.constant 0 : index
      %c0_24 = arith.constant 0 : index
      %40 = vector.load %arg11[%c0_23, %c0_24] : memref<16x128xbf16, #tpu.memory_space<vmem>>, vector<16x128xbf16>
      tpu.vector_store %arg11[%c0_23, %c0_24], %39 {strides = array<i32>} : memref<16x128xbf16, #tpu.memory_space<vmem>>, vector<16x128xbf16>,
    } else {
    }
    return
  }
  func.func @transform_0(%arg0: i32, %arg1: i32) -> (i32, i32) {
    %c0_i32 = arith.constant 0 : i32
    %c0_i32_0 = arith.constant 0 : i32
    return %arg0, %c0_i32 : i32, i32
  }
  func.func @transform_1(%arg0: i32, %arg1: i32) -> (i32, i32) {
    %c0_i32 = arith.constant 0 : i32
    %c0_i32_0 = arith.constant 0 : i32
    %c0_i32_1 = arith.constant 0 : i32
    return %c0_i32, %c0_i32_0 : i32, i32
  }
  func.func @transform_2(%arg0: i32, %arg1: i32) -> (i32, i32) {
    %c0_i32 = arith.constant 0 : i32
    %c0_i32_0 = arith.constant 0 : i32
    %c0_i32_1 = arith.constant 0 : i32
    return %c0_i32, %c0_i32_0 : i32, i32
  }
  func.func @transform_3(%arg0: i32, %arg1: i32) -> (i32, i32) {
    %c0_i32 = arith.constant 0 : i32
    %c0_i32_0 = arith.constant 0 : i32
    %c0_i32_1 = arith.constant 0 : i32
    return %c0_i32, %c0_i32_0 : i32, i32
  }
  func.func @transform_4(%arg0: i32, %arg1: i32) -> (i32, i32) {
    %c0_i32 = arith.constant 0 : i32
    %c0_i32_0 = arith.constant 0 : i32
    %c0_i32_1 = arith.constant 0 : i32
    return %c0_i32, %c0_i32_0 : i32, i32
  }
  func.func @transform_5(%arg0: i32, %arg1: i32) -> (i32, i32) {
    %c0_i32 = arith.constant 0 : i32
    %c0_i32_0 = arith.constant 0 : i32
    return %c0_i32, %arg1 : i32, i32
  }
  func.func @transform_6(%arg0: i32, %arg1: i32) -> (i32, i32) {
    %c0_i32 = arith.constant 0 : i32
    %c0_i32_0 = arith.constant 0 : i32
    return %c0_i32, %arg1 : i32, i32
  }
  func.func @transform_7(%arg0: i32, %arg1: i32) -> (i32, i32) {
    %c0_i32 = arith.constant 0 : i32
    %c0_i32_0 = arith.constant 0 : i32
    return %arg1, %c0_i32 : i32, i32
  }
  func.func @transform_8(%arg0: i32, %arg1: i32) -> (i32, i32) {
    %c0_i32 = arith.constant 0 : i32
    %c0_i32_0 = arith.constant 0 : i32
    %c0_i32_1 = arith.constant 0 : i32
    return %c0_i32, %c0_i32_0 : i32, i32
  }
  func.func @transform_9(%arg0: i32, %arg1: i32) -> (i32, i32) {
    %c0_i32 = arith.constant 0 : i32
    %c0_i32_0 = arith.constant 0 : i32
    return %arg0, %c0_i32 : i32, i32
  }
}

</mosaic_0001>

<llo_original>
// kernel: tpu_custom_call.1
$region0: #{tpu_custom_call.1}
  #allocation0 [shape = 'u32[]', space=smem, size = 0x4, offset = 0x4, fixed_abs, tag = 'smem constant byte address 0x4 - core index']
  #allocation1 [shape = 'u32[144,128]{1,0:T(1,128)}', space=vmem, size = 0x12000, scoped, tag = 'internal scratch']
  #allocation2 [shape = 's32[16,1]{1,0:T(8,128)}', space=vmem, size = 0x2000, scoped, tag = 'scratch operand']
  #allocation3 [shape = 'f32[16,128]{1,0:T(8,128)}', space=vmem, size = 0x2000, scoped, tag = 'scratch operand']
  %s0 = inlined_call_operand.hbm [shape: f32[16,128], index: 0, kind: input, shape index: {}]
  %s1 = inlined_call_operand.vmem [shape: bf16[128,512], index: 1, kind: input, shape index: {}]
  %s2 = inlined_call_operand.vmem [shape: f32[1,512], index: 2, kind: input, shape index: {}]
  %s3 = inlined_call_operand.vmem [shape: bf16[512,4], index: 3, kind: input, shape index: {}]
  %s4 = inlined_call_operand.vmem [shape: f32[1,4], index: 4, kind: input, shape index: {}]
  %s5 = inlined_call_operand.hbm [shape: bf16[128,512], index: 5, kind: input, shape index: {}]
  %s6 = inlined_call_operand.vmem [shape: f32[1,512], index: 6, kind: input, shape index: {}]
  %s7 = inlined_call_operand.hbm [shape: bf16[512,128], index: 7, kind: input, shape index: {}]
  %s8 = inlined_call_operand.vmem [shape: f32[4,128], index: 8, kind: input, shape index: {}]
  %s9 = inlined_call_operand.hbm [shape: bf16[16,128], index: 9, kind: output, shape index: {}]
  %s10 = sld [smem:[#allocation0]]
  $region66: #{tpu_custom_call.1} parent=0
    _
  %s12 = ssub.s32 1, %s10
  %s13 = scalar_select 0, %s12, %s10
  $region1: #{tpu_custom_call.1} parent=0
    #allocation4 [shape = 'u8[8192]{0}', space=vmem, size = 0x2000, scoped, tag = 'input window, operand 0, single buffered']
    #allocation5 [shape = 's32[1]{0}', space=sflag, size = 0x4, scoped, tag = 'scoped memory for tpu_custom_call.1']
    #allocation6 [shape = 's32[1]{0}', space=sflag, size = 0x4, scoped, tag = 'scoped memory for tpu_custom_call.1']
    #allocation7 [shape = 'u8[131072]{0}', space=vmem, size = 0x20000, scoped, tag = 'input window, operand 5, single buffered']
    #allocation8 [shape = 's32[1]{0}', space=sflag, size = 0x4, scoped, tag = 'scoped memory for tpu_custom_call.1']
    #allocation9 [shape = 'u8[131072]{0}', space=vmem, size = 0x20000, scoped, tag = 'input window, operand 7, single buffered']
    #allocation10 [shape = 'u8[4096]{0}', space=vmem, size = 0x1000, scoped, tag = 'output window, operand 0, single buffered']
    %14 = vsyncpa [#allocation5], 0
    %15 = vsyncpa [#allocation8], 0
    %16 = vsyncpa [#allocation6], 0
    // Predicated region
    $region2: #{tpu_custom_call.1} parent=1 // pred_check
      _
    $region3: #{tpu_custom_call.1} parent=1 // pred_check_branch
      %18 = sbr.rel (0) target = $region5
    $region4: #{tpu_custom_call.1} parent=1 // pred_region
      %s20 = ssub.s32 256, 256
      %21 = vsyncadd [#allocation5], %s20
      %s22 = sshll.u32 [#allocation4], 4
      %s23 = int_to_ptr.vmem [resolvable:$true] %s22
      %28 = dma.hbm_to_vmem [thread:$0]  %s0, 256, %s23, [#allocation5], 128, 128, 8
    $region5: #{tpu_custom_call.1} parent=1 // pred_fallthru
      _
    // Predicated region
    $region6: #{tpu_custom_call.1} parent=1 // pred_check
      _
    $region7: #{tpu_custom_call.1} parent=1 // pred_check_branch
      %30 = sbr.rel (0) target = $region9
    $region8: #{tpu_custom_call.1} parent=1 // pred_region
      _
    $region9: #{tpu_custom_call.1} parent=1 // pred_fallthru
      _
    // Predicated region
    $region10: #{tpu_custom_call.1} parent=1 // pred_check
      _
    $region11: #{tpu_custom_call.1} parent=1 // pred_check_branch
      %32 = sbr.rel (0) target = $region13
    $region12: #{tpu_custom_call.1} parent=1 // pred_region
      _
    $region13: #{tpu_custom_call.1} parent=1 // pred_fallthru
      _
    // Predicated region
    $region14: #{tpu_custom_call.1} parent=1 // pred_check
      _
    $region15: #{tpu_custom_call.1} parent=1 // pred_check_branch
      %34 = sbr.rel (0) target = $region17
    $region16: #{tpu_custom_call.1} parent=1 // pred_region
      _
    $region17: #{tpu_custom_call.1} parent=1 // pred_fallthru
      _
    // Predicated region
    $region18: #{tpu_custom_call.1} parent=1 // pred_check
      _
    $region19: #{tpu_custom_call.1} parent=1 // pred_check_branch
      %36 = sbr.rel (0) target = $region21
    $region20: #{tpu_custom_call.1} parent=1 // pred_region
      _
    $region21: #{tpu_custom_call.1} parent=1 // pred_fallthru
      _
    // Predicated region
    $region22: #{tpu_custom_call.1} parent=1 // pred_check
      _
    $region23: #{tpu_custom_call.1} parent=1 // pred_check_branch
      %38 = sbr.rel (0) target = $region25
    $region24: #{tpu_custom_call.1} parent=1 // pred_region
      %s40 = ssub.s32 4096, 4096
      %41 = vsyncadd [#allocation8], %s40
      %s42 = sshll.u32 [#allocation7], 4
      %s43 = int_to_ptr.vmem [resolvable:$true] %s42
      %48 = dma.hbm_to_vmem [thread:$0]  %s5, 4096, %s43, [#allocation8], 256, 256, 16
    $region25: #{tpu_custom_call.1} parent=1 // pred_fallthru
      _
    // Predicated region
    $region26: #{tpu_custom_call.1} parent=1 // pred_check
      _
    $region27: #{tpu_custom_call.1} parent=1 // pred_check_branch
      %50 = sbr.rel (0) target = $region29
    $region28: #{tpu_custom_call.1} parent=1 // pred_region
      _
    $region29: #{tpu_custom_call.1} parent=1 // pred_fallthru
      _
    // Predicated region
    $region30: #{tpu_custom_call.1} parent=1 // pred_check
      _
    $region31: #{tpu_custom_call.1} parent=1 // pred_check_branch
      %52 = sbr.rel (0) target = $region33
    $region32: #{tpu_custom_call.1} parent=1 // pred_region
      %s54 = ssub.s32 4096, 4096
      %55 = vsyncadd [#allocation8], %s54
      %s56 = sshll.u32 [#allocation9], 4
      %s57 = int_to_ptr.vmem [resolvable:$true] %s56
      %62 = dma.hbm_to_vmem [thread:$0]  %s7, 4096, %s57, [#allocation8], 64, 64, 4
    $region33: #{tpu_custom_call.1} parent=1 // pred_fallthru
      _
    // Predicated region
    $region34: #{tpu_custom_call.1} parent=1 // pred_check
      _
    $region35: #{tpu_custom_call.1} parent=1 // pred_check_branch
      %64 = sbr.rel (0) target = $region37
    $region36: #{tpu_custom_call.1} parent=1 // pred_region
      _
    $region37: #{tpu_custom_call.1} parent=1 // pred_fallthru
      _
    // Predicated region
    $region38: #{tpu_custom_call.1} parent=1 // pred_check
      _
    $region39: #{tpu_custom_call.1} parent=1 // pred_check_branch
      %66 = sbr.rel (0) target = $region41
    $region40: #{tpu_custom_call.1} parent=1 // pred_region
      %67 = dma.done [#allocation5], 256
    $region41: #{tpu_custom_call.1} parent=1 // pred_fallthru
      _
    // Predicated region
    $region42: #{tpu_custom_call.1} parent=1 // pred_check
      _
    $region43: #{tpu_custom_call.1} parent=1 // pred_check_branch
      %69 = sbr.rel (0) target = $region45
    $region44: #{tpu_custom_call.1} parent=1 // pred_region
      %70 = dma.done [#allocation8], 4096
    $region45: #{tpu_custom_call.1} parent=1 // pred_fallthru
      _
    // Predicated region
    $region46: #{tpu_custom_call.1} parent=1 // pred_check
      _
    $region47: #{tpu_custom_call.1} parent=1 // pred_check_branch
      %72 = sbr.rel (0) target = $region49
    $region48: #{tpu_custom_call.1} parent=1 // pred_region
      %73 = dma.done [#allocation8], 4096
    $region49: #{tpu_custom_call.1} parent=1 // pred_fallthru
      _
    %v75 = vld [vmem:[#allocation4] sm:$0xff]
    %v76 = vld [vmem:[#allocation4 + $0x8] sm:$0xff]
    %v77 = vpack.c.bf16 %v76, %v75
    %p78 = scmp.eq.s32.totalorder 0, 0
    // Predicated region
    $region50: #{tpu_custom_call.1} parent=1 // pred_check
      %p79 = pneg %p78
    $region51: #{tpu_custom_call.1} parent=1 // pred_check_branch
      %81 = sbr.rel (%p79) target = $region53
    $region52: #{tpu_custom_call.1} parent=1 // pred_region
      %v82 = vld [vmem:[%s1] sm:$0xff]
      %v83 = vld [vmem:[%s1 + $0x8] sm:$0xff]
      %v84 = vld [vmem:[%s1 + $0x10] sm:$0xff]
      %v85 = vld [vmem:[%s1 + $0x18] sm:$0xff]
      %v86 = vld [vmem:[%s1 + $0x20] sm:$0xff]
      %v87 = vld [vmem:[%s1 + $0x28] sm:$0xff]
      %v88 = vld [vmem:[%s1 + $0x30] sm:$0xff]
      %v89 = vld [vmem:[%s1 + $0x38] sm:$0xff]
      %v90 = vld [vmem:[%s1 + $0x40] sm:$0xff]
      %v91 = vld [vmem:[%s1 + $0x48] sm:$0xff]
      %v92 = vld [vmem:[%s1 + $0x50] sm:$0xff]
      %v93 = vld [vmem:[%s1 + $0x58] sm:$0xff]
      %v94 = vld [vmem:[%s1 + $0x60] sm:$0xff]
      %v95 = vld [vmem:[%s1 + $0x68] sm:$0xff]
      %v96 = vld [vmem:[%s1 + $0x70] sm:$0xff]
      %v97 = vld [vmem:[%s1 + $0x78] sm:$0xff]
      %v98 = vld [vmem:[%s1 + $0x80] sm:$0xff]
      %v99 = vld [vmem:[%s1 + $0x88] sm:$0xff]
      %v100 = vld [vmem:[%s1 + $0x90] sm:$0xff]
      %v101 = vld [vmem:[%s1 + $0x98] sm:$0xff]
      %v102 = vld [vmem:[%s1 + $0xa0] sm:$0xff]
      %v103 = vld [vmem:[%s1 + $0xa8] sm:$0xff]
      %v104 = vld [vmem:[%s1 + $0xb0] sm:$0xff]
      %v105 = vld [vmem:[%s1 + $0xb8] sm:$0xff]
      %v106 = vld [vmem:[%s1 + $0xc0] sm:$0xff]
      %v107 = vld [vmem:[%s1 + $0xc8] sm:$0xff]
      %v108 = vld [vmem:[%s1 + $0xd0] sm:$0xff]
      %v109 = vld [vmem:[%s1 + $0xd8] sm:$0xff]
      %v110 = vld [vmem:[%s1 + $0xe0] sm:$0xff]
      %v111 = vld [vmem:[%s1 + $0xe8] sm:$0xff]
      %v112 = vld [vmem:[%s1 + $0xf0] sm:$0xff]
      %v113 = vld [vmem:[%s1 + $0xf8] sm:$0xff]
      %v114 = vld [vmem:[%s2] sm:$0xf]
      %v116 = vlaneseq
      %v117 = vshrl.u32 %v116, 7
      %v118 = vsub.s32 0, %v117
      %v119 = vrot.slane %v114, %v118
      %v120 = vlaneseq
      %v121 = vshrl.u32 %v120, 7
      %v122 = vsub.s32 1, %v121
      %v123 = vrot.slane %v114, %v122
      %v124 = vlaneseq
      %v125 = vshrl.u32 %v124, 7
      %v126 = vsub.s32 2, %v125
      %v127 = vrot.slane %v114, %v126
      %v128 = vlaneseq
      %v129 = vshrl.u32 %v128, 7
      %v130 = vsub.s32 3, %v129
      %v131 = vrot.slane %v114, %v130
      %v168 = vunpack.c.l.b16 %v82
      %v169 = vunpack.c.h.b16 %v82
      %v170 = vunpack.c.l.b16 %v83
      %v171 = vunpack.c.h.b16 %v83
      %v172 = vunpack.c.l.b16 %v84
      %v173 = vunpack.c.h.b16 %v84
      %v174 = vunpack.c.l.b16 %v85
      %v175 = vunpack.c.h.b16 %v85
      %v176 = vunpack.c.l.b16 %v86
      %v177 = vunpack.c.h.b16 %v86
      %v178 = vunpack.c.l.b16 %v87
      %v179 = vunpack.c.h.b16 %v87
      %v180 = vunpack.c.l.b16 %v88
      %v181 = vunpack.c.h.b16 %v88
      %v182 = vunpack.c.l.b16 %v89
      %v183 = vunpack.c.h.b16 %v89
      %v184 = vunpack.c.l.b16 %v90
      %v185 = vunpack.c.h.b16 %v90
      %v186 = vunpack.c.l.b16 %v91
      %v187 = vunpack.c.h.b16 %v91
      %v188 = vunpack.c.l.b16 %v92
      %v189 = vunpack.c.h.b16 %v92
      %v190 = vunpack.c.l.b16 %v93
      %v191 = vunpack.c.h.b16 %v93
      %v192 = vunpack.c.l.b16 %v94
      %v193 = vunpack.c.h.b16 %v94
      %v194 = vunpack.c.l.b16 %v95
      %v195 = vunpack.c.h.b16 %v95
      %v196 = vunpack.c.l.b16 %v96
      %v197 = vunpack.c.h.b16 %v96
      %v198 = vunpack.c.l.b16 %v97
      %v199 = vunpack.c.h.b16 %v97
      %v200 = vunpack.c.l.b16 %v98
      %v201 = vunpack.c.h.b16 %v98
      %v202 = vunpack.c.l.b16 %v99
      %v203 = vunpack.c.h.b16 %v99
      %v204 = vunpack.c.l.b16 %v100
      %v205 = vunpack.c.h.b16 %v100
      %v206 = vunpack.c.l.b16 %v101
      %v207 = vunpack.c.h.b16 %v101
      %v208 = vunpack.c.l.b16 %v102
      %v209 = vunpack.c.h.b16 %v102
      %v210 = vunpack.c.l.b16 %v103
      %v211 = vunpack.c.h.b16 %v103
      %v212 = vunpack.c.l.b16 %v104
      %v213 = vunpack.c.h.b16 %v104
      %v214 = vunpack.c.l.b16 %v105
      %v215 = vunpack.c.h.b16 %v105
      %v216 = vunpack.c.l.b16 %v106
      %v217 = vunpack.c.h.b16 %v106
      %v218 = vunpack.c.l.b16 %v107
      %v219 = vunpack.c.h.b16 %v107
      %v220 = vunpack.c.l.b16 %v108
      %v221 = vunpack.c.h.b16 %v108
      %v222 = vunpack.c.l.b16 %v109
      %v223 = vunpack.c.h.b16 %v109
      %v224 = vunpack.c.l.b16 %v110
      %v225 = vunpack.c.h.b16 %v110
      %v226 = vunpack.c.l.b16 %v111
      %v227 = vunpack.c.h.b16 %v111
      %v228 = vunpack.c.l.b16 %v112
      %v229 = vunpack.c.h.b16 %v112
      %v230 = vunpack.c.l.b16 %v113
      %v231 = vunpack.c.h.b16 %v113
      %v232 = vpack.c.b16 %v172, %v168
      %v233 = vpack.c.b16 %v173, %v169
      %v234 = vpack.c.b16 %v174, %v170
      %v235 = vpack.c.b16 %v175, %v171
      %v236 = vpack.c.b16 %v180, %v176
      %v237 = vpack.c.b16 %v181, %v177
      %v238 = vpack.c.b16 %v182, %v178
      %v239 = vpack.c.b16 %v183, %v179
      %v240 = vpack.c.b16 %v188, %v184
      %v241 = vpack.c.b16 %v189, %v185
      %v242 = vpack.c.b16 %v190, %v186
      %v243 = vpack.c.b16 %v191, %v187
      %v244 = vpack.c.b16 %v196, %v192
      %v245 = vpack.c.b16 %v197, %v193
      %v246 = vpack.c.b16 %v198, %v194
      %v247 = vpack.c.b16 %v199, %v195
      %v248 = vpack.c.b16 %v204, %v200
      %v249 = vpack.c.b16 %v205, %v201
      %v250 = vpack.c.b16 %v206, %v202
      %v251 = vpack.c.b16 %v207, %v203
      %v252 = vpack.c.b16 %v212, %v208
      %v253 = vpack.c.b16 %v213, %v209
      %v254 = vpack.c.b16 %v214, %v210
      %v255 = vpack.c.b16 %v215, %v211
      %v256 = vpack.c.b16 %v220, %v216
      %v257 = vpack.c.b16 %v221, %v217
      %v258 = vpack.c.b16 %v222, %v218
      %v259 = vpack.c.b16 %v223, %v219
      %v260 = vpack.c.b16 %v228, %v224
      %v261 = vpack.c.b16 %v229, %v225
      %v262 = vpack.c.b16 %v230, %v226
      %v263 = vpack.c.b16 %v231, %v227
      %296 = vmatprep.subr.bf16.mxu0 %v261
      %297 = vmatpush1.bf16.msra.mxu0 %v260
      %298 = vmatprep.subr.bf16.mxu0 %v257
      %299 = vmatpush1.bf16.msra.mxu0 %v256
      %300 = vmatprep.subr.bf16.mxu0 %v253
      %301 = vmatpush1.bf16.msra.mxu0 %v252
      %302 = vmatprep.subr.bf16.mxu0 %v249
      %303 = vmatpush1.bf16.msra.mxu0 %v248
      %304 = vmatprep.subr.bf16.mxu0 %v245
      %305 = vmatpush1.bf16.msra.mxu0 %v244
      %306 = vmatprep.subr.bf16.mxu0 %v241
      %307 = vmatpush1.bf16.msra.mxu0 %v240
      %308 = vmatprep.subr.bf16.mxu0 %v237
      %309 = vmatpush1.bf16.msra.mxu0 %v236
      %310 = vmatprep.subr.bf16.mxu0 %v233
      %311 = vmatpush1.bf16.msra.mxu0 %v232
      %312 = vmatprep.subr.bf16.mxu0 0
      %313 = vmatpush2.bf16.msra.mxu0 0
      %314 = vmatprep.subr.bf16.mxu0 0
      %315 = vmatpush2.bf16.msra.mxu0 0
      %316 = vmatprep.subr.bf16.mxu0 0
      %317 = vmatpush2.bf16.msra.mxu0 0
      %318 = vmatprep.subr.bf16.mxu0 0
      %319 = vmatpush2.bf16.msra.mxu0 0
      %320 = vmatprep.subr.bf16.mxu0 0
      %321 = vmatpush2.bf16.msra.mxu0 0
      %322 = vmatprep.subr.bf16.mxu0 0
      %323 = vmatpush2.bf16.msra.mxu0 0
      %324 = vmatprep.subr.bf16.mxu0 0
      %325 = vmatpush2.bf16.msra.mxu0 0
      %326 = vmatprep.subr.bf16.mxu0 0
      %327 = vmatpush2.bf16.msra.mxu0 0
      %328 = vmatprep.mubr.bf16.mxu0 0
      %329 = vmatmul.mubr.bf16.gmra.mxu0 %v77
      %v330 = vpop.f32.mrf.mxu0
      %v331 = vadd.f32 %v119, %v330
      %v332 = vpop.f32.mrf.mxu0
      %v333 = vadd.f32 %v123, %v332
      %v334 = vpop.f32.mrf.mxu0
      %v335 = vadd.f32 %v119, %v334
      %v336 = vpop.f32.mrf.mxu0
      %v337 = vadd.f32 %v123, %v336
      %338 = vdwg.mxu0
      %339 = vmatprep.subr.bf16.mxu0 %v263
      %340 = vmatpush1.bf16.msra.mxu0 %v262
      %341 = vmatprep.subr.bf16.mxu0 %v259
      %342 = vmatpush1.bf16.msra.mxu0 %v258
      %343 = vmatprep.subr.bf16.mxu0 %v255
      %344 = vmatpush1.bf16.msra.mxu0 %v254
      %345 = vmatprep.subr.bf16.mxu0 %v251
      %346 = vmatpush1.bf16.msra.mxu0 %v250
      %347 = vmatprep.subr.bf16.mxu0 %v247
      %348 = vmatpush1.bf16.msra.mxu0 %v246
      %349 = vmatprep.subr.bf16.mxu0 %v243
      %350 = vmatpush1.bf16.msra.mxu0 %v242
      %351 = vmatprep.subr.bf16.mxu0 %v239
      %352 = vmatpush1.bf16.msra.mxu0 %v238
      %353 = vmatprep.subr.bf16.mxu0 %v235
      %354 = vmatpush1.bf16.msra.mxu0 %v234
      %355 = vmatprep.subr.bf16.mxu0 0
      %356 = vmatpush2.bf16.msra.mxu0 0
      %357 = vmatprep.subr.bf16.mxu0 0
      %358 = vmatpush2.bf16.msra.mxu0 0
      %359 = vmatprep.subr.bf16.mxu0 0
      %360 = vmatpush2.bf16.msra.mxu0 0
      %361 = vmatprep.subr.bf16.mxu0 0
      %362 = vmatpush2.bf16.msra.mxu0 0
      %363 = vmatprep.subr.bf16.mxu0 0
      %364 = vmatpush2.bf16.msra.mxu0 0
      %365 = vmatprep.subr.bf16.mxu0 0
      %366 = vmatpush2.bf16.msra.mxu0 0
      %367 = vmatprep.subr.bf16.mxu0 0
      %368 = vmatpush2.bf16.msra.mxu0 0
      %369 = vmatprep.subr.bf16.mxu0 0
      %370 = vmatpush2.bf16.msra.mxu0 0
      %371 = vmatprep.mubr.bf16.mxu0 0
      %372 = vmatmul.mubr.bf16.gmra.mxu0 %v77
      %v373 = vpop.f32.mrf.mxu0
      %v374 = vadd.f32 %v127, %v373
      %v375 = vpop.f32.mrf.mxu0
      %v376 = vadd.f32 %v131, %v375
      %v377 = vpop.f32.mrf.mxu0
      %v378 = vadd.f32 %v127, %v377
      %v379 = vpop.f32.mrf.mxu0
      %v380 = vadd.f32 %v131, %v379
      %381 = vdwg.mxu0
      %v382 = vmax.f32 %v331, 0.0
      %v383 = vmax.f32 %v333, 0.0
      %v384 = vmax.f32 %v374, 0.0
      %v385 = vmax.f32 %v376, 0.0
      %v386 = vmax.f32 %v335, 0.0
      %v387 = vmax.f32 %v337, 0.0
      %v388 = vmax.f32 %v378, 0.0
      %v389 = vmax.f32 %v380, 0.0
      %v390 = vpack.c.bf16 %v386, %v382
      %v391 = vpack.c.bf16 %v387, %v383
      %v392 = vpack.c.bf16 %v388, %v384
      %v393 = vpack.c.bf16 %v389, %v385
      %v394 = vld [vmem:[%s3] sm:$0xf]
      %v395 = vld [vmem:[%s3 + $0x4] sm:$0xf]
      %v396 = vld [vmem:[%s3 + $0x8] sm:$0xf]
      %v397 = vld [vmem:[%s3 + $0xc] sm:$0xf]
      %v398 = vld [vmem:[%s3 + $0x10] sm:$0xf]
      %v399 = vld [vmem:[%s3 + $0x14] sm:$0xf]
      %v400 = vld [vmem:[%s3 + $0x18] sm:$0xf]
      %v401 = vld [vmem:[%s3 + $0x1c] sm:$0xf]
      %v402 = vld [vmem:[%s3 + $0x20] sm:$0xf]
      %v403 = vld [vmem:[%s3 + $0x24] sm:$0xf]
      %v404 = vld [vmem:[%s3 + $0x28] sm:$0xf]
      %v405 = vld [vmem:[%s3 + $0x2c] sm:$0xf]
      %v406 = vld [vmem:[%s3 + $0x30] sm:$0xf]
      %v407 = vld [vmem:[%s3 + $0x34] sm:$0xf]
      %v408 = vld [vmem:[%s3 + $0x38] sm:$0xf]
      %v409 = vld [vmem:[%s3 + $0x3c] sm:$0xf]
      %v410 = vld [vmem:[%s3 + $0x40] sm:$0xf]
      %v411 = vld [vmem:[%s3 + $0x44] sm:$0xf]
      %v412 = vld [vmem:[%s3 + $0x48] sm:$0xf]
      %v413 = vld [vmem:[%s3 + $0x4c] sm:$0xf]
      %v414 = vld [vmem:[%s3 + $0x50] sm:$0xf]
      %v415 = vld [vmem:[%s3 + $0x54] sm:$0xf]
      %v416 = vld [vmem:[%s3 + $0x58] sm:$0xf]
      %v417 = vld [vmem:[%s3 + $0x5c] sm:$0xf]
      %v418 = vld [vmem:[%s3 + $0x60] sm:$0xf]
      %v419 = vld [vmem:[%s3 + $0x64] sm:$0xf]
      %v420 = vld [vmem:[%s3 + $0x68] sm:$0xf]
      %v421 = vld [vmem:[%s3 + $0x6c] sm:$0xf]
      %v422 = vld [vmem:[%s3 + $0x70] sm:$0xf]
      %v423 = vld [vmem:[%s3 + $0x74] sm:$0xf]
      %v424 = vld [vmem:[%s3 + $0x78] sm:$0xf]
      %v425 = vld [vmem:[%s3 + $0x7c] sm:$0xf]
      %v426 = vld [vmem:[%s3 + $0x80] sm:$0xf]
      %v427 = vld [vmem:[%s3 + $0x84] sm:$0xf]
      %v428 = vld [vmem:[%s3 + $0x88] sm:$0xf]
      %v429 = vld [vmem:[%s3 + $0x8c] sm:$0xf]
      %v430 = vld [vmem:[%s3 + $0x90] sm:$0xf]
      %v431 = vld [vmem:[%s3 + $0x94] sm:$0xf]
      %v432 = vld [vmem:[%s3 + $0x98] sm:$0xf]
      %v433 = vld [vmem:[%s3 + $0x9c] sm:$0xf]
      %v434 = vld [vmem:[%s3 + $0xa0] sm:$0xf]
      %v435 = vld [vmem:[%s3 + $0xa4] sm:$0xf]
      %v436 = vld [vmem:[%s3 + $0xa8] sm:$0xf]
      %v437 = vld [vmem:[%s3 + $0xac] sm:$0xf]
      %v438 = vld [vmem:[%s3 + $0xb0] sm:$0xf]
      %v439 = vld [vmem:[%s3 + $0xb4] sm:$0xf]
      %v440 = vld [vmem:[%s3 + $0xb8] sm:$0xf]
      %v441 = vld [vmem:[%s3 + $0xbc] sm:$0xf]
      %v442 = vld [vmem:[%s3 + $0xc0] sm:$0xf]
      %v443 = vld [vmem:[%s3 + $0xc4] sm:$0xf]
      %v444 = vld [vmem:[%s3 + $0xc8] sm:$0xf]
      %v445 = vld [vmem:[%s3 + $0xcc] sm:$0xf]
      %v446 = vld [vmem:[%s3 + $0xd0] sm:$0xf]
      %v447 = vld [vmem:[%s3 + $0xd4] sm:$0xf]
      %v448 = vld [vmem:[%s3 + $0xd8] sm:$0xf]
      %v449 = vld [vmem:[%s3 + $0xdc] sm:$0xf]
      %v450 = vld [vmem:[%s3 + $0xe0] sm:$0xf]
      %v451 = vld [vmem:[%s3 + $0xe4] sm:$0xf]
      %v452 = vld [vmem:[%s3 + $0xe8] sm:$0xf]
      %v453 = vld [vmem:[%s3 + $0xec] sm:$0xf]
      %v454 = vld [vmem:[%s3 + $0xf0] sm:$0xf]
      %v455 = vld [vmem:[%s3 + $0xf4] sm:$0xf]
      %v456 = vld [vmem:[%s3 + $0xf8] sm:$0xf]
      %v457 = vld [vmem:[%s3 + $0xfc] sm:$0xf]
      %v458 = vld [vmem:[%s4] sm:$0x1]
      %v460 = vlaneseq
      %v461 = vshrl.u32 %v460, 7
      %v462 = vsub.s32 0, %v461
      %v463 = vrot.slane %v458, %v462
      %v529 = vunpack.c.l.b16 %v394
      %v530 = vunpack.c.l.b16 %v395
      %v531 = vunpack.c.l.b16 %v396
      %v532 = vunpack.c.l.b16 %v397
      %v533 = vunpack.c.l.b16 %v398
      %v534 = vunpack.c.l.b16 %v399
      %v535 = vunpack.c.l.b16 %v400
      %v536 = vunpack.c.l.b16 %v401
      %v537 = vunpack.c.l.b16 %v402
      %v538 = vunpack.c.l.b16 %v403
      %v539 = vunpack.c.l.b16 %v404
      %v540 = vunpack.c.l.b16 %v405
      %v541 = vunpack.c.l.b16 %v406
      %v542 = vunpack.c.l.b16 %v407
      %v543 = vunpack.c.l.b16 %v408
      %v544 = vunpack.c.l.b16 %v409
      %v545 = vunpack.c.l.b16 %v410
      %v546 = vunpack.c.l.b16 %v411
      %v547 = vunpack.c.l.b16 %v412
      %v548 = vunpack.c.l.b16 %v413
      %v549 = vunpack.c.l.b16 %v414
      %v550 = vunpack.c.l.b16 %v415
      %v551 = vunpack.c.l.b16 %v416
      %v552 = vunpack.c.l.b16 %v417
      %v553 = vunpack.c.l.b16 %v418
      %v554 = vunpack.c.l.b16 %v419
      %v555 = vunpack.c.l.b16 %v420
      %v556 = vunpack.c.l.b16 %v421
      %v557 = vunpack.c.l.b16 %v422
      %v558 = vunpack.c.l.b16 %v423
      %v559 = vunpack.c.l.b16 %v424
      %v560 = vunpack.c.l.b16 %v425
      %v561 = vunpack.c.l.b16 %v426
      %v562 = vunpack.c.l.b16 %v427
      %v563 = vunpack.c.l.b16 %v428
      %v564 = vunpack.c.l.b16 %v429
      %v565 = vunpack.c.l.b16 %v430
      %v566 = vunpack.c.l.b16 %v431
      %v567 = vunpack.c.l.b16 %v432
      %v568 = vunpack.c.l.b16 %v433
      %v569 = vunpack.c.l.b16 %v434
      %v570 = vunpack.c.l.b16 %v435
      %v571 = vunpack.c.l.b16 %v436
      %v572 = vunpack.c.l.b16 %v437
      %v573 = vunpack.c.l.b16 %v438
      %v574 = vunpack.c.l.b16 %v439
      %v575 = vunpack.c.l.b16 %v440
      %v576 = vunpack.c.l.b16 %v441
      %v577 = vunpack.c.l.b16 %v442
      %v578 = vunpack.c.l.b16 %v443
      %v579 = vunpack.c.l.b16 %v444
      %v580 = vunpack.c.l.b16 %v445
      %v581 = vunpack.c.l.b16 %v446
      %v582 = vunpack.c.l.b16 %v447
      %v583 = vunpack.c.l.b16 %v448
      %v584 = vunpack.c.l.b16 %v449
      %v585 = vunpack.c.l.b16 %v450
      %v586 = vunpack.c.l.b16 %v451
      %v587 = vunpack.c.l.b16 %v452
      %v588 = vunpack.c.l.b16 %v453
      %v589 = vunpack.c.l.b16 %v454
      %v590 = vunpack.c.l.b16 %v455
      %v591 = vunpack.c.l.b16 %v456
      %v592 = vunpack.c.l.b16 %v457
      %v593 = vpack.c.b16 %v530, %v529
      %v594 = vpack.c.b16 %v532, %v531
      %v595 = vpack.c.b16 %v534, %v533
      %v596 = vpack.c.b16 %v536, %v535
      %v597 = vpack.c.b16 %v538, %v537
      %v598 = vpack.c.b16 %v540, %v539
      %v599 = vpack.c.b16 %v542, %v541
      %v600 = vpack.c.b16 %v544, %v543
      %v601 = vpack.c.b16 %v546, %v545
      %v602 = vpack.c.b16 %v548, %v547
      %v603 = vpack.c.b16 %v550, %v549
      %v604 = vpack.c.b16 %v552, %v551
      %v605 = vpack.c.b16 %v554, %v553
      %v606 = vpack.c.b16 %v556, %v555
      %v607 = vpack.c.b16 %v558, %v557
      %v608 = vpack.c.b16 %v560, %v559
      %v609 = vpack.c.b16 %v562, %v561
      %v610 = vpack.c.b16 %v564, %v563
      %v611 = vpack.c.b16 %v566, %v565
      %v612 = vpack.c.b16 %v568, %v567
      %v613 = vpack.c.b16 %v570, %v569
      %v614 = vpack.c.b16 %v572, %v571
      %v615 = vpack.c.b16 %v574, %v573
      %v616 = vpack.c.b16 %v576, %v575
      %v617 = vpack.c.b16 %v578, %v577
      %v618 = vpack.c.b16 %v580, %v579
      %v619 = vpack.c.b16 %v582, %v581
      %v620 = vpack.c.b16 %v584, %v583
      %v621 = vpack.c.b16 %v586, %v585
      %v622 = vpack.c.b16 %v588, %v587
      %v623 = vpack.c.b16 %v590, %v589
      %v624 = vpack.c.b16 %v592, %v591
      %657 = vmatprep.subr.bf16.mxu0 0
      %658 = vmatpush1.bf16.msra.mxu0 %v600
      %659 = vmatprep.subr.bf16.mxu0 0
      %660 = vmatpush1.bf16.msra.mxu0 %v599
      %661 = vmatprep.subr.bf16.mxu0 0
      %662 = vmatpush1.bf16.msra.mxu0 %v598
      %663 = vmatprep.subr.bf16.mxu0 0
      %664 = vmatpush1.bf16.msra.mxu0 %v597
      %665 = vmatprep.subr.bf16.mxu0 0
      %666 = vmatpush1.bf16.msra.mxu0 %v596
      %667 = vmatprep.subr.bf16.mxu0 0
      %668 = vmatpush1.bf16.msra.mxu0 %v595
      %669 = vmatprep.subr.bf16.mxu0 0
      %670 = vmatpush1.bf16.msra.mxu0 %v594
      %671 = vmatprep.subr.bf16.mxu0 0
      %672 = vmatpush1.bf16.msra.mxu0 %v593
      %673 = vmatprep.subr.bf16.mxu0 0
      %674 = vmatpush2.bf16.msra.mxu0 %v608
      %675 = vmatprep.subr.bf16.mxu0 0
      %676 = vmatpush2.bf16.msra.mxu0 %v607
      %677 = vmatprep.subr.bf16.mxu0 0
      %678 = vmatpush2.bf16.msra.mxu0 %v606
      %679 = vmatprep.subr.bf16.mxu0 0
      %680 = vmatpush2.bf16.msra.mxu0 %v605
      %681 = vmatprep.subr.bf16.mxu0 0
      %682 = vmatpush2.bf16.msra.mxu0 %v604
      %683 = vmatprep.subr.bf16.mxu0 0
      %684 = vmatpush2.bf16.msra.mxu0 %v603
      %685 = vmatprep.subr.bf16.mxu0 0
      %686 = vmatpush2.bf16.msra.mxu0 %v602
      %687 = vmatprep.subr.bf16.mxu0 0
      %688 = vmatpush2.bf16.msra.mxu0 %v601
      %689 = vmatprep.mubr.bf16.mxu0 %v391
      %690 = vmatmul.mubr.bf16.gmra.mxu0 %v390
      %v691 = vpop.f32.mrf.mxu0
      %v692 = vadd.f32 %v463, %v691
      %v693 = vpop.f32.mrf.mxu0
      %v694 = vpop.f32.mrf.mxu0
      %v695 = vadd.f32 %v463, %v694
      %v696 = vpop.f32.mrf.mxu0
      %697 = vdwg.mxu0
      %698 = vmatprep.subr.bf16.mxu0 0
      %699 = vmatpush1.bf16.msra.mxu0 %v616
      %700 = vmatprep.subr.bf16.mxu0 0
      %701 = vmatpush1.bf16.msra.mxu0 %v615
      %702 = vmatprep.subr.bf16.mxu0 0
      %703 = vmatpush1.bf16.msra.mxu0 %v614
      %704 = vmatprep.subr.bf16.mxu0 0
      %705 = vmatpush1.bf16.msra.mxu0 %v613
      %706 = vmatprep.subr.bf16.mxu0 0
      %707 = vmatpush1.bf16.msra.mxu0 %v612
      %708 = vmatprep.subr.bf16.mxu0 0
      %709 = vmatpush1.bf16.msra.mxu0 %v611
      %710 = vmatprep.subr.bf16.mxu0 0
      %711 = vmatpush1.bf16.msra.mxu0 %v610
      %712 = vmatprep.subr.bf16.mxu0 0
      %713 = vmatpush1.bf16.msra.mxu0 %v609
      %714 = vmatprep.subr.bf16.mxu0 0
      %715 = vmatpush2.bf16.msra.mxu0 %v624
      %716 = vmatprep.subr.bf16.mxu0 0
      %717 = vmatpush2.bf16.msra.mxu0 %v623
      %718 = vmatprep.subr.bf16.mxu0 0
      %719 = vmatpush2.bf16.msra.mxu0 %v622
      %720 = vmatprep.subr.bf16.mxu0 0
      %721 = vmatpush2.bf16.msra.mxu0 %v621
      %722 = vmatprep.subr.bf16.mxu0 0
      %723 = vmatpush2.bf16.msra.mxu0 %v620
      %724 = vmatprep.subr.bf16.mxu0 0
      %725 = vmatpush2.bf16.msra.mxu0 %v619
      %726 = vmatprep.subr.bf16.mxu0 0
      %727 = vmatpush2.bf16.msra.mxu0 %v618
      %728 = vmatprep.subr.bf16.mxu0 0
      %729 = vmatpush2.bf16.msra.mxu0 %v617
      %730 = vmatprep.mubr.bf16.mxu0 %v393
      %731 = vmatmul.mubr.bf16.gmra.mxu0 %v392
      %v732 = vpop.f32.mrf.mxu0
      %v733 = vadd.f32 %v692, %v732
      %v734 = vpop.f32.mrf.mxu0
      %v735 = vpop.f32.mrf.mxu0
      %v736 = vadd.f32 %v695, %v735
      %v737 = vpop.f32.mrf.mxu0
      %738 = vdwg.mxu0
      %v739 = vlaneseq
      %v740 = vand.u32 %v739, 127
      %vm741 = vcmask 31744
      %v742 = vsel %vm741, %v733, -inf
      %743 = vmax.xlane.f32.xlu0 %v742
      %v744 = vpop.xlane.xlu0 %743
      %v745 = vsel %vm741, %v736, -inf
      %746 = vmax.xlane.f32.xlu0 %v745
      %v747 = vpop.xlane.xlu0 %746
      %vm748 = vcmp.ge.f32.partialorder %v733, %v744
      %vm749 = vcmp.ge.f32.partialorder %v736, %v747
      %v750 = vsel %vm748, %v740, 4
      %v751 = vsel %vm749, %v740, 4
      %v752 = vsel %vm741, %v750, 2147483647
      %v753 = vand.u32 %v752, 65535
      %v754 = vshra.s32 %v752, 16
      %v755 = vcvt.s32.f32 %v753
      %v756 = vcvt.s32.f32 %v754
      %757 = vmin.xlane.f32.xlu0 %v756
      %v758 = vpop.xlane.xlu0 %757
      %vm759 = vcmp.eq.f32.partialorder %v756, %v758
      %v760 = vsel %vm759, %v755, inf
      %761 = vmin.xlane.f32.xlu0 %v760
      %v762 = vpop.xlane.xlu0 %761
      %v763 = vcvt.f32.s32 %v762
      %v764 = vcvt.f32.s32 %v758
      %v765 = vshll.u32 %v764, 16
      %v766 = vadd.s32 %v765, %v763
      %v767 = vsel %vm741, %v751, 2147483647
      %v768 = vand.u32 %v767, 65535
      %v769 = vshra.s32 %v767, 16
      %v770 = vcvt.s32.f32 %v768
      %v771 = vcvt.s32.f32 %v769
      %772 = vmin.xlane.f32.xlu0 %v771
      %v773 = vpop.xlane.xlu0 %772
      %vm774 = vcmp.eq.f32.partialorder %v771, %v773
      %v775 = vsel %vm774, %v770, inf
      %776 = vmin.xlane.f32.xlu0 %v775
      %v777 = vpop.xlane.xlu0 %776
      %v778 = vcvt.f32.s32 %v777
      %v779 = vcvt.f32.s32 %v773
      %v780 = vshll.u32 %v779, 16
      %v781 = vadd.s32 %v780, %v778
      %vm782 = vcmask 7168
      %783 = vst.msk [vmem:[#allocation2] sm:$0xff] %vm782, %v766
      %784 = vst.msk [vmem:[#allocation2 + $0x8] sm:$0xff] %vm782, %v781
      %785 = vst [vmem:[#allocation3] sm:$0xff] 0.0
      %786 = vst [vmem:[#allocation3 + $0x8] sm:$0xff] 0.0
    $region53: #{tpu_custom_call.1} parent=1 // pred_fallthru
      _
    %v787 = vld [vmem:[#allocation2] sm:$0xff]
    %v788 = vld [vmem:[#allocation2 + $0x8] sm:$0xff]
    %v789 = vld [vmem:[#allocation7] sm:$0xff]
    %v790 = vld [vmem:[#allocation7 + $0x8] sm:$0xff]
    %v791 = vld [vmem:[#allocation7 + $0x10] sm:$0xff]
    %v792 = vld [vmem:[#allocation7 + $0x18] sm:$0xff]
    %v793 = vld [vmem:[#allocation7 + $0x20] sm:$0xff]
    %v794 = vld [vmem:[#allocation7 + $0x28] sm:$0xff]
    %v795 = vld [vmem:[#allocation7 + $0x30] sm:$0xff]
    %v796 = vld [vmem:[#allocation7 + $0x38] sm:$0xff]
    %v797 = vld [vmem:[#allocation7 + $0x40] sm:$0xff]
    %v798 = vld [vmem:[#allocation7 + $0x48] sm:$0xff]
    %v799 = vld [vmem:[#allocation7 + $0x50] sm:$0xff]
    %v800 = vld [vmem:[#allocation7 + $0x58] sm:$0xff]
    %v801 = vld [vmem:[#allocation7 + $0x60] sm:$0xff]
    %v802 = vld [vmem:[#allocation7 + $0x68] sm:$0xff]
    %v803 = vld [vmem:[#allocation7 + $0x70] sm:$0xff]
    %v804 = vld [vmem:[#allocation7 + $0x78] sm:$0xff]
    %v805 = vld [vmem:[#allocation7 + $0x80] sm:$0xff]
    %v806 = vld [vmem:[#allocation7 + $0x88] sm:$0xff]
    %v807 = vld [vmem:[#allocation7 + $0x90] sm:$0xff]
    %v808 = vld [vmem:[#allocation7 + $0x98] sm:$0xff]
    %v809 = vld [vmem:[#allocation7 + $0xa0] sm:$0xff]
    %v810 = vld [vmem:[#allocation7 + $0xa8] sm:$0xff]
    %v811 = vld [vmem:[#allocation7 + $0xb0] sm:$0xff]
    %v812 = vld [vmem:[#allocation7 + $0xb8] sm:$0xff]
    %v813 = vld [vmem:[#allocation7 + $0xc0] sm:$0xff]
    %v814 = vld [vmem:[#allocation7 + $0xc8] sm:$0xff]
    %v815 = vld [vmem:[#allocation7 + $0xd0] sm:$0xff]
    %v816 = vld [vmem:[#allocation7 + $0xd8] sm:$0xff]
    %v817 = vld [vmem:[#allocation7 + $0xe0] sm:$0xff]
    %v818 = vld [vmem:[#allocation7 + $0xe8] sm:$0xff]
    %v819 = vld [vmem:[#allocation7 + $0xf0] sm:$0xff]
    %v820 = vld [vmem:[#allocation7 + $0xf8] sm:$0xff]
    %v821 = vld [vmem:[%s6] sm:$0xf]
    %v823 = vlaneseq
    %v824 = vshrl.u32 %v823, 7
    %v825 = vsub.s32 0, %v824
    %v826 = vrot.slane %v821, %v825
    %v827 = vlaneseq
    %v828 = vshrl.u32 %v827, 7
    %v829 = vsub.s32 1, %v828
    %v830 = vrot.slane %v821, %v829
    %v831 = vlaneseq
    %v832 = vshrl.u32 %v831, 7
    %v833 = vsub.s32 2, %v832
    %v834 = vrot.slane %v821, %v833
    %v835 = vlaneseq
    %v836 = vshrl.u32 %v835, 7
    %v837 = vsub.s32 3, %v836
    %v838 = vrot.slane %v821, %v837
    %v875 = vunpack.c.l.b16 %v789
    %v876 = vunpack.c.h.b16 %v789
    %v877 = vunpack.c.l.b16 %v790
    %v878 = vunpack.c.h.b16 %v790
    %v879 = vunpack.c.l.b16 %v791
    %v880 = vunpack.c.h.b16 %v791
    %v881 = vunpack.c.l.b16 %v792
    %v882 = vunpack.c.h.b16 %v792
    %v883 = vunpack.c.l.b16 %v793
    %v884 = vunpack.c.h.b16 %v793
    %v885 = vunpack.c.l.b16 %v794
    %v886 = vunpack.c.h.b16 %v794
    %v887 = vunpack.c.l.b16 %v795
    %v888 = vunpack.c.h.b16 %v795
    %v889 = vunpack.c.l.b16 %v796
    %v890 = vunpack.c.h.b16 %v796
    %v891 = vunpack.c.l.b16 %v797
    %v892 = vunpack.c.h.b16 %v797
    %v893 = vunpack.c.l.b16 %v798
    %v894 = vunpack.c.h.b16 %v798
    %v895 = vunpack.c.l.b16 %v799
    %v896 = vunpack.c.h.b16 %v799
    %v897 = vunpack.c.l.b16 %v800
    %v898 = vunpack.c.h.b16 %v800
    %v899 = vunpack.c.l.b16 %v801
    %v900 = vunpack.c.h.b16 %v801
    %v901 = vunpack.c.l.b16 %v802
    %v902 = vunpack.c.h.b16 %v802
    %v903 = vunpack.c.l.b16 %v803
    %v904 = vunpack.c.h.b16 %v803
    %v905 = vunpack.c.l.b16 %v804
    %v906 = vunpack.c.h.b16 %v804
    %v907 = vunpack.c.l.b16 %v805
    %v908 = vunpack.c.h.b16 %v805
    %v909 = vunpack.c.l.b16 %v806
    %v910 = vunpack.c.h.b16 %v806
    %v911 = vunpack.c.l.b16 %v807
    %v912 = vunpack.c.h.b16 %v807
    %v913 = vunpack.c.l.b16 %v808
    %v914 = vunpack.c.h.b16 %v808
    %v915 = vunpack.c.l.b16 %v809
    %v916 = vunpack.c.h.b16 %v809
    %v917 = vunpack.c.l.b16 %v810
    %v918 = vunpack.c.h.b16 %v810
    %v919 = vunpack.c.l.b16 %v811
    %v920 = vunpack.c.h.b16 %v811
    %v921 = vunpack.c.l.b16 %v812
    %v922 = vunpack.c.h.b16 %v812
    %v923 = vunpack.c.l.b16 %v813
    %v924 = vunpack.c.h.b16 %v813
    %v925 = vunpack.c.l.b16 %v814
    %v926 = vunpack.c.h.b16 %v814
    %v927 = vunpack.c.l.b16 %v815
    %v928 = vunpack.c.h.b16 %v815
    %v929 = vunpack.c.l.b16 %v816
    %v930 = vunpack.c.h.b16 %v816
    %v931 = vunpack.c.l.b16 %v817
    %v932 = vunpack.c.h.b16 %v817
    %v933 = vunpack.c.l.b16 %v818
    %v934 = vunpack.c.h.b16 %v818
    %v935 = vunpack.c.l.b16 %v819
    %v936 = vunpack.c.h.b16 %v819
    %v937 = vunpack.c.l.b16 %v820
    %v938 = vunpack.c.h.b16 %v820
    %v939 = vpack.c.b16 %v879, %v875
    %v940 = vpack.c.b16 %v880, %v876
    %v941 = vpack.c.b16 %v881, %v877
    %v942 = vpack.c.b16 %v882, %v878
    %v943 = vpack.c.b16 %v887, %v883
    %v944 = vpack.c.b16 %v888, %v884
    %v945 = vpack.c.b16 %v889, %v885
    %v946 = vpack.c.b16 %v890, %v886
    %v947 = vpack.c.b16 %v895, %v891
    %v948 = vpack.c.b16 %v896, %v892
    %v949 = vpack.c.b16 %v897, %v893
    %v950 = vpack.c.b16 %v898, %v894
    %v951 = vpack.c.b16 %v903, %v899
    %v952 = vpack.c.b16 %v904, %v900
    %v953 = vpack.c.b16 %v905, %v901
    %v954 = vpack.c.b16 %v906, %v902
    %v955 = vpack.c.b16 %v911, %v907
    %v956 = vpack.c.b16 %v912, %v908
    %v957 = vpack.c.b16 %v913, %v909
    %v958 = vpack.c.b16 %v914, %v910
    %v959 = vpack.c.b16 %v919, %v915
    %v960 = vpack.c.b16 %v920, %v916
    %v961 = vpack.c.b16 %v921, %v917
    %v962 = vpack.c.b16 %v922, %v918
    %v963 = vpack.c.b16 %v927, %v923
    %v964 = vpack.c.b16 %v928, %v924
    %v965 = vpack.c.b16 %v929, %v925
    %v966 = vpack.c.b16 %v930, %v926
    %v967 = vpack.c.b16 %v935, %v931
    %v968 = vpack.c.b16 %v936, %v932
    %v969 = vpack.c.b16 %v937, %v933
    %v970 = vpack.c.b16 %v938, %v934
    %1003 = vmatprep.subr.bf16.mxu0 %v968
    %1004 = vmatpush1.bf16.msra.mxu0 %v967
    %1005 = vmatprep.subr.bf16.mxu0 %v964
    %1006 = vmatpush1.bf16.msra.mxu0 %v963
    %1007 = vmatprep.subr.bf16.mxu0 %v960
    %1008 = vmatpush1.bf16.msra.mxu0 %v959
    %1009 = vmatprep.subr.bf16.mxu0 %v956
    %1010 = vmatpush1.bf16.msra.mxu0 %v955
    %1011 = vmatprep.subr.bf16.mxu0 %v952
    %1012 = vmatpush1.bf16.msra.mxu0 %v951
    %1013 = vmatprep.subr.bf16.mxu0 %v948
    %1014 = vmatpush1.bf16.msra.mxu0 %v947
    %1015 = vmatprep.subr.bf16.mxu0 %v944
    %1016 = vmatpush1.bf16.msra.mxu0 %v943
    %1017 = vmatprep.subr.bf16.mxu0 %v940
    %1018 = vmatpush1.bf16.msra.mxu0 %v939
    %1019 = vmatprep.subr.bf16.mxu0 0
    %1020 = vmatpush2.bf16.msra.mxu0 0
    %1021 = vmatprep.subr.bf16.mxu0 0
    %1022 = vmatpush2.bf16.msra.mxu0 0
    %1023 = vmatprep.subr.bf16.mxu0 0
    %1024 = vmatpush2.bf16.msra.mxu0 0
    %1025 = vmatprep.subr.bf16.mxu0 0
    %1026 = vmatpush2.bf16.msra.mxu0 0
    %1027 = vmatprep.subr.bf16.mxu0 0
    %1028 = vmatpush2.bf16.msra.mxu0 0
    %1029 = vmatprep.subr.bf16.mxu0 0
    %1030 = vmatpush2.bf16.msra.mxu0 0
    %1031 = vmatprep.subr.bf16.mxu0 0
    %1032 = vmatpush2.bf16.msra.mxu0 0
    %1033 = vmatprep.subr.bf16.mxu0 0
    %1034 = vmatpush2.bf16.msra.mxu0 0
    %1035 = vmatprep.mubr.bf16.mxu0 0
    %1036 = vmatmul.mubr.bf16.gmra.mxu0 %v77
    %v1037 = vpop.f32.mrf.mxu0
    %v1038 = vadd.f32 %v826, %v1037
    %v1039 = vpop.f32.mrf.mxu0
    %v1040 = vadd.f32 %v830, %v1039
    %v1041 = vpop.f32.mrf.mxu0
    %v1042 = vadd.f32 %v826, %v1041
    %v1043 = vpop.f32.mrf.mxu0
    %v1044 = vadd.f32 %v830, %v1043
    %1045 = vdwg.mxu0
    %1046 = vmatprep.subr.bf16.mxu0 %v970
    %1047 = vmatpush1.bf16.msra.mxu0 %v969
    %1048 = vmatprep.subr.bf16.mxu0 %v966
    %1049 = vmatpush1.bf16.msra.mxu0 %v965
    %1050 = vmatprep.subr.bf16.mxu0 %v962
    %1051 = vmatpush1.bf16.msra.mxu0 %v961
    %1052 = vmatprep.subr.bf16.mxu0 %v958
    %1053 = vmatpush1.bf16.msra.mxu0 %v957
    %1054 = vmatprep.subr.bf16.mxu0 %v954
    %1055 = vmatpush1.bf16.msra.mxu0 %v953
    %1056 = vmatprep.subr.bf16.mxu0 %v950
    %1057 = vmatpush1.bf16.msra.mxu0 %v949
    %1058 = vmatprep.subr.bf16.mxu0 %v946
    %1059 = vmatpush1.bf16.msra.mxu0 %v945
    %1060 = vmatprep.subr.bf16.mxu0 %v942
    %1061 = vmatpush1.bf16.msra.mxu0 %v941
    %1062 = vmatprep.subr.bf16.mxu0 0
    %1063 = vmatpush2.bf16.msra.mxu0 0
    %1064 = vmatprep.subr.bf16.mxu0 0
    %1065 = vmatpush2.bf16.msra.mxu0 0
    %1066 = vmatprep.subr.bf16.mxu0 0
    %1067 = vmatpush2.bf16.msra.mxu0 0
    %1068 = vmatprep.subr.bf16.mxu0 0
    %1069 = vmatpush2.bf16.msra.mxu0 0
    %1070 = vmatprep.subr.bf16.mxu0 0
    %1071 = vmatpush2.bf16.msra.mxu0 0
    %1072 = vmatprep.subr.bf16.mxu0 0
    %1073 = vmatpush2.bf16.msra.mxu0 0
    %1074 = vmatprep.subr.bf16.mxu0 0
    %1075 = vmatpush2.bf16.msra.mxu0 0
    %1076 = vmatprep.subr.bf16.mxu0 0
    %1077 = vmatpush2.bf16.msra.mxu0 0
    %1078 = vmatprep.mubr.bf16.mxu0 0
    %1079 = vmatmul.mubr.bf16.gmra.mxu0 %v77
    %v1080 = vpop.f32.mrf.mxu0
    %v1081 = vadd.f32 %v834, %v1080
    %v1082 = vpop.f32.mrf.mxu0
    %v1083 = vadd.f32 %v838, %v1082
    %v1084 = vpop.f32.mrf.mxu0
    %v1085 = vadd.f32 %v834, %v1084
    %v1086 = vpop.f32.mrf.mxu0
    %v1087 = vadd.f32 %v838, %v1086
    %1088 = vdwg.mxu0
    %v1089 = vmax.f32 %v1038, 0.0
    %v1090 = vmax.f32 %v1040, 0.0
    %v1091 = vmax.f32 %v1081, 0.0
    %v1092 = vmax.f32 %v1083, 0.0
    %v1093 = vmax.f32 %v1042, 0.0
    %v1094 = vmax.f32 %v1044, 0.0
    %v1095 = vmax.f32 %v1085, 0.0
    %v1096 = vmax.f32 %v1087, 0.0
    %v1097 = vpack.c.bf16 %v1093, %v1089
    %v1098 = vpack.c.bf16 %v1094, %v1090
    %v1099 = vpack.c.bf16 %v1095, %v1091
    %v1100 = vpack.c.bf16 %v1096, %v1092
    %v1101 = vlaneseq
    %v1102 = vand.u32 %v1101, 127
    %v1103 = vadd.s32 %v1102, 128
    %v1104 = vadd.s32 %v1102, 256
    %v1105 = vadd.s32 %v1102, 384
    %s1106 = smul.u32 0, 512
    %v1107 = vstv %s1106
    %v1108 = vadd.s32 %v1102, %v1107
    %v1109 = vadd.s32 %v1103, %v1107
    %v1110 = vadd.s32 %v1104, %v1107
    %v1111 = vadd.s32 %v1105, %v1107
    %v1112 = vmul.u32 %v787, 128
    %v1113 = vmul.u32 %v788, 128
    %1114 = vset.pattern.permute.xlu0 0
    %1115 = vperm.xlu0 %1114, %v1112
    %v1116 = vpop.permute.xlu0 %1115
    %1117 = vset.pattern.permute.xlu0 0
    %1118 = vperm.xlu0 %1117, %v1113
    %v1119 = vpop.permute.xlu0 %1118
    %v1120 = vsub.s32 %v1108, %v1116
    %v1121 = vsub.s32 %v1109, %v1116
    %v1122 = vsub.s32 %v1110, %v1116
    %v1123 = vsub.s32 %v1111, %v1116
    %v1124 = vsub.s32 %v1108, %v1119
    %v1125 = vsub.s32 %v1109, %v1119
    %v1126 = vsub.s32 %v1110, %v1119
    %v1127 = vsub.s32 %v1111, %v1119
    %vm1128 = vcmp.ge.s32.totalorder %v1120, 0
    %vm1129 = vcmp.ge.s32.totalorder %v1121, 0
    %vm1130 = vcmp.ge.s32.totalorder %v1122, 0
    %vm1131 = vcmp.ge.s32.totalorder %v1123, 0
    %vm1132 = vcmp.ge.s32.totalorder %v1124, 0
    %vm1133 = vcmp.ge.s32.totalorder %v1125, 0
    %vm1134 = vcmp.ge.s32.totalorder %v1126, 0
    %vm1135 = vcmp.ge.s32.totalorder %v1127, 0
    %vm1136 = vcmp.lt.s32.totalorder %v1120, 128
    %vm1137 = vcmp.lt.s32.totalorder %v1121, 128
    %vm1138 = vcmp.lt.s32.totalorder %v1122, 128
    %vm1139 = vcmp.lt.s32.totalorder %v1123, 128
    %vm1140 = vcmp.lt.s32.totalorder %v1124, 128
    %vm1141 = vcmp.lt.s32.totalorder %v1125, 128
    %vm1142 = vcmp.lt.s32.totalorder %v1126, 128
    %vm1143 = vcmp.lt.s32.totalorder %v1127, 128
    %vm1144 = vmand %vm1128, %vm1136
    %vm1145 = vmand %vm1129, %vm1137
    %vm1146 = vmand %vm1130, %vm1138
    %vm1147 = vmand %vm1131, %vm1139
    %vm1148 = vmand %vm1132, %vm1140
    %vm1149 = vmand %vm1133, %vm1141
    %vm1150 = vmand %vm1134, %vm1142
    %vm1151 = vmand %vm1135, %vm1143
    %vm1152 = vmpackc.low %vm1148, %vm1144
    %vm1153 = vmpackc.low %vm1149, %vm1145
    %vm1154 = vmpackc.low %vm1150, %vm1146
    %vm1155 = vmpackc.low %vm1151, %vm1147
    %v1156 = vsel %vm1152, %v1097, 0
    %v1157 = vsel %vm1153, %v1098, 0
    %v1158 = vsel %vm1154, %v1099, 0
    %v1159 = vsel %vm1155, %v1100, 0
    %v1160 = vld [vmem:[#allocation3] sm:$0xff]
    %v1161 = vld [vmem:[#allocation3 + $0x8] sm:$0xff]
    %v1162 = vld [vmem:[#allocation9] sm:$0xf]
    %v1163 = vld [vmem:[#allocation9 + $0x4] sm:$0xf]
    %v1164 = vld [vmem:[#allocation9 + $0x8] sm:$0xf]
    %v1165 = vld [vmem:[#allocation9 + $0xc] sm:$0xf]
    %v1166 = vld [vmem:[#allocation9 + $0x10] sm:$0xf]
    %v1167 = vld [vmem:[#allocation9 + $0x14] sm:$0xf]
    %v1168 = vld [vmem:[#allocation9 + $0x18] sm:$0xf]
    %v1169 = vld [vmem:[#allocation9 + $0x1c] sm:$0xf]
    %v1170 = vld [vmem:[#allocation9 + $0x20] sm:$0xf]
    %v1171 = vld [vmem:[#allocation9 + $0x24] sm:$0xf]
    %v1172 = vld [vmem:[#allocation9 + $0x28] sm:$0xf]
    %v1173 = vld [vmem:[#allocation9 + $0x2c] sm:$0xf]
    %v1174 = vld [vmem:[#allocation9 + $0x30] sm:$0xf]
    %v1175 = vld [vmem:[#allocation9 + $0x34] sm:$0xf]
    %v1176 = vld [vmem:[#allocation9 + $0x38] sm:$0xf]
    %v1177 = vld [vmem:[#allocation9 + $0x3c] sm:$0xf]
    %v1178 = vld [vmem:[#allocation9 + $0x40] sm:$0xf]
    %v1179 = vld [vmem:[#allocation9 + $0x44] sm:$0xf]
    %v1180 = vld [vmem:[#allocation9 + $0x48] sm:$0xf]
    %v1181 = vld [vmem:[#allocation9 + $0x4c] sm:$0xf]
    %v1182 = vld [vmem:[#allocation9 + $0x50] sm:$0xf]
    %v1183 = vld [vmem:[#allocation9 + $0x54] sm:$0xf]
    %v1184 = vld [vmem:[#allocation9 + $0x58] sm:$0xf]
    %v1185 = vld [vmem:[#allocation9 + $0x5c] sm:$0xf]
    %v1186 = vld [vmem:[#allocation9 + $0x60] sm:$0xf]
    %v1187 = vld [vmem:[#allocation9 + $0x64] sm:$0xf]
    %v1188 = vld [vmem:[#allocation9 + $0x68] sm:$0xf]
    %v1189 = vld [vmem:[#allocation9 + $0x6c] sm:$0xf]
    %v1190 = vld [vmem:[#allocation9 + $0x70] sm:$0xf]
    %v1191 = vld [vmem:[#allocation9 + $0x74] sm:$0xf]
    %v1192 = vld [vmem:[#allocation9 + $0x78] sm:$0xf]
    %v1193 = vld [vmem:[#allocation9 + $0x7c] sm:$0xf]
    %v1194 = vld [vmem:[#allocation9 + $0x80] sm:$0xf]
    %v1195 = vld [vmem:[#allocation9 + $0x84] sm:$0xf]
    %v1196 = vld [vmem:[#allocation9 + $0x88] sm:$0xf]
    %v1197 = vld [vmem:[#allocation9 + $0x8c] sm:$0xf]
    %v1198 = vld [vmem:[#allocation9 + $0x90] sm:$0xf]
    %v1199 = vld [vmem:[#allocation9 + $0x94] sm:$0xf]
    %v1200 = vld [vmem:[#allocation9 + $0x98] sm:$0xf]
    %v1201 = vld [vmem:[#allocation9 + $0x9c] sm:$0xf]
    %v1202 = vld [vmem:[#allocation9 + $0xa0] sm:$0xf]
    %v1203 = vld [vmem:[#allocation9 + $0xa4] sm:$0xf]
    %v1204 = vld [vmem:[#allocation9 + $0xa8] sm:$0xf]
    %v1205 = vld [vmem:[#allocation9 + $0xac] sm:$0xf]
    %v1206 = vld [vmem:[#allocation9 + $0xb0] sm:$0xf]
    %v1207 = vld [vmem:[#allocation9 + $0xb4] sm:$0xf]
    %v1208 = vld [vmem:[#allocation9 + $0xb8] sm:$0xf]
    %v1209 = vld [vmem:[#allocation9 + $0xbc] sm:$0xf]
    %v1210 = vld [vmem:[#allocation9 + $0xc0] sm:$0xf]
    %v1211 = vld [vmem:[#allocation9 + $0xc4] sm:$0xf]
    %v1212 = vld [vmem:[#allocation9 + $0xc8] sm:$0xf]
    %v1213 = vld [vmem:[#allocation9 + $0xcc] sm:$0xf]
    %v1214 = vld [vmem:[#allocation9 + $0xd0] sm:$0xf]
    %v1215 = vld [vmem:[#allocation9 + $0xd4] sm:$0xf]
    %v1216 = vld [vmem:[#allocation9 + $0xd8] sm:$0xf]
    %v1217 = vld [vmem:[#allocation9 + $0xdc] sm:$0xf]
    %v1218 = vld [vmem:[#allocation9 + $0xe0] sm:$0xf]
    %v1219 = vld [vmem:[#allocation9 + $0xe4] sm:$0xf]
    %v1220 = vld [vmem:[#allocation9 + $0xe8] sm:$0xf]
    %v1221 = vld [vmem:[#allocation9 + $0xec] sm:$0xf]
    %v1222 = vld [vmem:[#allocation9 + $0xf0] sm:$0xf]
    %v1223 = vld [vmem:[#allocation9 + $0xf4] sm:$0xf]
    %v1224 = vld [vmem:[#allocation9 + $0xf8] sm:$0xf]
    %v1225 = vld [vmem:[#allocation9 + $0xfc] sm:$0xf]
    %v1290 = vunpack.c.l.b16 %v1162
    %v1291 = vunpack.c.l.b16 %v1163
    %v1292 = vunpack.c.l.b16 %v1164
    %v1293 = vunpack.c.l.b16 %v1165
    %v1294 = vunpack.c.l.b16 %v1166
    %v1295 = vunpack.c.l.b16 %v1167
    %v1296 = vunpack.c.l.b16 %v1168
    %v1297 = vunpack.c.l.b16 %v1169
    %v1298 = vunpack.c.l.b16 %v1170
    %v1299 = vunpack.c.l.b16 %v1171
    %v1300 = vunpack.c.l.b16 %v1172
    %v1301 = vunpack.c.l.b16 %v1173
    %v1302 = vunpack.c.l.b16 %v1174
    %v1303 = vunpack.c.l.b16 %v1175
    %v1304 = vunpack.c.l.b16 %v1176
    %v1305 = vunpack.c.l.b16 %v1177
    %v1306 = vunpack.c.l.b16 %v1178
    %v1307 = vunpack.c.l.b16 %v1179
    %v1308 = vunpack.c.l.b16 %v1180
    %v1309 = vunpack.c.l.b16 %v1181
    %v1310 = vunpack.c.l.b16 %v1182
    %v1311 = vunpack.c.l.b16 %v1183
    %v1312 = vunpack.c.l.b16 %v1184
    %v1313 = vunpack.c.l.b16 %v1185
    %v1314 = vunpack.c.l.b16 %v1186
    %v1315 = vunpack.c.l.b16 %v1187
    %v1316 = vunpack.c.l.b16 %v1188
    %v1317 = vunpack.c.l.b16 %v1189
    %v1318 = vunpack.c.l.b16 %v1190
    %v1319 = vunpack.c.l.b16 %v1191
    %v1320 = vunpack.c.l.b16 %v1192
    %v1321 = vunpack.c.l.b16 %v1193
    %v1322 = vunpack.c.l.b16 %v1194
    %v1323 = vunpack.c.l.b16 %v1195
    %v1324 = vunpack.c.l.b16 %v1196
    %v1325 = vunpack.c.l.b16 %v1197
    %v1326 = vunpack.c.l.b16 %v1198
    %v1327 = vunpack.c.l.b16 %v1199
    %v1328 = vunpack.c.l.b16 %v1200
    %v1329 = vunpack.c.l.b16 %v1201
    %v1330 = vunpack.c.l.b16 %v1202
    %v1331 = vunpack.c.l.b16 %v1203
    %v1332 = vunpack.c.l.b16 %v1204
    %v1333 = vunpack.c.l.b16 %v1205
    %v1334 = vunpack.c.l.b16 %v1206
    %v1335 = vunpack.c.l.b16 %v1207
    %v1336 = vunpack.c.l.b16 %v1208
    %v1337 = vunpack.c.l.b16 %v1209
    %v1338 = vunpack.c.l.b16 %v1210
    %v1339 = vunpack.c.l.b16 %v1211
    %v1340 = vunpack.c.l.b16 %v1212
    %v1341 = vunpack.c.l.b16 %v1213
    %v1342 = vunpack.c.l.b16 %v1214
    %v1343 = vunpack.c.l.b16 %v1215
    %v1344 = vunpack.c.l.b16 %v1216
    %v1345 = vunpack.c.l.b16 %v1217
    %v1346 = vunpack.c.l.b16 %v1218
    %v1347 = vunpack.c.l.b16 %v1219
    %v1348 = vunpack.c.l.b16 %v1220
    %v1349 = vunpack.c.l.b16 %v1221
    %v1350 = vunpack.c.l.b16 %v1222
    %v1351 = vunpack.c.l.b16 %v1223
    %v1352 = vunpack.c.l.b16 %v1224
    %v1353 = vunpack.c.l.b16 %v1225
    %v1354 = vpack.c.b16 %v1291, %v1290
    %v1355 = vpack.c.b16 %v1293, %v1292
    %v1356 = vpack.c.b16 %v1295, %v1294
    %v1357 = vpack.c.b16 %v1297, %v1296
    %v1358 = vpack.c.b16 %v1299, %v1298
    %v1359 = vpack.c.b16 %v1301, %v1300
    %v1360 = vpack.c.b16 %v1303, %v1302
    %v1361 = vpack.c.b16 %v1305, %v1304
    %v1362 = vpack.c.b16 %v1307, %v1306
    %v1363 = vpack.c.b16 %v1309, %v1308
    %v1364 = vpack.c.b16 %v1311, %v1310
    %v1365 = vpack.c.b16 %v1313, %v1312
    %v1366 = vpack.c.b16 %v1315, %v1314
    %v1367 = vpack.c.b16 %v1317, %v1316
    %v1368 = vpack.c.b16 %v1319, %v1318
    %v1369 = vpack.c.b16 %v1321, %v1320
    %v1370 = vpack.c.b16 %v1323, %v1322
    %v1371 = vpack.c.b16 %v1325, %v1324
    %v1372 = vpack.c.b16 %v1327, %v1326
    %v1373 = vpack.c.b16 %v1329, %v1328
    %v1374 = vpack.c.b16 %v1331, %v1330
    %v1375 = vpack.c.b16 %v1333, %v1332
    %v1376 = vpack.c.b16 %v1335, %v1334
    %v1377 = vpack.c.b16 %v1337, %v1336
    %v1378 = vpack.c.b16 %v1339, %v1338
    %v1379 = vpack.c.b16 %v1341, %v1340
    %v1380 = vpack.c.b16 %v1343, %v1342
    %v1381 = vpack.c.b16 %v1345, %v1344
    %v1382 = vpack.c.b16 %v1347, %v1346
    %v1383 = vpack.c.b16 %v1349, %v1348
    %v1384 = vpack.c.b16 %v1351, %v1350
    %v1385 = vpack.c.b16 %v1353, %v1352
    %1418 = vmatprep.subr.bf16.mxu0 0
    %1419 = vmatpush1.bf16.msra.mxu0 %v1361
    %1420 = vmatprep.subr.bf16.mxu0 0
    %1421 = vmatpush1.bf16.msra.mxu0 %v1360
    %1422 = vmatprep.subr.bf16.mxu0 0
    %1423 = vmatpush1.bf16.msra.mxu0 %v1359
    %1424 = vmatprep.subr.bf16.mxu0 0
    %1425 = vmatpush1.bf16.msra.mxu0 %v1358
    %1426 = vmatprep.subr.bf16.mxu0 0
    %1427 = vmatpush1.bf16.msra.mxu0 %v1357
    %1428 = vmatprep.subr.bf16.mxu0 0
    %1429 = vmatpush1.bf16.msra.mxu0 %v1356
    %1430 = vmatprep.subr.bf16.mxu0 0
    %1431 = vmatpush1.bf16.msra.mxu0 %v1355
    %1432 = vmatprep.subr.bf16.mxu0 0
    %1433 = vmatpush1.bf16.msra.mxu0 %v1354
    %1434 = vmatprep.subr.bf16.mxu0 0
    %1435 = vmatpush2.bf16.msra.mxu0 %v1369
    %1436 = vmatprep.subr.bf16.mxu0 0
    %1437 = vmatpush2.bf16.msra.mxu0 %v1368
    %1438 = vmatprep.subr.bf16.mxu0 0
    %1439 = vmatpush2.bf16.msra.mxu0 %v1367
    %1440 = vmatprep.subr.bf16.mxu0 0
    %1441 = vmatpush2.bf16.msra.mxu0 %v1366
    %1442 = vmatprep.subr.bf16.mxu0 0
    %1443 = vmatpush2.bf16.msra.mxu0 %v1365
    %1444 = vmatprep.subr.bf16.mxu0 0
    %1445 = vmatpush2.bf16.msra.mxu0 %v1364
    %1446 = vmatprep.subr.bf16.mxu0 0
    %1447 = vmatpush2.bf16.msra.mxu0 %v1363
    %1448 = vmatprep.subr.bf16.mxu0 0
    %1449 = vmatpush2.bf16.msra.mxu0 %v1362
    %1450 = vmatprep.mubr.bf16.mxu0 %v1157
    %1451 = vmatmul.mubr.bf16.gmra.mxu0 %v1156
    %v1452 = vpop.f32.mrf.mxu0
    %v1453 = vadd.f32 0.0, %v1452
    %v1454 = vpop.f32.mrf.mxu0
    %v1455 = vpop.f32.mrf.mxu0
    %v1456 = vadd.f32 0.0, %v1455
    %v1457 = vpop.f32.mrf.mxu0
    %1458 = vdwg.mxu0
    %1459 = vmatprep.subr.bf16.mxu0 0
    %1460 = vmatpush1.bf16.msra.mxu0 %v1377
    %1461 = vmatprep.subr.bf16.mxu0 0
    %1462 = vmatpush1.bf16.msra.mxu0 %v1376
    %1463 = vmatprep.subr.bf16.mxu0 0
    %1464 = vmatpush1.bf16.msra.mxu0 %v1375
    %1465 = vmatprep.subr.bf16.mxu0 0
    %1466 = vmatpush1.bf16.msra.mxu0 %v1374
    %1467 = vmatprep.subr.bf16.mxu0 0
    %1468 = vmatpush1.bf16.msra.mxu0 %v1373
    %1469 = vmatprep.subr.bf16.mxu0 0
    %1470 = vmatpush1.bf16.msra.mxu0 %v1372
    %1471 = vmatprep.subr.bf16.mxu0 0
    %1472 = vmatpush1.bf16.msra.mxu0 %v1371
    %1473 = vmatprep.subr.bf16.mxu0 0
    %1474 = vmatpush1.bf16.msra.mxu0 %v1370
    %1475 = vmatprep.subr.bf16.mxu0 0
    %1476 = vmatpush2.bf16.msra.mxu0 %v1385
    %1477 = vmatprep.subr.bf16.mxu0 0
    %1478 = vmatpush2.bf16.msra.mxu0 %v1384
    %1479 = vmatprep.subr.bf16.mxu0 0
    %1480 = vmatpush2.bf16.msra.mxu0 %v1383
    %1481 = vmatprep.subr.bf16.mxu0 0
    %1482 = vmatpush2.bf16.msra.mxu0 %v1382
    %1483 = vmatprep.subr.bf16.mxu0 0
    %1484 = vmatpush2.bf16.msra.mxu0 %v1381
    %1485 = vmatprep.subr.bf16.mxu0 0
    %1486 = vmatpush2.bf16.msra.mxu0 %v1380
    %1487 = vmatprep.subr.bf16.mxu0 0
    %1488 = vmatpush2.bf16.msra.mxu0 %v1379
    %1489 = vmatprep.subr.bf16.mxu0 0
    %1490 = vmatpush2.bf16.msra.mxu0 %v1378
    %1491 = vmatprep.mubr.bf16.mxu0 %v1159
    %1492 = vmatmul.mubr.bf16.gmra.mxu0 %v1158
    %v1493 = vpop.f32.mrf.mxu0
    %v1494 = vadd.f32 %v1453, %v1493
    %v1495 = vpop.f32.mrf.mxu0
    %v1496 = vpop.f32.mrf.mxu0
    %v1497 = vadd.f32 %v1456, %v1496
    %v1498 = vpop.f32.mrf.mxu0
    %1499 = vdwg.mxu0
    %v1500 = vadd.f32 %v1160, %v1494
    %v1501 = vadd.f32 %v1161, %v1497
    %1502 = vst [vmem:[#allocation3] sm:$0xff] %v1500
    %1503 = vst [vmem:[#allocation3 + $0x8] sm:$0xff] %v1501
    // Predicated region
    $region54: #{tpu_custom_call.1} parent=1 // pred_check
      %p1504 = pneg %p78
    $region55: #{tpu_custom_call.1} parent=1 // pred_check_branch
      %1506 = sbr.rel (%p1504) target = $region57
    $region56: #{tpu_custom_call.1} parent=1 // pred_region
      %v1507 = vld [vmem:[#allocation3] sm:$0xff]
      %v1508 = vld [vmem:[#allocation3 + $0x8] sm:$0xff]
      %v1509 = vpack.c.bf16 %v1508, %v1507
      %v1511 = vunpack.c.l.b16 %v1509
      %v1512 = vunpack.c.h.b16 %v1509
      %v1513 = vpack.c.b16 %v1511, %v1511
      %v1514 = vpack.c.b16 %v1512, %v1512
      %1517 = vst [vmem:[#allocation10] sm:$0xf] %v1513
      %1518 = vst [vmem:[#allocation10 + $0x4] sm:$0xf] %v1514
    $region57: #{tpu_custom_call.1} parent=1 // pred_fallthru
      _
    // Predicated region
    $region58: #{tpu_custom_call.1} parent=1 // pred_check
      _
    $region59: #{tpu_custom_call.1} parent=1 // pred_check_branch
      %1520 = sbr.rel (0) target = $region61
    $region60: #{tpu_custom_call.1} parent=1 // pred_region
      %s1522 = ssub.s32 128, 128
      %1523 = vsyncadd [#allocation6], %s1522
      %s1524 = sshll.u32 [#allocation10], 4
      %s1525 = int_to_ptr.vmem [resolvable:$true] %s1524
      %1530 = dma.vmem_to_hbm [thread:$0]  %s1525, 128, %s9, [#allocation6], 64, 64, 4
    $region61: #{tpu_custom_call.1} parent=1 // pred_fallthru
      _
    // Predicated region
    $region62: #{tpu_custom_call.1} parent=1 // pred_check
      _
    $region63: #{tpu_custom_call.1} parent=1 // pred_check_branch
      %1532 = sbr.rel (0) target = $region65
    $region64: #{tpu_custom_call.1} parent=1 // pred_region
      %1533 = dma.done [#allocation6], 128
    $region65: #{tpu_custom_call.1} parent=1 // pred_fallthru
      _
    %1534 = vsyncpa [#allocation5], 1
    %1535 = vsyncpa [#allocation8], 1
    %1536 = vsyncpa [#allocation6], 1

// kernel: tpu_custom_call.1
$region0: #{tpu_custom_call.1}
  #allocation0 [shape = 'u32[]', space=smem, size = 0x4, offset = 0x4, fixed_abs, tag = 'smem constant byte address 0x4 - core index']
  #allocation1 [shape = 'u32[144,128]{1,0:T(1,128)}', space=vmem, size = 0x12000, scoped, tag = 'internal scratch']
  #allocation2 [shape = 's32[16,1]{1,0:T(8,128)}', space=vmem, size = 0x2000, scoped, tag = 'scratch operand']
  #allocation3 [shape = 'f32[16,128]{1,0:T(8,128)}', space=vmem, size = 0x2000, scoped, tag = 'scratch operand']
  %s0 = inlined_call_operand.hbm [shape: f32[16,128], index: 0, kind: input, shape index: {}]
  %s1 = inlined_call_operand.vmem [shape: bf16[128,512], index: 1, kind: input, shape index: {}]
  %s2 = inlined_call_operand.vmem [shape: f32[1,512], index: 2, kind: input, shape index: {}]
  %s3 = inlined_call_operand.vmem [shape: bf16[512,4], index: 3, kind: input, shape index: {}]
  %s4 = inlined_call_operand.vmem [shape: f32[1,4], index: 4, kind: input, shape index: {}]
  %s5 = inlined_call_operand.hbm [shape: bf16[128,512], index: 5, kind: input, shape index: {}]
  %s6 = inlined_call_operand.vmem [shape: f32[1,512], index: 6, kind: input, shape index: {}]
  %s7 = inlined_call_operand.hbm [shape: bf16[512,128], index: 7, kind: input, shape index: {}]
  %s8 = inlined_call_operand.vmem [shape: f32[4,128], index: 8, kind: input, shape index: {}]
  %s9 = inlined_call_operand.hbm [shape: bf16[16,128], index: 9, kind: output, shape index: {}]
  %s10 = sld [smem:[#allocation0]]
  $region66: #{tpu_custom_call.1} parent=0
    _
  %s12 = ssub.s32 1, %s10
  %s13 = scalar_select 0, %s12, %s10
  $region1: #{tpu_custom_call.1} parent=0
    #allocation4 [shape = 'u8[8192]{0}', space=vmem, size = 0x2000, scoped, tag = 'input window, operand 0, single buffered']
    #allocation5 [shape = 's32[1]{0}', space=sflag, size = 0x4, scoped, tag = 'scoped memory for tpu_custom_call.1']
    #allocation6 [shape = 's32[1]{0}', space=sflag, size = 0x4, scoped, tag = 'scoped memory for tpu_custom_call.1']
    #allocation7 [shape = 'u8[131072]{0}', space=vmem, size = 0x20000, scoped, tag = 'input window, operand 5, single buffered']
    #allocation8 [shape = 's32[1]{0}', space=sflag, size = 0x4, scoped, tag = 'scoped memory for tpu_custom_call.1']
    #allocation9 [shape = 'u8[131072]{0}', space=vmem, size = 0x20000, scoped, tag = 'input window, operand 7, single buffered']
    #allocation10 [shape = 'u8[4096]{0}', space=vmem, size = 0x1000, scoped, tag = 'output window, operand 0, single buffered']
    %14 = vsyncpa [#allocation5], 0
    %15 = vsyncpa [#allocation8], 0
    %16 = vsyncpa [#allocation6], 0
    // Predicated region
    $region2: #{tpu_custom_call.1} parent=1 // pred_check
      _
    $region3: #{tpu_custom_call.1} parent=1 // pred_check_branch
      %18 = sbr.rel (0) target = $region5
    $region4: #{tpu_custom_call.1} parent=1 // pred_region
      %s20 = ssub.s32 256, 256
      %21 = vsyncadd [#allocation5], %s20
      %s22 = sshll.u32 [#allocation4], 4
      %s23 = int_to_ptr.vmem [resolvable:$true] %s22
      %28 = dma.hbm_to_vmem [thread:$0]  %s0, 256, %s23, [#allocation5], 128, 128, 8
    $region5: #{tpu_custom_call.1} parent=1 // pred_fallthru
      _
    // Predicated region
    $region6: #{tpu_custom_call.1} parent=1 // pred_check
      _
    $region7: #{tpu_custom_call.1} parent=1 // pred_check_branch
      %30 = sbr.rel (0) target = $region9
    $region8: #{tpu_custom_call.1} parent=1 // pred_region
      _
    $region9: #{tpu_custom_call.1} parent=1 // pred_fallthru
      _
    // Predicated region
    $region10: #{tpu_custom_call.1} parent=1 // pred_check
      _
    $region11: #{tpu_custom_call.1} parent=1 // pred_check_branch
      %32 = sbr.rel (0) target = $region13
    $region12: #{tpu_custom_call.1} parent=1 // pred_region
      _
    $region13: #{tpu_custom_call.1} parent=1 // pred_fallthru
      _
    // Predicated region
    $region14: #{tpu_custom_call.1} parent=1 // pred_check
      _
    $region15: #{tpu_custom_call.1} parent=1 // pred_check_branch
      %34 = sbr.rel (0) target = $region17
    $region16: #{tpu_custom_call.1} parent=1 // pred_region
      _
    $region17: #{tpu_custom_call.1} parent=1 // pred_fallthru
      _
    // Predicated region
    $region18: #{tpu_custom_call.1} parent=1 // pred_check
      _
    $region19: #{tpu_custom_call.1} parent=1 // pred_check_branch
      %36 = sbr.rel (0) target = $region21
    $region20: #{tpu_custom_call.1} parent=1 // pred_region
      _
    $region21: #{tpu_custom_call.1} parent=1 // pred_fallthru
      _
    // Predicated region
    $region22: #{tpu_custom_call.1} parent=1 // pred_check
      _
    $region23: #{tpu_custom_call.1} parent=1 // pred_check_branch
      %38 = sbr.rel (0) target = $region25
    $region24: #{tpu_custom_call.1} parent=1 // pred_region
      %s40 = ssub.s32 4096, 4096
      %41 = vsyncadd [#allocation8], %s40
      %s42 = sshll.u32 [#allocation7], 4
      %s43 = int_to_ptr.vmem [resolvable:$true] %s42
      %48 = dma.hbm_to_vmem [thread:$0]  %s5, 4096, %s43, [#allocation8], 256, 256, 16
    $region25: #{tpu_custom_call.1} parent=1 // pred_fallthru
      _
    // Predicated region
    $region26: #{tpu_custom_call.1} parent=1 // pred_check
      _
    $region27: #{tpu_custom_call.1} parent=1 // pred_check_branch
      %50 = sbr.rel (0) target = $region29
    $region28: #{tpu_custom_call.1} parent=1 // pred_region
      _
    $region29: #{tpu_custom_call.1} parent=1 // pred_fallthru
      _
    // Predicated region
    $region30: #{tpu_custom_call.1} parent=1 // pred_check
      _
    $region31: #{tpu_custom_call.1} parent=1 // pred_check_branch
      %52 = sbr.rel (0) target = $region33
    $region32: #{tpu_custom_call.1} parent=1 // pred_region
      %s54 = ssub.s32 4096, 4096
      %55 = vsyncadd [#allocation8], %s54
      %s56 = sshll.u32 [#allocation9], 4
      %s57 = int_to_ptr.vmem [resolvable:$true] %s56
      %62 = dma.hbm_to_vmem [thread:$0]  %s7, 4096, %s57, [#allocation8], 64, 64, 4
    $region33: #{tpu_custom_call.1} parent=1 // pred_fallthru
      _
    // Predicated region
    $region34: #{tpu_custom_call.1} parent=1 // pred_check
      _
    $region35: #{tpu_custom_call.1} parent=1 // pred_check_branch
      %64 = sbr.rel (0) target = $region37
    $region36: #{tpu_custom_call.1} parent=1 // pred_region
      _
    $region37: #{tpu_custom_call.1} parent=1 // pred_fallthru
      _
    // Predicated region
    $region38: #{tpu_custom_call.1} parent=1 // pred_check
      _
    $region39: #{tpu_custom_call.1} parent=1 // pred_check_branch
      %66 = sbr.rel (0) target = $region41
    $region40: #{tpu_custom_call.1} parent=1 // pred_region
      %67 = dma.done [#allocation5], 256
    $region41: #{tpu_custom_call.1} parent=1 // pred_fallthru
      _
    // Predicated region
    $region42: #{tpu_custom_call.1} parent=1 // pred_check
      _
    $region43: #{tpu_custom_call.1} parent=1 // pred_check_branch
      %69 = sbr.rel (0) target = $region45
    $region44: #{tpu_custom_call.1} parent=1 // pred_region
      %70 = dma.done [#allocation8], 4096
    $region45: #{tpu_custom_call.1} parent=1 // pred_fallthru
      _
    // Predicated region
    $region46: #{tpu_custom_call.1} parent=1 // pred_check
      _
    $region47: #{tpu_custom_call.1} parent=1 // pred_check_branch
      %72 = sbr.rel (0) target = $region49
    $region48: #{tpu_custom_call.1} parent=1 // pred_region
      %73 = dma.done [#allocation8], 4096
    $region49: #{tpu_custom_call.1} parent=1 // pred_fallthru
      _
    %v75 = vld [vmem:[#allocation4] sm:$0xff]
    %v76 = vld [vmem:[#allocation4 + $0x8] sm:$0xff]
    %v77 = vpack.c.bf16 %v76, %v75
    %p78 = scmp.eq.s32.totalorder 0, 0
    // Predicated region
    $region50: #{tpu_custom_call.1} parent=1 // pred_check
      %p79 = pneg %p78
    $region51: #{tpu_custom_call.1} parent=1 // pred_check_branch
      %81 = sbr.rel (%p79) target = $region53
    $region52: #{tpu_custom_call.1} parent=1 // pred_region
      %v82 = vld [vmem:[%s1] sm:$0xff]
      %v83 = vld [vmem:[%s1 + $0x8] sm:$0xff]
      %v84 = vld [vmem:[%s1 + $0x10] sm:$0xff]
      %v85 = vld [vmem:[%s1 + $0x18] sm:$0xff]
      %v86 = vld [vmem:[%s1 + $0x20] sm:$0xff]
      %v87 = vld [vmem:[%s1 + $0x28] sm:$0xff]
      %v88 = vld [vmem:[%s1 + $0x30] sm:$0xff]
      %v89 = vld [vmem:[%s1 + $0x38] sm:$0xff]
      %v90 = vld [vmem:[%s1 + $0x40] sm:$0xff]
      %v91 = vld [vmem:[%s1 + $0x48] sm:$0xff]
      %v92 = vld [vmem:[%s1 + $0x50] sm:$0xff]
      %v93 = vld [vmem:[%s1 + $0x58] sm:$0xff]
      %v94 = vld [vmem:[%s1 + $0x60] sm:$0xff]
      %v95 = vld [vmem:[%s1 + $0x68] sm:$0xff]
      %v96 = vld [vmem:[%s1 + $0x70] sm:$0xff]
      %v97 = vld [vmem:[%s1 + $0x78] sm:$0xff]
      %v98 = vld [vmem:[%s1 + $0x80] sm:$0xff]
      %v99 = vld [vmem:[%s1 + $0x88] sm:$0xff]
      %v100 = vld [vmem:[%s1 + $0x90] sm:$0xff]
      %v101 = vld [vmem:[%s1 + $0x98] sm:$0xff]
      %v102 = vld [vmem:[%s1 + $0xa0] sm:$0xff]
      %v103 = vld [vmem:[%s1 + $0xa8] sm:$0xff]
      %v104 = vld [vmem:[%s1 + $0xb0] sm:$0xff]
      %v105 = vld [vmem:[%s1 + $0xb8] sm:$0xff]
      %v106 = vld [vmem:[%s1 + $0xc0] sm:$0xff]
      %v107 = vld [vmem:[%s1 + $0xc8] sm:$0xff]
      %v108 = vld [vmem:[%s1 + $0xd0] sm:$0xff]
      %v109 = vld [vmem:[%s1 + $0xd8] sm:$0xff]
      %v110 = vld [vmem:[%s1 + $0xe0] sm:$0xff]
      %v111 = vld [vmem:[%s1 + $0xe8] sm:$0xff]
      %v112 = vld [vmem:[%s1 + $0xf0] sm:$0xff]
      %v113 = vld [vmem:[%s1 + $0xf8] sm:$0xff]
      %v114 = vld [vmem:[%s2] sm:$0xf]
      %v116 = vlaneseq
      %v117 = vshrl.u32 %v116, 7
      %v118 = vsub.s32 0, %v117
      %v119 = vrot.slane %v114, %v118
      %v120 = vlaneseq
      %v121 = vshrl.u32 %v120, 7
      %v122 = vsub.s32 1, %v121
      %v123 = vrot.slane %v114, %v122
      %v124 = vlaneseq
      %v125 = vshrl.u32 %v124, 7
      %v126 = vsub.s32 2, %v125
      %v127 = vrot.slane %v114, %v126
      %v128 = vlaneseq
      %v129 = vshrl.u32 %v128, 7
      %v130 = vsub.s32 3, %v129
      %v131 = vrot.slane %v114, %v130
      %v168 = vunpack.c.l.b16 %v82
      %v169 = vunpack.c.h.b16 %v82
      %v170 = vunpack.c.l.b16 %v83
      %v171 = vunpack.c.h.b16 %v83
      %v172 = vunpack.c.l.b16 %v84
      %v173 = vunpack.c.h.b16 %v84
      %v174 = vunpack.c.l.b16 %v85
      %v175 = vunpack.c.h.b16 %v85
      %v176 = vunpack.c.l.b16 %v86
      %v177 = vunpack.c.h.b16 %v86
      %v178 = vunpack.c.l.b16 %v87
      %v179 = vunpack.c.h.b16 %v87
      %v180 = vunpack.c.l.b16 %v88
      %v181 = vunpack.c.h.b16 %v88
      %v182 = vunpack.c.l.b16 %v89
      %v183 = vunpack.c.h.b16 %v89
      %v184 = vunpack.c.l.b16 %v90
      %v185 = vunpack.c.h.b16 %v90
      %v186 = vunpack.c.l.b16 %v91
      %v187 = vunpack.c.h.b16 %v91
      %v188 = vunpack.c.l.b16 %v92
      %v189 = vunpack.c.h.b16 %v92
      %v190 = vunpack.c.l.b16 %v93
      %v191 = vunpack.c.h.b16 %v93
      %v192 = vunpack.c.l.b16 %v94
      %v193 = vunpack.c.h.b16 %v94
      %v194 = vunpack.c.l.b16 %v95
      %v195 = vunpack.c.h.b16 %v95
      %v196 = vunpack.c.l.b16 %v96
      %v197 = vunpack.c.h.b16 %v96
      %v198 = vunpack.c.l.b16 %v97
      %v199 = vunpack.c.h.b16 %v97
      %v200 = vunpack.c.l.b16 %v98
      %v201 = vunpack.c.h.b16 %v98
      %v202 = vunpack.c.l.b16 %v99
      %v203 = vunpack.c.h.b16 %v99
      %v204 = vunpack.c.l.b16 %v100
      %v205 = vunpack.c.h.b16 %v100
      %v206 = vunpack.c.l.b16 %v101
      %v207 = vunpack.c.h.b16 %v101
      %v208 = vunpack.c.l.b16 %v102
      %v209 = vunpack.c.h.b16 %v102
      %v210 = vunpack.c.l.b16 %v103
      %v211 = vunpack.c.h.b16 %v103
      %v212 = vunpack.c.l.b16 %v104
      %v213 = vunpack.c.h.b16 %v104
      %v214 = vunpack.c.l.b16 %v105
      %v215 = vunpack.c.h.b16 %v105
      %v216 = vunpack.c.l.b16 %v106
      %v217 = vunpack.c.h.b16 %v106
      %v218 = vunpack.c.l.b16 %v107
      %v219 = vunpack.c.h.b16 %v107
      %v220 = vunpack.c.l.b16 %v108
      %v221 = vunpack.c.h.b16 %v108
      %v222 = vunpack.c.l.b16 %v109
      %v223 = vunpack.c.h.b16 %v109
      %v224 = vunpack.c.l.b16 %v110
      %v225 = vunpack.c.h.b16 %v110
      %v226 = vunpack.c.l.b16 %v111
      %v227 = vunpack.c.h.b16 %v111
      %v228 = vunpack.c.l.b16 %v112
      %v229 = vunpack.c.h.b16 %v112
      %v230 = vunpack.c.l.b16 %v113
      %v231 = vunpack.c.h.b16 %v113
      %v232 = vpack.c.b16 %v172, %v168
      %v233 = vpack.c.b16 %v173, %v169
      %v234 = vpack.c.b16 %v174, %v170
      %v235 = vpack.c.b16 %v175, %v171
      %v236 = vpack.c.b16 %v180, %v176
      %v237 = vpack.c.b16 %v181, %v177
      %v238 = vpack.c.b16 %v182, %v178
      %v239 = vpack.c.b16 %v183, %v179
      %v240 = vpack.c.b16 %v188, %v184
      %v241 = vpack.c.b16 %v189, %v185
      %v242 = vpack.c.b16 %v190, %v186
      %v243 = vpack.c.b16 %v191, %v187
      %v244 = vpack.c.b16 %v196, %v192
      %v245 = vpack.c.b16 %v197, %v193
      %v246 = vpack.c.b16 %v198, %v194
      %v247 = vpack.c.b16 %v199, %v195
      %v248 = vpack.c.b16 %v204, %v200
      %v249 = vpack.c.b16 %v205, %v201
      %v250 = vpack.c.b16 %v206, %v202
      %v251 = vpack.c.b16 %v207, %v203
      %v252 = vpack.c.b16 %v212, %v208
      %v253 = vpack.c.b16 %v213, %v209
      %v254 = vpack.c.b16 %v214, %v210
      %v255 = vpack.c.b16 %v215, %v211
      %v256 = vpack.c.b16 %v220, %v216
      %v257 = vpack.c.b16 %v221, %v217
      %v258 = vpack.c.b16 %v222, %v218
      %v259 = vpack.c.b16 %v223, %v219
      %v260 = vpack.c.b16 %v228, %v224
      %v261 = vpack.c.b16 %v229, %v225
      %v262 = vpack.c.b16 %v230, %v226
      %v263 = vpack.c.b16 %v231, %v227
      %296 = vmatprep.subr.bf16.mxu0 %v261
      %297 = vmatpush1.bf16.msra.mxu0 %v260
      %298 = vmatprep.subr.bf16.mxu0 %v257
      %299 = vmatpush1.bf16.msra.mxu0 %v256
      %300 = vmatprep.subr.bf16.mxu0 %v253
      %301 = vmatpush1.bf16.msra.mxu0 %v252
      %302 = vmatprep.subr.bf16.mxu0 %v249
      %303 = vmatpush1.bf16.msra.mxu0 %v248
      %304 = vmatprep.subr.bf16.mxu0 %v245
      %305 = vmatpush1.bf16.msra.mxu0 %v244
      %306 = vmatprep.subr.bf16.mxu0 %v241
      %307 = vmatpush1.bf16.msra.mxu0 %v240
      %308 = vmatprep.subr.bf16.mxu0 %v237
      %309 = vmatpush1.bf16.msra.mxu0 %v236
      %310 = vmatprep.subr.bf16.mxu0 %v233
      %311 = vmatpush1.bf16.msra.mxu0 %v232
      %312 = vmatprep.subr.bf16.mxu0 0
      %313 = vmatpush2.bf16.msra.mxu0 0
      %314 = vmatprep.subr.bf16.mxu0 0
      %315 = vmatpush2.bf16.msra.mxu0 0
      %316 = vmatprep.subr.bf16.mxu0 0
      %317 = vmatpush2.bf16.msra.mxu0 0
      %318 = vmatprep.subr.bf16.mxu0 0
      %319 = vmatpush2.bf16.msra.mxu0 0
      %320 = vmatprep.subr.bf16.mxu0 0
      %321 = vmatpush2.bf16.msra.mxu0 0
      %322 = vmatprep.subr.bf16.mxu0 0
      %323 = vmatpush2.bf16.msra.mxu0 0
      %324 = vmatprep.subr.bf16.mxu0 0
      %325 = vmatpush2.bf16.msra.mxu0 0
      %326 = vmatprep.subr.bf16.mxu0 0
      %327 = vmatpush2.bf16.msra.mxu0 0
      %328 = vmatprep.mubr.bf16.mxu0 0
      %329 = vmatmul.mubr.bf16.gmra.mxu0 %v77
      %v330 = vpop.f32.mrf.mxu0
      %v331 = vadd.f32 %v119, %v330
      %v332 = vpop.f32.mrf.mxu0
      %v333 = vadd.f32 %v123, %v332
      %v334 = vpop.f32.mrf.mxu0
      %v335 = vadd.f32 %v119, %v334
      %v336 = vpop.f32.mrf.mxu0
      %v337 = vadd.f32 %v123, %v336
      %338 = vdwg.mxu0
      %339 = vmatprep.subr.bf16.mxu0 %v263
      %340 = vmatpush1.bf16.msra.mxu0 %v262
      %341 = vmatprep.subr.bf16.mxu0 %v259
      %342 = vmatpush1.bf16.msra.mxu0 %v258
      %343 = vmatprep.subr.bf16.mxu0 %v255
      %344 = vmatpush1.bf16.msra.mxu0 %v254
      %345 = vmatprep.subr.bf16.mxu0 %v251
      %346 = vmatpush1.bf16.msra.mxu0 %v250
      %347 = vmatprep.subr.bf16.mxu0 %v247
      %348 = vmatpush1.bf16.msra.mxu0 %v246
      %349 = vmatprep.subr.bf16.mxu0 %v243
      %350 = vmatpush1.bf16.msra.mxu0 %v242
      %351 = vmatprep.subr.bf16.mxu0 %v239
      %352 = vmatpush1.bf16.msra.mxu0 %v238
      %353 = vmatprep.subr.bf16.mxu0 %v235
      %354 = vmatpush1.bf16.msra.mxu0 %v234
      %355 = vmatprep.subr.bf16.mxu0 0
      %356 = vmatpush2.bf16.msra.mxu0 0
      %357 = vmatprep.subr.bf16.mxu0 0
      %358 = vmatpush2.bf16.msra.mxu0 0
      %359 = vmatprep.subr.bf16.mxu0 0
      %360 = vmatpush2.bf16.msra.mxu0 0
      %361 = vmatprep.subr.bf16.mxu0 0
      %362 = vmatpush2.bf16.msra.mxu0 0
      %363 = vmatprep.subr.bf16.mxu0 0
      %364 = vmatpush2.bf16.msra.mxu0 0
      %365 = vmatprep.subr.bf16.mxu0 0
      %366 = vmatpush2.bf16.msra.mxu0 0
      %367 = vmatprep.subr.bf16.mxu0 0
      %368 = vmatpush2.bf16.msra.mxu0 0
      %369 = vmatprep.subr.bf16.mxu0 0
      %370 = vmatpush2.bf16.msra.mxu0 0
      %371 = vmatprep.mubr.bf16.mxu0 0
      %372 = vmatmul.mubr.bf16.gmra.mxu0 %v77
      %v373 = vpop.f32.mrf.mxu0
      %v374 = vadd.f32 %v127, %v373
      %v375 = vpop.f32.mrf.mxu0
      %v376 = vadd.f32 %v131, %v375
      %v377 = vpop.f32.mrf.mxu0
      %v378 = vadd.f32 %v127, %v377
      %v379 = vpop.f32.mrf.mxu0
      %v380 = vadd.f32 %v131, %v379
      %381 = vdwg.mxu0
      %v382 = vmax.f32 %v331, 0.0
      %v383 = vmax.f32 %v333, 0.0
      %v384 = vmax.f32 %v374, 0.0
      %v385 = vmax.f32 %v376, 0.0
      %v386 = vmax.f32 %v335, 0.0
      %v387 = vmax.f32 %v337, 0.0
      %v388 = vmax.f32 %v378, 0.0
      %v389 = vmax.f32 %v380, 0.0
      %v390 = vpack.c.bf16 %v386, %v382
      %v391 = vpack.c.bf16 %v387, %v383
      %v392 = vpack.c.bf16 %v388, %v384
      %v393 = vpack.c.bf16 %v389, %v385
      %v394 = vld [vmem:[%s3] sm:$0xf]
      %v395 = vld [vmem:[%s3 + $0x4] sm:$0xf]
      %v396 = vld [vmem:[%s3 + $0x8] sm:$0xf]
      %v397 = vld [vmem:[%s3 + $0xc] sm:$0xf]
      %v398 = vld [vmem:[%s3 + $0x10] sm:$0xf]
      %v399 = vld [vmem:[%s3 + $0x14] sm:$0xf]
      %v400 = vld [vmem:[%s3 + $0x18] sm:$0xf]
      %v401 = vld [vmem:[%s3 + $0x1c] sm:$0xf]
      %v402 = vld [vmem:[%s3 + $0x20] sm:$0xf]
      %v403 = vld [vmem:[%s3 + $0x24] sm:$0xf]
      %v404 = vld [vmem:[%s3 + $0x28] sm:$0xf]
      %v405 = vld [vmem:[%s3 + $0x2c] sm:$0xf]
      %v406 = vld [vmem:[%s3 + $0x30] sm:$0xf]
      %v407 = vld [vmem:[%s3 + $0x34] sm:$0xf]
      %v408 = vld [vmem:[%s3 + $0x38] sm:$0xf]
      %v409 = vld [vmem:[%s3 + $0x3c] sm:$0xf]
      %v410 = vld [vmem:[%s3 + $0x40] sm:$0xf]
      %v411 = vld [vmem:[%s3 + $0x44] sm:$0xf]
      %v412 = vld [vmem:[%s3 + $0x48] sm:$0xf]
      %v413 = vld [vmem:[%s3 + $0x4c] sm:$0xf]
      %v414 = vld [vmem:[%s3 + $0x50] sm:$0xf]
      %v415 = vld [vmem:[%s3 + $0x54] sm:$0xf]
      %v416 = vld [vmem:[%s3 + $0x58] sm:$0xf]
      %v417 = vld [vmem:[%s3 + $0x5c] sm:$0xf]
      %v418 = vld [vmem:[%s3 + $0x60] sm:$0xf]
      %v419 = vld [vmem:[%s3 + $0x64] sm:$0xf]
      %v420 = vld [vmem:[%s3 + $0x68] sm:$0xf]
      %v421 = vld [vmem:[%s3 + $0x6c] sm:$0xf]
      %v422 = vld [vmem:[%s3 + $0x70] sm:$0xf]
      %v423 = vld [vmem:[%s3 + $0x74] sm:$0xf]
      %v424 = vld [vmem:[%s3 + $0x78] sm:$0xf]
      %v425 = vld [vmem:[%s3 + $0x7c] sm:$0xf]
      %v426 = vld [vmem:[%s3 + $0x80] sm:$0xf]
      %v427 = vld [vmem:[%s3 + $0x84] sm:$0xf]
      %v428 = vld [vmem:[%s3 + $0x88] sm:$0xf]
      %v429 = vld [vmem:[%s3 + $0x8c] sm:$0xf]
      %v430 = vld [vmem:[%s3 + $0x90] sm:$0xf]
      %v431 = vld [vmem:[%s3 + $0x94] sm:$0xf]
      %v432 = vld [vmem:[%s3 + $0x98] sm:$0xf]
      %v433 = vld [vmem:[%s3 + $0x9c] sm:$0xf]
      %v434 = vld [vmem:[%s3 + $0xa0] sm:$0xf]
      %v435 = vld [vmem:[%s3 + $0xa4] sm:$0xf]
      %v436 = vld [vmem:[%s3 + $0xa8] sm:$0xf]
      %v437 = vld [vmem:[%s3 + $0xac] sm:$0xf]
      %v438 = vld [vmem:[%s3 + $0xb0] sm:$0xf]
      %v439 = vld [vmem:[%s3 + $0xb4] sm:$0xf]
      %v440 = vld [vmem:[%s3 + $0xb8] sm:$0xf]
      %v441 = vld [vmem:[%s3 + $0xbc] sm:$0xf]
      %v442 = vld [vmem:[%s3 + $0xc0] sm:$0xf]
      %v443 = vld [vmem:[%s3 + $0xc4] sm:$0xf]
      %v444 = vld [vmem:[%s3 + $0xc8] sm:$0xf]
      %v445 = vld [vmem:[%s3 + $0xcc] sm:$0xf]
      %v446 = vld [vmem:[%s3 + $0xd0] sm:$0xf]
      %v447 = vld [vmem:[%s3 + $0xd4] sm:$0xf]
      %v448 = vld [vmem:[%s3 + $0xd8] sm:$0xf]
      %v449 = vld [vmem:[%s3 + $0xdc] sm:$0xf]
      %v450 = vld [vmem:[%s3 + $0xe0] sm:$0xf]
      %v451 = vld [vmem:[%s3 + $0xe4] sm:$0xf]
      %v452 = vld [vmem:[%s3 + $0xe8] sm:$0xf]
      %v453 = vld [vmem:[%s3 + $0xec] sm:$0xf]
      %v454 = vld [vmem:[%s3 + $0xf0] sm:$0xf]
      %v455 = vld [vmem:[%s3 + $0xf4] sm:$0xf]
      %v456 = vld [vmem:[%s3 + $0xf8] sm:$0xf]
      %v457 = vld [vmem:[%s3 + $0xfc] sm:$0xf]
      %v458 = vld [vmem:[%s4] sm:$0x1]
      %v460 = vlaneseq
      %v461 = vshrl.u32 %v460, 7
      %v462 = vsub.s32 0, %v461
      %v463 = vrot.slane %v458, %v462
      %v529 = vunpack.c.l.b16 %v394
      %v530 = vunpack.c.l.b16 %v395
      %v531 = vunpack.c.l.b16 %v396
      %v532 = vunpack.c.l.b16 %v397
      %v533 = vunpack.c.l.b16 %v398
      %v534 = vunpack.c.l.b16 %v399
      %v535 = vunpack.c.l.b16 %v400
      %v536 = vunpack.c.l.b16 %v401
      %v537 = vunpack.c.l.b16 %v402
      %v538 = vunpack.c.l.b16 %v403
      %v539 = vunpack.c.l.b16 %v404
      %v540 = vunpack.c.l.b16 %v405
      %v541 = vunpack.c.l.b16 %v406
      %v542 = vunpack.c.l.b16 %v407
      %v543 = vunpack.c.l.b16 %v408
      %v544 = vunpack.c.l.b16 %v409
      %v545 = vunpack.c.l.b16 %v410
      %v546 = vunpack.c.l.b16 %v411
      %v547 = vunpack.c.l.b16 %v412
      %v548 = vunpack.c.l.b16 %v413
      %v549 = vunpack.c.l.b16 %v414
      %v550 = vunpack.c.l.b16 %v415
      %v551 = vunpack.c.l.b16 %v416
      %v552 = vunpack.c.l.b16 %v417
      %v553 = vunpack.c.l.b16 %v418
      %v554 = vunpack.c.l.b16 %v419
      %v555 = vunpack.c.l.b16 %v420
      %v556 = vunpack.c.l.b16 %v421
      %v557 = vunpack.c.l.b16 %v422
      %v558 = vunpack.c.l.b16 %v423
      %v559 = vunpack.c.l.b16 %v424
      %v560 = vunpack.c.l.b16 %v425
      %v561 = vunpack.c.l.b16 %v426
      %v562 = vunpack.c.l.b16 %v427
      %v563 = vunpack.c.l.b16 %v428
      %v564 = vunpack.c.l.b16 %v429
      %v565 = vunpack.c.l.b16 %v430
      %v566 = vunpack.c.l.b16 %v431
      %v567 = vunpack.c.l.b16 %v432
      %v568 = vunpack.c.l.b16 %v433
      %v569 = vunpack.c.l.b16 %v434
      %v570 = vunpack.c.l.b16 %v435
      %v571 = vunpack.c.l.b16 %v436
      %v572 = vunpack.c.l.b16 %v437
      %v573 = vunpack.c.l.b16 %v438
      %v574 = vunpack.c.l.b16 %v439
      %v575 = vunpack.c.l.b16 %v440
      %v576 = vunpack.c.l.b16 %v441
      %v577 = vunpack.c.l.b16 %v442
      %v578 = vunpack.c.l.b16 %v443
      %v579 = vunpack.c.l.b16 %v444
      %v580 = vunpack.c.l.b16 %v445
      %v581 = vunpack.c.l.b16 %v446
      %v582 = vunpack.c.l.b16 %v447
      %v583 = vunpack.c.l.b16 %v448
      %v584 = vunpack.c.l.b16 %v449
      %v585 = vunpack.c.l.b16 %v450
      %v586 = vunpack.c.l.b16 %v451
      %v587 = vunpack.c.l.b16 %v452
      %v588 = vunpack.c.l.b16 %v453
      %v589 = vunpack.c.l.b16 %v454
      %v590 = vunpack.c.l.b16 %v455
      %v591 = vunpack.c.l.b16 %v456
      %v592 = vunpack.c.l.b16 %v457
      %v593 = vpack.c.b16 %v530, %v529
      %v594 = vpack.c.b16 %v532, %v531
      %v595 = vpack.c.b16 %v534, %v533
      %v596 = vpack.c.b16 %v536, %v535
      %v597 = vpack.c.b16 %v538, %v537
      %v598 = vpack.c.b16 %v540, %v539
      %v599 = vpack.c.b16 %v542, %v541
      %v600 = vpack.c.b16 %v544, %v543
      %v601 = vpack.c.b16 %v546, %v545
      %v602 = vpack.c.b16 %v548, %v547
      %v603 = vpack.c.b16 %v550, %v549
      %v604 = vpack.c.b16 %v552, %v551
      %v605 = vpack.c.b16 %v554, %v553
      %v606 = vpack.c.b16 %v556, %v555
      %v607 = vpack.c.b16 %v558, %v557
      %v608 = vpack.c.b16 %v560, %v559
      %v609 = vpack.c.b16 %v562, %v561
      %v610 = vpack.c.b16 %v564, %v563
      %v611 = vpack.c.b16 %v566, %v565
      %v612 = vpack.c.b16 %v568, %v567
      %v613 = vpack.c.b16 %v570, %v569
      %v614 = vpack.c.b16 %v572, %v571
      %v615 = vpack.c.b16 %v574, %v573
      %v616 = vpack.c.b16 %v576, %v575
      %v617 = vpack.c.b16 %v578, %v577
      %v618 = vpack.c.b16 %v580, %v579
      %v619 = vpack.c.b16 %v582, %v581
      %v620 = vpack.c.b16 %v584, %v583
      %v621 = vpack.c.b16 %v586, %v585
      %v622 = vpack.c.b16 %v588, %v587
      %v623 = vpack.c.b16 %v590, %v589
      %v624 = vpack.c.b16 %v592, %v591
      %657 = vmatprep.subr.bf16.mxu0 0
      %658 = vmatpush1.bf16.msra.mxu0 %v600
      %659 = vmatprep.subr.bf16.mxu0 0
      %660 = vmatpush1.bf16.msra.mxu0 %v599
      %661 = vmatprep.subr.bf16.mxu0 0
      %662 = vmatpush1.bf16.msra.mxu0 %v598
      %663 = vmatprep.subr.bf16.mxu0 0
      %664 = vmatpush1.bf16.msra.mxu0 %v597
      %665 = vmatprep.subr.bf16.mxu0 0
      %666 = vmatpush1.bf16.msra.mxu0 %v596
      %667 = vmatprep.subr.bf16.mxu0 0
      %668 = vmatpush1.bf16.msra.mxu0 %v595
      %669 = vmatprep.subr.bf16.mxu0 0
      %670 = vmatpush1.bf16.msra.mxu0 %v594
      %671 = vmatprep.subr.bf16.mxu0 0
      %672 = vmatpush1.bf16.msra.mxu0 %v593
      %673 = vmatprep.subr.bf16.mxu0 0
      %674 = vmatpush2.bf16.msra.mxu0 %v608
      %675 = vmatprep.subr.bf16.mxu0 0
      %676 = vmatpush2.bf16.msra.mxu0 %v607
      %677 = vmatprep.subr.bf16.mxu0 0
      %678 = vmatpush2.bf16.msra.mxu0 %v606
      %679 = vmatprep.subr.bf16.mxu0 0
      %680 = vmatpush2.bf16.msra.mxu0 %v605
      %681 = vmatprep.subr.bf16.mxu0 0
      %682 = vmatpush2.bf16.msra.mxu0 %v604
      %683 = vmatprep.subr.bf16.mxu0 0
      %684 = vmatpush2.bf16.msra.mxu0 %v603
      %685 = vmatprep.subr.bf16.mxu0 0
      %686 = vmatpush2.bf16.msra.mxu0 %v602
      %687 = vmatprep.subr.bf16.mxu0 0
      %688 = vmatpush2.bf16.msra.mxu0 %v601
      %689 = vmatprep.mubr.bf16.mxu0 %v391
      %690 = vmatmul.mubr.bf16.gmra.mxu0 %v390
      %v691 = vpop.f32.mrf.mxu0
      %v692 = vadd.f32 %v463, %v691
      %v693 = vpop.f32.mrf.mxu0
      %v694 = vpop.f32.mrf.mxu0
      %v695 = vadd.f32 %v463, %v694
      %v696 = vpop.f32.mrf.mxu0
      %697 = vdwg.mxu0
      %698 = vmatprep.subr.bf16.mxu0 0
      %699 = vmatpush1.bf16.msra.mxu0 %v616
      %700 = vmatprep.subr.bf16.mxu0 0
      %701 = vmatpush1.bf16.msra.mxu0 %v615
      %702 = vmatprep.subr.bf16.mxu0 0
      %703 = vmatpush1.bf16.msra.mxu0 %v614
      %704 = vmatprep.subr.bf16.mxu0 0
      %705 = vmatpush1.bf16.msra.mxu0 %v613
      %706 = vmatprep.subr.bf16.mxu0 0
      %707 = vmatpush1.bf16.msra.mxu0 %v612
      %708 = vmatprep.subr.bf16.mxu0 0
      %709 = vmatpush1.bf16.msra.mxu0 %v611
      %710 = vmatprep.subr.bf16.mxu0 0
      %711 = vmatpush1.bf16.msra.mxu0 %v610
      %712 = vmatprep.subr.bf16.mxu0 0
      %713 = vmatpush1.bf16.msra.mxu0 %v609
      %714 = vmatprep.subr.bf16.mxu0 0
      %715 = vmatpush2.bf16.msra.mxu0 %v624
      %716 = vmatprep.subr.bf16.mxu0 0
      %717 = vmatpush2.bf16.msra.mxu0 %v623
      %718 = vmatprep.subr.bf16.mxu0 0
      %719 = vmatpush2.bf16.msra.mxu0 %v622
      %720 = vmatprep.subr.bf16.mxu0 0
      %721 = vmatpush2.bf16.msra.mxu0 %v621
      %722 = vmatprep.subr.bf16.mxu0 0
      %723 = vmatpush2.bf16.msra.mxu0 %v620
      %724 = vmatprep.subr.bf16.mxu0 0
      %725 = vmatpush2.bf16.msra.mxu0 %v619
      %726 = vmatprep.subr.bf16.mxu0 0
      %727 = vmatpush2.bf16.msra.mxu0 %v618
      %728 = vmatprep.subr.bf16.mxu0 0
      %729 = vmatpush2.bf16.msra.mxu0 %v617
      %730 = vmatprep.mubr.bf16.mxu0 %v393
      %731 = vmatmul.mubr.bf16.gmra.mxu0 %v392
      %v732 = vpop.f32.mrf.mxu0
      %v733 = vadd.f32 %v692, %v732
      %v734 = vpop.f32.mrf.mxu0
      %v735 = vpop.f32.mrf.mxu0
      %v736 = vadd.f32 %v695, %v735
      %v737 = vpop.f32.mrf.mxu0
      %738 = vdwg.mxu0
      %v739 = vlaneseq
      %v740 = vand.u32 %v739, 127
      %vm741 = vcmask 31744
      %v742 = vsel %vm741, %v733, -inf
      %743 = vmax.xlane.f32.xlu0 %v742
      %v744 = vpop.xlane.xlu0 %743
      %v745 = vsel %vm741, %v736, -inf
      %746 = vmax.xlane.f32.xlu0 %v745
      %v747 = vpop.xlane.xlu0 %746
      %vm748 = vcmp.ge.f32.partialorder %v733, %v744
      %vm749 = vcmp.ge.f32.partialorder %v736, %v747
      %v750 = vsel %vm748, %v740, 4
      %v751 = vsel %vm749, %v740, 4
      %v752 = vsel %vm741, %v750, 2147483647
      %v753 = vand.u32 %v752, 65535
      %v754 = vshra.s32 %v752, 16
      %v755 = vcvt.s32.f32 %v753
      %v756 = vcvt.s32.f32 %v754
      %757 = vmin.xlane.f32.xlu0 %v756
      %v758 = vpop.xlane.xlu0 %757
      %vm759 = vcmp.eq.f32.partialorder %v756, %v758
      %v760 = vsel %vm759, %v755, inf
      %761 = vmin.xlane.f32.xlu0 %v760
      %v762 = vpop.xlane.xlu0 %761
      %v763 = vcvt.f32.s32 %v762
      %v764 = vcvt.f32.s32 %v758
      %v765 = vshll.u32 %v764, 16
      %v766 = vadd.s32 %v765, %v763
      %v767 = vsel %vm741, %v751, 2147483647
      %v768 = vand.u32 %v767, 65535
      %v769 = vshra.s32 %v767, 16
      %v770 = vcvt.s32.f32 %v768
      %v771 = vcvt.s32.f32 %v769
      %772 = vmin.xlane.f32.xlu0 %v771
      %v773 = vpop.xlane.xlu0 %772
      %vm774 = vcmp.eq.f32.partialorder %v771, %v773
      %v775 = vsel %vm774, %v770, inf
      %776 = vmin.xlane.f32.xlu0 %v775
      %v777 = vpop.xlane.xlu0 %776
      %v778 = vcvt.f32.s32 %v777
      %v779 = vcvt.f32.s32 %v773
      %v780 = vshll.u32 %v779, 16
      %v781 = vadd.s32 %v780, %v778
      %vm782 = vcmask 7168
      %783 = vst.msk [vmem:[#allocation2] sm:$0xff] %vm782, %v766
      %784 = vst.msk [vmem:[#allocation2 + $0x8] sm:$0xff] %vm782, %v781
      %785 = vst [vmem:[#allocation3] sm:$0xff] 0.0
      %786 = vst [vmem:[#allocation3 + $0x8] sm:$0xff] 0.0
    $region53: #{tpu_custom_call.1} parent=1 // pred_fallthru
      _
    %v787 = vld [vmem:[#allocation2] sm:$0xff]
    %v788 = vld [vmem:[#allocation2 + $0x8] sm:$0xff]
    %v789 = vld [vmem:[#allocation7] sm:$0xff]
    %v790 = vld [vmem:[#allocation7 + $0x8] sm:$0xff]
    %v791 = vld [vmem:[#allocation7 + $0x10] sm:$0xff]
    %v792 = vld [vmem:[#allocation7 + $0x18] sm:$0xff]
    %v793 = vld [vmem:[#allocation7 + $0x20] sm:$0xff]
    %v794 = vld [vmem:[#allocation7 + $0x28] sm:$0xff]
    %v795 = vld [vmem:[#allocation7 + $0x30] sm:$0xff]
    %v796 = vld [vmem:[#allocation7 + $0x38] sm:$0xff]
    %v797 = vld [vmem:[#allocation7 + $0x40] sm:$0xff]
    %v798 = vld [vmem:[#allocation7 + $0x48] sm:$0xff]
    %v799 = vld [vmem:[#allocation7 + $0x50] sm:$0xff]
    %v800 = vld [vmem:[#allocation7 + $0x58] sm:$0xff]
    %v801 = vld [vmem:[#allocation7 + $0x60] sm:$0xff]
    %v802 = vld [vmem:[#allocation7 + $0x68] sm:$0xff]
    %v803 = vld [vmem:[#allocation7 + $0x70] sm:$0xff]
    %v804 = vld [vmem:[#allocation7 + $0x78] sm:$0xff]
    %v805 = vld [vmem:[#allocation7 + $0x80] sm:$0xff]
    %v806 = vld [vmem:[#allocation7 + $0x88] sm:$0xff]
    %v807 = vld [vmem:[#allocation7 + $0x90] sm:$0xff]
    %v808 = vld [vmem:[#allocation7 + $0x98] sm:$0xff]
    %v809 = vld [vmem:[#allocation7 + $0xa0] sm:$0xff]
    %v810 = vld [vmem:[#allocation7 + $0xa8] sm:$0xff]
    %v811 = vld [vmem:[#allocation7 + $0xb0] sm:$0xff]
    %v812 = vld [vmem:[#allocation7 + $0xb8] sm:$0xff]
    %v813 = vld [vmem:[#allocation7 + $0xc0] sm:$0xff]
    %v814 = vld [vmem:[#allocation7 + $0xc8] sm:$0xff]
    %v815 = vld [vmem:[#allocation7 + $0xd0] sm:$0xff]
    %v816 = vld [vmem:[#allocation7 + $0xd8] sm:$0xff]
    %v817 = vld [vmem:[#allocation7 + $0xe0] sm:$0xff]
    %v818 = vld [vmem:[#allocation7 + $0xe8] sm:$0xff]
    %v819 = vld [vmem:[#allocation7 + $0xf0] sm:$0xff]
    %v820 = vld [vmem:[#allocation7 + $0xf8] sm:$0xff]
    %v821 = vld [vmem:[%s6] sm:$0xf]
    %v823 = vlaneseq
    %v824 = vshrl.u32 %v823, 7
    %v825 = vsub.s32 0, %v824
    %v826 = vrot.slane %v821, %v825
    %v827 = vlaneseq
    %v828 = vshrl.u32 %v827, 7
    %v829 = vsub.s32 1, %v828
    %v830 = vrot.slane %v821, %v829
    %v831 = vlaneseq
    %v832 = vshrl.u32 %v831, 7
    %v833 = vsub.s32 2, %v832
    %v834 = vrot.slane %v821, %v833
    %v835 = vlaneseq
    %v836 = vshrl.u32 %v835, 7
    %v837 = vsub.s32 3, %v836
    %v838 = vrot.slane %v821, %v837
    %v875 = vunpack.c.l.b16 %v789
    %v876 = vunpack.c.h.b16 %v789
    %v877 = vunpack.c.l.b16 %v790
    %v878 = vunpack.c.h.b16 %v790
    %v879 = vunpack.c.l.b16 %v791
    %v880 = vunpack.c.h.b16 %v791
    %v881 = vunpack.c.l.b16 %v792
    %v882 = vunpack.c.h.b16 %v792
    %v883 = vunpack.c.l.b16 %v793
    %v884 = vunpack.c.h.b16 %v793
    %v885 = vunpack.c.l.b16 %v794
    %v886 = vunpack.c.h.b16 %v794
    %v887 = vunpack.c.l.b16 %v795
    %v888 = vunpack.c.h.b16 %v795
    %v889 = vunpack.c.l.b16 %v796
    %v890 = vunpack.c.h.b16 %v796
    %v891 = vunpack.c.l.b16 %v797
    %v892 = vunpack.c.h.b16 %v797
    %v893 = vunpack.c.l.b16 %v798
    %v894 = vunpack.c.h.b16 %v798
    %v895 = vunpack.c.l.b16 %v799
    %v896 = vunpack.c.h.b16 %v799
    %v897 = vunpack.c.l.b16 %v800
    %v898 = vunpack.c.h.b16 %v800
    %v899 = vunpack.c.l.b16 %v801
    %v900 = vunpack.c.h.b16 %v801
    %v901 = vunpack.c.l.b16 %v802
    %v902 = vunpack.c.h.b16 %v802
    %v903 = vunpack.c.l.b16 %v803
    %v904 = vunpack.c.h.b16 %v803
    %v905 = vunpack.c.l.b16 %v804
    %v906 = vunpack.c.h.b16 %v804
    %v907 = vunpack.c.l.b16 %v805
    %v908 = vunpack.c.h.b16 %v805
    %v909 = vunpack.c.l.b16 %v806
    %v910 = vunpack.c.h.b16 %v806
    %v911 = vunpack.c.l.b16 %v807
    %v912 = vunpack.c.h.b16 %v807
    %v913 = vunpack.c.l.b16 %v808
    %v914 = vunpack.c.h.b16 %v808
    %v915 = vunpack.c.l.b16 %v809
    %v916 = vunpack.c.h.b16 %v809
    %v917 = vunpack.c.l.b16 %v810
    %v918 = vunpack.c.h.b16 %v810
    %v919 = vunpack.c.l.b16 %v811
    %v920 = vunpack.c.h.b16 %v811
    %v921 = vunpack.c.l.b16 %v812
    %v922 = vunpack.c.h.b16 %v812
    %v923 = vunpack.c.l.b16 %v813
    %v924 = vunpack.c.h.b16 %v813
    %v925 = vunpack.c.l.b16 %v814
    %v926 = vunpack.c.h.b16 %v814
    %v927 = vunpack.c.l.b16 %v815
    %v928 = vunpack.c.h.b16 %v815
    %v929 = vunpack.c.l.b16 %v816
    %v930 = vunpack.c.h.b16 %v816
    %v931 = vunpack.c.l.b16 %v817
    %v932 = vunpack.c.h.b16 %v817
    %v933 = vunpack.c.l.b16 %v818
    %v934 = vunpack.c.h.b16 %v818
    %v935 = vunpack.c.l.b16 %v819
    %v936 = vunpack.c.h.b16 %v819
    %v937 = vunpack.c.l.b16 %v820
    %v938 = vunpack.c.h.b16 %v820
    %v939 = vpack.c.b16 %v879, %v875
    %v940 = vpack.c.b16 %v880, %v876
    %v941 = vpack.c.b16 %v881, %v877
    %v942 = vpack.c.b16 %v882, %v878
    %v943 = vpack.c.b16 %v887, %v883
    %v944 = vpack.c.b16 %v888, %v884
    %v945 = vpack.c.b16 %v889, %v885
    %v946 = vpack.c.b16 %v890, %v886
    %v947 = vpack.c.b16 %v895, %v891
    %v948 = vpack.c.b16 %v896, %v892
    %v949 = vpack.c.b16 %v897, %v893
    %v950 = vpack.c.b16 %v898, %v894
    %v951 = vpack.c.b16 %v903, %v899
    %v952 = vpack.c.b16 %v904, %v900
    %v953 = vpack.c.b16 %v905, %v901
    %v954 = vpack.c.b16 %v906, %v902
    %v955 = vpack.c.b16 %v911, %v907
    %v956 = vpack.c.b16 %v912, %v908
    %v957 = vpack.c.b16 %v913, %v909
    %v958 = vpack.c.b16 %v914, %v910
    %v959 = vpack.c.b16 %v919, %v915
    %v960 = vpack.c.b16 %v920, %v916
    %v961 = vpack.c.b16 %v921, %v917
    %v962 = vpack.c.b16 %v922, %v918
    %v963 = vpack.c.b16 %v927, %v923
    %v964 = vpack.c.b16 %v928, %v924
    %v965 = vpack.c.b16 %v929, %v925
    %v966 = vpack.c.b16 %v930, %v926
    %v967 = vpack.c.b16 %v935, %v931
    %v968 = vpack.c.b16 %v936, %v932
    %v969 = vpack.c.b16 %v937, %v933
    %v970 = vpack.c.b16 %v938, %v934
    %1003 = vmatprep.subr.bf16.mxu0 %v968
    %1004 = vmatpush1.bf16.msra.mxu0 %v967
    %1005 = vmatprep.subr.bf16.mxu0 %v964
    %1006 = vmatpush1.bf16.msra.mxu0 %v963
    %1007 = vmatprep.subr.bf16.mxu0 %v960
    %1008 = vmatpush1.bf16.msra.mxu0 %v959
    %1009 = vmatprep.subr.bf16.mxu0 %v956
    %1010 = vmatpush1.bf16.msra.mxu0 %v955
    %1011 = vmatprep.subr.bf16.mxu0 %v952
    %1012 = vmatpush1.bf16.msra.mxu0 %v951
    %1013 = vmatprep.subr.bf16.mxu0 %v948
    %1014 = vmatpush1.bf16.msra.mxu0 %v947
    %1015 = vmatprep.subr.bf16.mxu0 %v944
    %1016 = vmatpush1.bf16.msra.mxu0 %v943
    %1017 = vmatprep.subr.bf16.mxu0 %v940
    %1018 = vmatpush1.bf16.msra.mxu0 %v939
    %1019 = vmatprep.subr.bf16.mxu0 0
    %1020 = vmatpush2.bf16.msra.mxu0 0
    %1021 = vmatprep.subr.bf16.mxu0 0
    %1022 = vmatpush2.bf16.msra.mxu0 0
    %1023 = vmatprep.subr.bf16.mxu0 0
    %1024 = vmatpush2.bf16.msra.mxu0 0
    %1025 = vmatprep.subr.bf16.mxu0 0
    %1026 = vmatpush2.bf16.msra.mxu0 0
    %1027 = vmatprep.subr.bf16.mxu0 0
    %1028 = vmatpush2.bf16.msra.mxu0 0
    %1029 = vmatprep.subr.bf16.mxu0 0
    %1030 = vmatpush2.bf16.msra.mxu0 0
    %1031 = vmatprep.subr.bf16.mxu0 0
    %1032 = vmatpush2.bf16.msra.mxu0 0
    %1033 = vmatprep.subr.bf16.mxu0 0
    %1034 = vmatpush2.bf16.msra.mxu0 0
    %1035 = vmatprep.mubr.bf16.mxu0 0
    %1036 = vmatmul.mubr.bf16.gmra.mxu0 %v77
    %v1037 = vpop.f32.mrf.mxu0
    %v1038 = vadd.f32 %v826, %v1037
    %v1039 = vpop.f32.mrf.mxu0
    %v1040 = vadd.f32 %v830, %v1039
    %v1041 = vpop.f32.mrf.mxu0
    %v1042 = vadd.f32 %v826, %v1041
    %v1043 = vpop.f32.mrf.mxu0
    %v1044 = vadd.f32 %v830, %v1043
    %1045 = vdwg.mxu0
    %1046 = vmatprep.subr.bf16.mxu0 %v970
    %1047 = vmatpush1.bf16.msra.mxu0 %v969
    %1048 = vmatprep.subr.bf16.mxu0 %v966
    %1049 = vmatpush1.bf16.msra.mxu0 %v965
    %1050 = vmatprep.subr.bf16.mxu0 %v962
    %1051 = vmatpush1.bf16.msra.mxu0 %v961
    %1052 = vmatprep.subr.bf16.mxu0 %v958
    %1053 = vmatpush1.bf16.msra.mxu0 %v957
    %1054 = vmatprep.subr.bf16.mxu0 %v954
    %1055 = vmatpush1.bf16.msra.mxu0 %v953
    %1056 = vmatprep.subr.bf16.mxu0 %v950
    %1057 = vmatpush1.bf16.msra.mxu0 %v949
    %1058 = vmatprep.subr.bf16.mxu0 %v946
    %1059 = vmatpush1.bf16.msra.mxu0 %v945
    %1060 = vmatprep.subr.bf16.mxu0 %v942
    %1061 = vmatpush1.bf16.msra.mxu0 %v941
    %1062 = vmatprep.subr.bf16.mxu0 0
    %1063 = vmatpush2.bf16.msra.mxu0 0
    %1064 = vmatprep.subr.bf16.mxu0 0
    %1065 = vmatpush2.bf16.msra.mxu0 0
    %1066 = vmatprep.subr.bf16.mxu0 0
    %1067 = vmatpush2.bf16.msra.mxu0 0
    %1068 = vmatprep.subr.bf16.mxu0 0
    %1069 = vmatpush2.bf16.msra.mxu0 0
    %1070 = vmatprep.subr.bf16.mxu0 0
    %1071 = vmatpush2.bf16.msra.mxu0 0
    %1072 = vmatprep.subr.bf16.mxu0 0
    %1073 = vmatpush2.bf16.msra.mxu0 0
    %1074 = vmatprep.subr.bf16.mxu0 0
    %1075 = vmatpush2.bf16.msra.mxu0 0
    %1076 = vmatprep.subr.bf16.mxu0 0
    %1077 = vmatpush2.bf16.msra.mxu0 0
    %1078 = vmatprep.mubr.bf16.mxu0 0
    %1079 = vmatmul.mubr.bf16.gmra.mxu0 %v77
    %v1080 = vpop.f32.mrf.mxu0
    %v1081 = vadd.f32 %v834, %v1080
    %v1082 = vpop.f32.mrf.mxu0
    %v1083 = vadd.f32 %v838, %v1082
    %v1084 = vpop.f32.mrf.mxu0
    %v1085 = vadd.f32 %v834, %v1084
    %v1086 = vpop.f32.mrf.mxu0
    %v1087 = vadd.f32 %v838, %v1086
    %1088 = vdwg.mxu0
    %v1089 = vmax.f32 %v1038, 0.0
    %v1090 = vmax.f32 %v1040, 0.0
    %v1091 = vmax.f32 %v1081, 0.0
    %v1092 = vmax.f32 %v1083, 0.0
    %v1093 = vmax.f32 %v1042, 0.0
    %v1094 = vmax.f32 %v1044, 0.0
    %v1095 = vmax.f32 %v1085, 0.0
    %v1096 = vmax.f32 %v1087, 0.0
    %v1097 = vpack.c.bf16 %v1093, %v1089
    %v1098 = vpack.c.bf16 %v1094, %v1090
    %v1099 = vpack.c.bf16 %v1095, %v1091
    %v1100 = vpack.c.bf16 %v1096, %v1092
    %v1101 = vlaneseq
    %v1102 = vand.u32 %v1101, 127
    %v1103 = vadd.s32 %v1102, 128
    %v1104 = vadd.s32 %v1102, 256
    %v1105 = vadd.s32 %v1102, 384
    %s1106 = smul.u32 0, 512
    %v1107 = vstv %s1106
    %v1108 = vadd.s32 %v1102, %v1107
    %v1109 = vadd.s32 %v1103, %v1107
    %v1110 = vadd.s32 %v1104, %v1107
    %v1111 = vadd.s32 %v1105, %v1107
    %v1112 = vmul.u32 %v787, 128
    %v1113 = vmul.u32 %v788, 128
    %1114 = vset.pattern.permute.xlu0 0
    %1115 = vperm.xlu0 %1114, %v1112
    %v1116 = vpop.permute.xlu0 %1115
    %1117 = vset.pattern.permute.xlu0 0
    %1118 = vperm.xlu0 %1117, %v1113
    %v1119 = vpop.permute.xlu0 %1118
    %v1120 = vsub.s32 %v1108, %v1116
    %v1121 = vsub.s32 %v1109, %v1116
    %v1122 = vsub.s32 %v1110, %v1116
    %v1123 = vsub.s32 %v1111, %v1116
    %v1124 = vsub.s32 %v1108, %v1119
    %v1125 = vsub.s32 %v1109, %v1119
    %v1126 = vsub.s32 %v1110, %v1119
    %v1127 = vsub.s32 %v1111, %v1119
    %vm1128 = vcmp.ge.s32.totalorder %v1120, 0
    %vm1129 = vcmp.ge.s32.totalorder %v1121, 0
    %vm1130 = vcmp.ge.s32.totalorder %v1122, 0
    %vm1131 = vcmp.ge.s32.totalorder %v1123, 0
    %vm1132 = vcmp.ge.s32.totalorder %v1124, 0
    %vm1133 = vcmp.ge.s32.totalorder %v1125, 0
    %vm1134 = vcmp.ge.s32.totalorder %v1126, 0
    %vm1135 = vcmp.ge.s32.totalorder %v1127, 0
    %vm1136 = vcmp.lt.s32.totalorder %v1120, 128
    %vm1137 = vcmp.lt.s32.totalorder %v1121, 128
    %vm1138 = vcmp.lt.s32.totalorder %v1122, 128
    %vm1139 = vcmp.lt.s32.totalorder %v1123, 128
    %vm1140 = vcmp.lt.s32.totalorder %v1124, 128
    %vm1141 = vcmp.lt.s32.totalorder %v1125, 128
    %vm1142 = vcmp.lt.s32.totalorder %v1126, 128
    %vm1143 = vcmp.lt.s32.totalorder %v1127, 128
    %vm1144 = vmand %vm1128, %vm1136
    %vm1145 = vmand %vm1129, %vm1137
    %vm1146 = vmand %vm1130, %vm1138
    %vm1147 = vmand %vm1131, %vm1139
    %vm1148 = vmand %vm1132, %vm1140
    %vm1149 = vmand %vm1133, %vm1141
    %vm1150 = vmand %vm1134, %vm1142
    %vm1151 = vmand %vm1135, %vm1143
    %vm1152 = vmpackc.low %vm1148, %vm1144
    %vm1153 = vmpackc.low %vm1149, %vm1145
    %vm1154 = vmpackc.low %vm1150, %vm1146
    %vm1155 = vmpackc.low %vm1151, %vm1147
    %v1156 = vsel %vm1152, %v1097, 0
    %v1157 = vsel %vm1153, %v1098, 0
    %v1158 = vsel %vm1154, %v1099, 0
    %v1159 = vsel %vm1155, %v1100, 0
    %v1160 = vld [vmem:[#allocation3] sm:$0xff]
    %v1161 = vld [vmem:[#allocation3 + $0x8] sm:$0xff]
    %v1162 = vld [vmem:[#allocation9] sm:$0xf]
    %v1163 = vld [vmem:[#allocation9 + $0x4] sm:$0xf]
    %v1164 = vld [vmem:[#allocation9 + $0x8] sm:$0xf]
    %v1165 = vld [vmem:[#allocation9 + $0xc] sm:$0xf]
    %v1166 = vld [vmem:[#allocation9 + $0x10] sm:$0xf]
    %v1167 = vld [vmem:[#allocation9 + $0x14] sm:$0xf]
    %v1168 = vld [vmem:[#allocation9 + $0x18] sm:$0xf]
    %v1169 = vld [vmem:[#allocation9 + $0x1c] sm:$0xf]
    %v1170 = vld [vmem:[#allocation9 + $0x20] sm:$0xf]
    %v1171 = vld [vmem:[#allocation9 + $0x24] sm:$0xf]
    %v1172 = vld [vmem:[#allocation9 + $0x28] sm:$0xf]
    %v1173 = vld [vmem:[#allocation9 + $0x2c] sm:$0xf]
    %v1174 = vld [vmem:[#allocation9 + $0x30] sm:$0xf]
    %v1175 = vld [vmem:[#allocation9 + $0x34] sm:$0xf]
    %v1176 = vld [vmem:[#allocation9 + $0x38] sm:$0xf]
    %v1177 = vld [vmem:[#allocation9 + $0x3c] sm:$0xf]
    %v1178 = vld [vmem:[#allocation9 + $0x40] sm:$0xf]
    %v1179 = vld [vmem:[#allocation9 + $0x44] sm:$0xf]
    %v1180 = vld [vmem:[#allocation9 + $0x48] sm:$0xf]
    %v1181 = vld [vmem:[#allocation9 + $0x4c] sm:$0xf]
    %v1182 = vld [vmem:[#allocation9 + $0x50] sm:$0xf]
    %v1183 = vld [vmem:[#allocation9 + $0x54] sm:$0xf]
    %v1184 = vld [vmem:[#allocation9 + $0x58] sm:$0xf]
    %v1185 = vld [vmem:[#allocation9 + $0x5c] sm:$0xf]
    %v1186 = vld [vmem:[#allocation9 + $0x60] sm:$0xf]
    %v1187 = vld [vmem:[#allocation9 + $0x64] sm:$0xf]
    %v1188 = vld [vmem:[#allocation9 + $0x68] sm:$0xf]
    %v1189 = vld [vmem:[#allocation9 + $0x6c] sm:$0xf]
    %v1190 = vld [vmem:[#allocation9 + $0x70] sm:$0xf]
    %v1191 = vld [vmem:[#allocation9 + $0x74] sm:$0xf]
    %v1192 = vld [vmem:[#allocation9 + $0x78] sm:$0xf]
    %v1193 = vld [vmem:[#allocation9 + $0x7c] sm:$0xf]
    %v1194 = vld [vmem:[#allocation9 + $0x80] sm:$0xf]
    %v1195 = vld [vmem:[#allocation9 + $0x84] sm:$0xf]
    %v1196 = vld [vmem:[#allocation9 + $0x88] sm:$0xf]
    %v1197 = vld [vmem:[#allocation9 + $0x8c] sm:$0xf]
    %v1198 = vld [vmem:[#allocation9 + $0x90] sm:$0xf]
    %v1199 = vld [vmem:[#allocation9 + $0x94] sm:$0xf]
    %v1200 = vld [vmem:[#allocation9 + $0x98] sm:$0xf]
    %v1201 = vld [vmem:[#allocation9 + $0x9c] sm:$0xf]
    %v1202 = vld [vmem:[#allocation9 + $0xa0] sm:$0xf]
    %v1203 = vld [vmem:[#allocation9 + $0xa4] sm:$0xf]
    %v1204 = vld [vmem:[#allocation9 + $0xa8] sm:$0xf]
    %v1205 = vld [vmem:[#allocation9 + $0xac] sm:$0xf]
    %v1206 = vld [vmem:[#allocation9 + $0xb0] sm:$0xf]
    %v1207 = vld [vmem:[#allocation9 + $0xb4] sm:$0xf]
    %v1208 = vld [vmem:[#allocation9 + $0xb8] sm:$0xf]
    %v1209 = vld [vmem:[#allocation9 + $0xbc] sm:$0xf]
    %v1210 = vld [vmem:[#allocation9 + $0xc0] sm:$0xf]
    %v1211 = vld [vmem:[#allocation9 + $0xc4] sm:$0xf]
    %v1212 = vld [vmem:[#allocation9 + $0xc8] sm:$0xf]
    %v1213 = vld [vmem:[#allocation9 + $0xcc] sm:$0xf]
    %v1214 = vld [vmem:[#allocation9 + $0xd0] sm:$0xf]
    %v1215 = vld [vmem:[#allocation9 + $0xd4] sm:$0xf]
    %v1216 = vld [vmem:[#allocation9 + $0xd8] sm:$0xf]
    %v1217 = vld [vmem:[#allocation9 + $0xdc] sm:$0xf]
    %v1218 = vld [vmem:[#allocation9 + $0xe0] sm:$0xf]
    %v1219 = vld [vmem:[#allocation9 + $0xe4] sm:$0xf]
    %v1220 = vld [vmem:[#allocation9 + $0xe8] sm:$0xf]
    %v1221 = vld [vmem:[#allocation9 + $0xec] sm:$0xf]
    %v1222 = vld [vmem:[#allocation9 + $0xf0] sm:$0xf]
    %v1223 = vld [vmem:[#allocation9 + $0xf4] sm:$0xf]
    %v1224 = vld [vmem:[#allocation9 + $0xf8] sm:$0xf]
    %v1225 = vld [vmem:[#allocation9 + $0xfc] sm:$0xf]
    %v1290 = vunpack.c.l.b16 %v1162
    %v1291 = vunpack.c.l.b16 %v1163
    %v1292 = vunpack.c.l.b16 %v1164
    %v1293 = vunpack.c.l.b16 %v1165
    %v1294 = vunpack.c.l.b16 %v1166
    %v1295 = vunpack.c.l.b16 %v1167
    %v1296 = vunpack.c.l.b16 %v1168
    %v1297 = vunpack.c.l.b16 %v1169
    %v1298 = vunpack.c.l.b16 %v1170
    %v1299 = vunpack.c.l.b16 %v1171
    %v1300 = vunpack.c.l.b16 %v1172
    %v1301 = vunpack.c.l.b16 %v1173
    %v1302 = vunpack.c.l.b16 %v1174
    %v1303 = vunpack.c.l.b16 %v1175
    %v1304 = vunpack.c.l.b16 %v1176
    %v1305 = vunpack.c.l.b16 %v1177
    %v1306 = vunpack.c.l.b16 %v1178
    %v1307 = vunpack.c.l.b16 %v1179
    %v1308 = vunpack.c.l.b16 %v1180
    %v1309 = vunpack.c.l.b16 %v1181
    %v1310 = vunpack.c.l.b16 %v1182
    %v1311 = vunpack.c.l.b16 %v1183
    %v1312 = vunpack.c.l.b16 %v1184
    %v1313 = vunpack.c.l.b16 %v1185
    %v1314 = vunpack.c.l.b16 %v1186
    %v1315 = vunpack.c.l.b16 %v1187
    %v1316 = vunpack.c.l.b16 %v1188
    %v1317 = vunpack.c.l.b16 %v1189
    %v1318 = vunpack.c.l.b16 %v1190
    %v1319 = vunpack.c.l.b16 %v1191
    %v1320 = vunpack.c.l.b16 %v1192
    %v1321 = vunpack.c.l.b16 %v1193
    %v1322 = vunpack.c.l.b16 %v1194
    %v1323 = vunpack.c.l.b16 %v1195
    %v1324 = vunpack.c.l.b16 %v1196
    %v1325 = vunpack.c.l.b16 %v1197
    %v1326 = vunpack.c.l.b16 %v1198
    %v1327 = vunpack.c.l.b16 %v1199
    %v1328 = vunpack.c.l.b16 %v1200
    %v1329 = vunpack.c.l.b16 %v1201
    %v1330 = vunpack.c.l.b16 %v1202
    %v1331 = vunpack.c.l.b16 %v1203
    %v1332 = vunpack.c.l.b16 %v1204
    %v1333 = vunpack.c.l.b16 %v1205
    %v1334 = vunpack.c.l.b16 %v1206
    %v1335 = vunpack.c.l.b16 %v1207
    %v1336 = vunpack.c.l.b16 %v1208
    %v1337 = vunpack.c.l.b16 %v1209
    %v1338 = vunpack.c.l.b16 %v1210
    %v1339 = vunpack.c.l.b16 %v1211
    %v1340 = vunpack.c.l.b16 %v1212
    %v1341 = vunpack.c.l.b16 %v1213
    %v1342 = vunpack.c.l.b16 %v1214
    %v1343 = vunpack.c.l.b16 %v1215
    %v1344 = vunpack.c.l.b16 %v1216
    %v1345 = vunpack.c.l.b16 %v1217
    %v1346 = vunpack.c.l.b16 %v1218
    %v1347 = vunpack.c.l.b16 %v1219
    %v1348 = vunpack.c.l.b16 %v1220
    %v1349 = vunpack.c.l.b16 %v1221
    %v1350 = vunpack.c.l.b16 %v1222
    %v1351 = vunpack.c.l.b16 %v1223
    %v1352 = vunpack.c.l.b16 %v1224
    %v1353 = vunpack.c.l.b16 %v1225
    %v1354 = vpack.c.b16 %v1291, %v1290
    %v1355 = vpack.c.b16 %v1293, %v1292
    %v1356 = vpack.c.b16 %v1295, %v1294
    %v1357 = vpack.c.b16 %v1297, %v1296
    %v1358 = vpack.c.b16 %v1299, %v1298
    %v1359 = vpack.c.b16 %v1301, %v1300
    %v1360 = vpack.c.b16 %v1303, %v1302
    %v1361 = vpack.c.b16 %v1305, %v1304
    %v1362 = vpack.c.b16 %v1307, %v1306
    %v1363 = vpack.c.b16 %v1309, %v1308
    %v1364 = vpack.c.b16 %v1311, %v1310
    %v1365 = vpack.c.b16 %v1313, %v1312
    %v1366 = vpack.c.b16 %v1315, %v1314
    %v1367 = vpack.c.b16 %v1317, %v1316
    %v1368 = vpack.c.b16 %v1319, %v1318
    %v1369 = vpack.c.b16 %v1321, %v1320
    %v1370 = vpack.c.b16 %v1323, %v1322
    %v1371 = vpack.c.b16 %v1325, %v1324
    %v1372 = vpack.c.b16 %v1327, %v1326
    %v1373 = vpack.c.b16 %v1329, %v1328
    %v1374 = vpack.c.b16 %v1331, %v1330
    %v1375 = vpack.c.b16 %v1333, %v1332
    %v1376 = vpack.c.b16 %v1335, %v1334
    %v1377 = vpack.c.b16 %v1337, %v1336
    %v1378 = vpack.c.b16 %v1339, %v1338
    %v1379 = vpack.c.b16 %v1341, %v1340
    %v1380 = vpack.c.b16 %v1343, %v1342
    %v1381 = vpack.c.b16 %v1345, %v1344
    %v1382 = vpack.c.b16 %v1347, %v1346
    %v1383 = vpack.c.b16 %v1349, %v1348
    %v1384 = vpack.c.b16 %v1351, %v1350
    %v1385 = vpack.c.b16 %v1353, %v1352
    %1418 = vmatprep.subr.bf16.mxu0 0
    %1419 = vmatpush1.bf16.msra.mxu0 %v1361
    %1420 = vmatprep.subr.bf16.mxu0 0
    %1421 = vmatpush1.bf16.msra.mxu0 %v1360
    %1422 = vmatprep.subr.bf16.mxu0 0
    %1423 = vmatpush1.bf16.msra.mxu0 %v1359
    %1424 = vmatprep.subr.bf16.mxu0 0
    %1425 = vmatpush1.bf16.msra.mxu0 %v1358
    %1426 = vmatprep.subr.bf16.mxu0 0
    %1427 = vmatpush1.bf16.msra.mxu0 %v1357
    %1428 = vmatprep.subr.bf16.mxu0 0
    %1429 = vmatpush1.bf16.msra.mxu0 %v1356
    %1430 = vmatprep.subr.bf16.mxu0 0
    %1431 = vmatpush1.bf16.msra.mxu0 %v1355
    %1432 = vmatprep.subr.bf16.mxu0 0
    %1433 = vmatpush1.bf16.msra.mxu0 %v1354
    %1434 = vmatprep.subr.bf16.mxu0 0
    %1435 = vmatpush2.bf16.msra.mxu0 %v1369
    %1436 = vmatprep.subr.bf16.mxu0 0
    %1437 = vmatpush2.bf16.msra.mxu0 %v1368
    %1438 = vmatprep.subr.bf16.mxu0 0
    %1439 = vmatpush2.bf16.msra.mxu0 %v1367
    %1440 = vmatprep.subr.bf16.mxu0 0
    %1441 = vmatpush2.bf16.msra.mxu0 %v1366
    %1442 = vmatprep.subr.bf16.mxu0 0
    %1443 = vmatpush2.bf16.msra.mxu0 %v1365
    %1444 = vmatprep.subr.bf16.mxu0 0
    %1445 = vmatpush2.bf16.msra.mxu0 %v1364
    %1446 = vmatprep.subr.bf16.mxu0 0
    %1447 = vmatpush2.bf16.msra.mxu0 %v1363
    %1448 = vmatprep.subr.bf16.mxu0 0
    %1449 = vmatpush2.bf16.msra.mxu0 %v1362
    %1450 = vmatprep.mubr.bf16.mxu0 %v1157
    %1451 = vmatmul.mubr.bf16.gmra.mxu0 %v1156
    %v1452 = vpop.f32.mrf.mxu0
    %v1453 = vadd.f32 0.0, %v1452
    %v1454 = vpop.f32.mrf.mxu0
    %v1455 = vpop.f32.mrf.mxu0
    %v1456 = vadd.f32 0.0, %v1455
    %v1457 = vpop.f32.mrf.mxu0
    %1458 = vdwg.mxu0
    %1459 = vmatprep.subr.bf16.mxu0 0
    %1460 = vmatpush1.bf16.msra.mxu0 %v1377
    %1461 = vmatprep.subr.bf16.mxu0 0
    %1462 = vmatpush1.bf16.msra.mxu0 %v1376
    %1463 = vmatprep.subr.bf16.mxu0 0
    %1464 = vmatpush1.bf16.msra.mxu0 %v1375
    %1465 = vmatprep.subr.bf16.mxu0 0
    %1466 = vmatpush1.bf16.msra.mxu0 %v1374
    %1467 = vmatprep.subr.bf16.mxu0 0
    %1468 = vmatpush1.bf16.msra.mxu0 %v1373
    %1469 = vmatprep.subr.bf16.mxu0 0
    %1470 = vmatpush1.bf16.msra.mxu0 %v1372
    %1471 = vmatprep.subr.bf16.mxu0 0
    %1472 = vmatpush1.bf16.msra.mxu0 %v1371
    %1473 = vmatprep.subr.bf16.mxu0 0
    %1474 = vmatpush1.bf16.msra.mxu0 %v1370
    %1475 = vmatprep.subr.bf16.mxu0 0
    %1476 = vmatpush2.bf16.msra.mxu0 %v1385
    %1477 = vmatprep.subr.bf16.mxu0 0
    %1478 = vmatpush2.bf16.msra.mxu0 %v1384
    %1479 = vmatprep.subr.bf16.mxu0 0
    %1480 = vmatpush2.bf16.msra.mxu0 %v1383
    %1481 = vmatprep.subr.bf16.mxu0 0
    %1482 = vmatpush2.bf16.msra.mxu0 %v1382
    %1483 = vmatprep.subr.bf16.mxu0 0
    %1484 = vmatpush2.bf16.msra.mxu0 %v1381
    %1485 = vmatprep.subr.bf16.mxu0 0
    %1486 = vmatpush2.bf16.msra.mxu0 %v1380
    %1487 = vmatprep.subr.bf16.mxu0 0
    %1488 = vmatpush2.bf16.msra.mxu0 %v1379
    %1489 = vmatprep.subr.bf16.mxu0 0
    %1490 = vmatpush2.bf16.msra.mxu0 %v1378
    %1491 = vmatprep.mubr.bf16.mxu0 %v1159
    %1492 = vmatmul.mubr.bf16.gmra.mxu0 %v1158
    %v1493 = vpop.f32.mrf.mxu0
    %v1494 = vadd.f32 %v1453, %v1493
    %v1495 = vpop.f32.mrf.mxu0
    %v1496 = vpop.f32.mrf.mxu0
    %v1497 = vadd.f32 %v1456, %v1496
    %v1498 = vpop.f32.mrf.mxu0
    %1499 = vdwg.mxu0
    %v1500 = vadd.f32 %v1160, %v1494
    %v1501 = vadd.f32 %v1161, %v1497
    %1502 = vst [vmem:[#allocation3] sm:$0xff] %v1500
    %1503 = vst [vmem:[#allocation3 + $0x8] sm:$0xff] %v1501
    // Predicated region
    $region54: #{tpu_custom_call.1} parent=1 // pred_check
      %p1504 = pneg %p78
    $region55: #{tpu_custom_call.1} parent=1 // pred_check_branch
      %1506 = sbr.rel (%p1504) target = $region57
    $region56: #{tpu_custom_call.1} parent=1 // pred_region
      %v1507 = vld [vmem:[#allocation3] sm:$0xff]
      %v1508 = vld [vmem:[#allocation3 + $0x8] sm:$0xff]
      %v1509 = vpack.c.bf16 %v1508, %v1507
      %v1511 = vunpack.c.l.b16 %v1509
      %v1512 = vunpack.c.h.b16 %v1509
      %v1513 = vpack.c.b16 %v1511, %v1511
      %v1514 = vpack.c.b16 %v1512, %v1512
      %1517 = vst [vmem:[#allocation10] sm:$0xf] %v1513
      %1518 = vst [vmem:[#allocation10 + $0x4] sm:$0xf] %v1514
    $region57: #{tpu_custom_call.1} parent=1 // pred_fallthru
      _
    // Predicated region
    $region58: #{tpu_custom_call.1} parent=1 // pred_check
      _
    $region59: #{tpu_custom_call.1} parent=1 // pred_check_branch
      %1520 = sbr.rel (0) target = $region61
    $region60: #{tpu_custom_call.1} parent=1 // pred_region
      %s1522 = ssub.s32 128, 128
      %1523 = vsyncadd [#allocation6], %s1522
      %s1524 = sshll.u32 [#allocation10], 4
      %s1525 = int_to_ptr.vmem [resolvable:$true] %s1524
      %1530 = dma.vmem_to_hbm [thread:$0]  %s1525, 128, %s9, [#allocation6], 64, 64, 4
    $region61: #{tpu_custom_call.1} parent=1 // pred_fallthru
      _
    // Predicated region
    $region62: #{tpu_custom_call.1} parent=1 // pred_check
      _
    $region63: #{tpu_custom_call.1} parent=1 // pred_check_branch
      %1532 = sbr.rel (0) target = $region65
    $region64: #{tpu_custom_call.1} parent=1 // pred_region
      %1533 = dma.done [#allocation6], 128
    $region65: #{tpu_custom_call.1} parent=1 // pred_fallthru
      _
    %1534 = vsyncpa [#allocation5], 1
    %1535 = vsyncpa [#allocation8], 1
    %1536 = vsyncpa [#allocation6], 1

</llo_original>
